<compile_context>
chip_gen: v7x
topology: tpu7x:2x2x1
jax: 0.10.0
libtpu: 0.0.40
codegen_flags: <defaults>
</compile_context>

<pallas_src>
import functools

import jax
import jax.numpy as jnp
from jax import lax
from jax.experimental import pallas as pl
from jax.experimental.pallas import tpu as pltpu


def _round_up(x, m):
    return (x + m - 1) // m * m


def _fused_kernel(x_hbm, wf_ref, bias_ref, out_ref, xbuf, sem, *,
                  kh, kw, stride, dilation, th, rb, tc):
    """One grid step computes `th` output rows of one image.

    x_hbm    : (N, Hp, Wp, Cin_p)       padded input, left in HBM (pl.ANY)
    wf_ref   : (KH*KW, Cin_p, Cout_p)   fused depthwise*pointwise weights (VMEM, 1 copy)
    bias_ref : (1, Cout_p)              fused bias, f32 (VMEM, 1 copy)
    out_ref  : (1, TH, Wo_p, Cout_p)    output tile (Cout_p % 128 == 0 -> unmasked stores)
    xbuf     : (2, IN_ROWS, Wp, Cin_p)  double-buffered input rows (incl. dilated halo)
    sem      : (2,) DMA semaphores
    """
    b = pl.program_id(0)
    t = pl.program_id(1)
    n_t = pl.num_programs(1)

    cin_p = xbuf.shape[3]
    in_rows = xbuf.shape[1]
    wo_p = out_ref.shape[2]
    cout_p = out_ref.shape[3]
    slot = t & 1
    rows_per_step = th * stride

    def start_fetch(tile, sl):
        r0 = tile * rows_per_step
        if not isinstance(r0, int):
            r0 = pl.multiple_of(r0, rows_per_step)
        pltpu.make_async_copy(
            x_hbm.at[b, pl.ds(r0, in_rows)], xbuf.at[sl], sem.at[sl]).start()

    # First H tile of this image: nobody prefetched it for us.
    # TODO(synk): when the batch axis runs sequentially, also prefetch
    # (b+1, 0) at the last tile of image b to hide the per-image stall.
    @pl.when(t == 0)
    def _():
        start_fetch(0, 0)

    # Prefetch the next H tile (same image) into the other slot.
    @pl.when(t + 1 < n_t)
    def _():
        start_fetch(t + 1, 1 - slot)

    # Wait for the current tile's rows.
    pltpu.make_async_copy(
        x_hbm.at[b, pl.ds(0, in_rows)], xbuf.at[slot], sem.at[slot]).wait()

    n_rblk = th // rb
    n_cblk = cout_p // tc
    h_span = (rb - 1) * stride + 1
    w_span = (wo_p - 1) * stride + 1

    # Fused depthwise+pointwise: out = bias + sum_{i,j} patch_ij @ W_ij.
    # Per (row-block, Cout-chunk) the f32 accumulator is small enough to stay
    # vreg-resident; the tap loop is innermost so it never round-trips VMEM.
    for rblk in range(n_rblk):
        rs = rblk * rb                       # first output row of this block
        for cblk in range(n_cblk):
            c0 = cblk * tc
            # Seed with the fused bias (broadcast hoisted out of the tap loop).
            acc = jnp.broadcast_to(bias_ref[0, pl.ds(c0, tc)], (rb * wo_p, tc))
            for i in range(kh):
                h0 = rs * stride + i * dilation
                for j in range(kw):
                    w0 = j * dilation
                    if stride == 1:
                        # Direct (possibly sublane-shifted) load from scratch;
                        # no intermediate lax.slice copies.
                        patch = xbuf[slot, pl.ds(h0, rb), pl.ds(w0, wo_p), :]
                    else:
                        # TODO(synk): switch to strided pl.ds windows once
                        # verified; fall back to contiguous load + strided slice.
                        raw = xbuf[slot, pl.ds(h0, h_span), pl.ds(w0, w_span), :]
                        patch = lax.slice(raw, (0, 0, 0), raw.shape,
                                          (stride, stride, 1))
                    # wo_p % 8 == 0 -> layout-free flatten feeding the MXU.
                    acc = acc + jnp.dot(
                        patch.reshape(rb * wo_p, cin_p),
                        wf_ref[i * kw + j, :, pl.ds(c0, tc)],
                        preferred_element_type=jnp.float32)
            out_ref[0, pl.ds(rs, rb), :, pl.ds(c0, tc)] = (
                acc.reshape(rb, wo_p, tc).astype(out_ref.dtype))


def atrous_separable_conv_nhwc(x_nhwc, dw_weight, dw_bias, pw_weight, pw_bias,
                               *, stride=1, padding=0, dilation=1,
                               row_tile=None,
                               tile_vmem_budget=28 * 1024 * 1024,
                               acc_budget=128 * 1024):
    """NHWC forward of AtrousSeparableConvolution (Pallas hot path).

    x_nhwc   : (N, H, W, Cin)
    dw_weight: (Cin, 1, KH, KW)   depthwise (groups=Cin) conv weight
    dw_bias  : (Cin,)
    pw_weight: (Cout, Cin, 1, 1)  1x1 conv weight
    pw_bias  : (Cout,)
    returns  : (N, Ho, Wo, Cout)
    """
    n, h, w, cin = x_nhwc.shape
    cout = pw_weight.shape[0]
    kh, kw = dw_weight.shape[2], dw_weight.shape[3]
    dtype = x_nhwc.dtype
    dsize = jnp.dtype(dtype).itemsize

    ho = (h + 2 * padding - dilation * (kh - 1) - 1) // stride + 1
    wo = (w + 2 * padding - dilation * (kw - 1) - 1) // stride + 1

    # ---- lane/sublane alignment ----
    wo_p = _round_up(wo, 8)              # sublane-aligned -> free flatten
    cout_p = _round_up(cout, 128)        # lane-dense output stores
    cin_p = _round_up(cin, 128)          # lane-dense DMA + MXU contraction

    wp_need = (wo_p - 1) * stride + (kw - 1) * dilation + 1
    wp2 = max(w + 2 * padding, wp_need)

    # ---- output chunking: f32 accumulator must stay vreg-resident ----
    tc = 256 if cout_p % 256 == 0 else 128
    n_cblk = cout_p // tc
    rb_max = max(1, acc_budget // (wo_p * tc * 4))

    # ---- row tile: as big as the VMEM budget allows (amortizes the dilated
    #      halo), then rounded to a multiple of the row block ----
    if row_tile is None:
        th = 1
        for cand in range(1, min(ho, 128) + 1):
            in_rows_c = (cand - 1) * stride + (kh - 1) * dilation + 1
            need = (2 * in_rows_c * wp2 * cin_p
                    + 2 * cand * wo_p * cout_p) * dsize
            if need <= tile_vmem_budget:
                th = cand
    else:
        th = max(1, min(row_tile, ho))
    rb = min(rb_max, th)
    max_rblk = max(1, 64 // n_cblk)      # bound trace-time unrolling
    th = min(th, rb * max_rblk)
    th = max(rb, (th // rb) * rb)

    n_h = -(-ho // th)
    ho_p = n_h * th
    in_rows = (th - 1) * stride + (kh - 1) * dilation + 1
    hp_need = (ho_p - 1) * stride + (kh - 1) * dilation + 1
    pad_h_hi = padding + max(0, hp_need - (h + 2 * padding))
    pad_w_hi = wp2 - w - padding

    # ---- glue (plain JAX): padding + fused weight/bias construction ----
    x_pad = jnp.pad(x_nhwc, ((0, 0), (padding, pad_h_hi),
                             (padding, pad_w_hi), (0, cin_p - cin)))

    pw_mat = jnp.transpose(pw_weight[:, :, 0, 0], (1, 0))                  # (Cin, Cout)
    dw_taps = jnp.transpose(dw_weight[:, 0, :, :].reshape(cin, kh * kw))   # (KH*KW, Cin)
    wf = dw_taps[:, :, None] * pw_mat[None, :, :]                          # (KH*KW, Cin, Cout)
    wf = jnp.pad(wf, ((0, 0), (0, cin_p - cin), (0, cout_p - cout)))
    wf = wf.astype(dtype)
    bias_f = jnp.pad(dw_bias @ pw_mat + pw_bias, (0, cout_p - cout))
    bias_f = bias_f.astype(jnp.float32).reshape(1, cout_p)

    # ---- VMEM limit derived from the actual buffer sizes ----
    xbuf_bytes = 2 * in_rows * wp2 * cin_p * dsize
    out_bytes = 2 * th * wo_p * cout_p * dsize
    wf_bytes = kh * kw * cin_p * cout_p * dsize
    scratch_est = 4 * rb * wo_p * tc * 4 + 2 * rb * wo_p * cin_p * dsize
    total_vmem = xbuf_bytes + out_bytes + wf_bytes + cout_p * 4 + scratch_est
    vmem_limit = int(min(max(32 * 1024 * 1024, int(total_vmem * 1.25)),
                         100 * 1024 * 1024))
    # TODO(synk): budget per-generation via pltpu.get_tpu_info() (64 MiB VMEM
    # on v7x vs 128 MiB on v5e/v6e) instead of a fixed conservative budget.

    kernel = functools.partial(_fused_kernel, kh=kh, kw=kw, stride=stride,
                               dilation=dilation, th=th, rb=rb, tc=tc)

    out = pl.pallas_call(
        kernel,
        out_shape=jax.ShapeDtypeStruct((n, ho_p, wo_p, cout_p), dtype),
        grid_spec=pltpu.PrefetchScalarGridSpec(
            num_scalar_prefetch=0,
            grid=(n, n_h),
            in_specs=[
                pl.BlockSpec(memory_space=pl.ANY),                   # x stays in HBM
                pl.BlockSpec(memory_space=pltpu.MemorySpace.VMEM),   # weights, single copy
                pl.BlockSpec(memory_space=pltpu.MemorySpace.VMEM),   # bias, single copy
            ],
            out_specs=pl.BlockSpec((1, th, wo_p, cout_p),
                                   lambda b, t: (b, t, 0, 0)),
            scratch_shapes=[
                pltpu.VMEM((2, in_rows, wp2, cin_p), dtype),
                pltpu.SemaphoreType.DMA((2,)),
            ]),
        compiler_params=pltpu.CompilerParams(
            # Batch is megacore-parallel; the H-tile axis carries the manual
            # halo-prefetch chain so it runs sequentially on a core.
            # TODO(synk): for batch-1 on v7x, split the H chain across the two
            # TensorCores (leading parallel axis of size 2) instead.
            dimension_semantics=("parallel", "arbitrary"),
            vmem_limit_bytes=vmem_limit),
    )(x_pad, wf, bias_f)

    # Strip Ho/Wo/Cout padding.
    return out[:, :ho, :wo, :cout]


def atrous_separable_conv(x_nchw, dw_weight, dw_bias, pw_weight, pw_bias, *,
                          stride=1, padding=0, dilation=1, **kwargs):
    """NCHW entry point matching the PyTorch module interface."""
    x_nhwc = jnp.transpose(x_nchw, (0, 2, 3, 1))
    out = atrous_separable_conv_nhwc(
        x_nhwc, dw_weight, dw_bias, pw_weight, pw_bias,
        stride=stride, padding=padding, dilation=dilation, **kwargs)
    return jnp.transpose(out, (0, 3, 1, 2))


def _reference(x_nchw, dw_weight, dw_bias, pw_weight, pw_bias,
               *, stride, padding, dilation):
    """Pure-JAX reference using lax.conv_general_dilated (NCHW)."""
    cin = x_nchw.shape[1]
    y = lax.conv_general_dilated(
        x_nchw, dw_weight,
        window_strides=(stride, stride),
        padding=((padding, padding), (padding, padding)),
        rhs_dilation=(dilation, dilation),
        dimension_numbers=("NCHW", "OIHW", "NCHW"),
        feature_group_count=cin,
    ) + dw_bias.reshape(1, -1, 1, 1)
    z = lax.conv_general_dilated(
        y, pw_weight,
        window_strides=(1, 1),
        padding=((0, 0), (0, 0)),
        dimension_numbers=("NCHW", "OIHW", "NCHW"),
    ) + pw_bias.reshape(1, -1, 1, 1)
    return z


if __name__ == "__main__":
    # Small config consistent with AtrousSeparableConvolution usage.
    N, C_IN, C_OUT = 2, 4, 8
    H = W = 16
    K = 3
    STRIDE, PADDING, DILATION = 1, 2, 2   # "same" output spatial size

    key = jax.random.PRNGKey(0)
    kx, k1, k2, k3, k4 = jax.random.split(key, 5)

    x = jax.random.normal(kx, (N, C_IN, H, W), dtype=jnp.float32)

    # Kaiming-normal-style init (std = sqrt(2 / fan_in)).
    dw_fan_in = 1 * K * K
    dw_weight = jax.random.normal(k1, (C_IN, 1, K, K), jnp.float32) * jnp.sqrt(2.0 / dw_fan_in)
    dw_bias = jax.random.normal(k2, (C_IN,), jnp.float32) * 0.1
    pw_fan_in = C_IN * 1 * 1
    pw_weight = jax.random.normal(k3, (C_OUT, C_IN, 1, 1), jnp.float32) * jnp.sqrt(2.0 / pw_fan_in)
    pw_bias = jax.random.normal(k4, (C_OUT,), jnp.float32) * 0.1

    out = atrous_separable_conv(
        x, dw_weight, dw_bias, pw_weight, pw_bias,
        stride=STRIDE, padding=PADDING, dilation=DILATION)
    out = jax.block_until_ready(out)

    ref = _reference(
        x, dw_weight, dw_bias, pw_weight, pw_bias,
        stride=STRIDE, padding=PADDING, dilation=DILATION)
    ref = jax.block_until_ready(ref)

    assert out.shape == ref.shape, (out.shape, ref.shape)
    assert jnp.allclose(out, ref, atol=1e-4, rtol=1e-4), float(jnp.max(jnp.abs(out - ref)))

    print("KERNEL_OK")
</pallas_src>

<mosaic_0001>
module attributes {stable_mosaic.version = 11 : i64} {
  func.func @_fused_kernel(%arg0: i32, %arg1: i32, %arg2: memref<2x20x20x128xf32, #tpu.memory_space<any>>, %arg3: memref<9x128x128xf32, #tpu.memory_space<vmem>>, %arg4: memref<1x128xf32, #tpu.memory_space<vmem>>, %arg5: memref<1x16x16x128xf32, #tpu.memory_space<vmem>>, %arg6: memref<2x20x20x128xf32, #tpu.memory_space<vmem>>, %arg7: memref<2x!tpu.dma_semaphore, #tpu.memory_space<semaphore_mem>>) attributes {dimension_semantics = [#tpu.dimension_semantics<parallel>, #tpu.dimension_semantics<arbitrary>], iteration_bounds = array<i64: 2, 1>, scalar_prefetch = 0 : i64, scratch_operands = 2 : i64, tpu.core_type = #tpu.core_type<tc>, window_params = [{}, {pipeline_mode = #tpu.pipeline_mode<synchronous>, transform_indices = @transform_1, window_bounds = array<i64: 9, 128, 128>}, {pipeline_mode = #tpu.pipeline_mode<synchronous>, transform_indices = @transform_2, window_bounds = array<i64: 1, 128>}, {transform_indices = @transform_3, window_bounds = array<i64: 1, 16, 16, 128>}]} {
    %c1_i32 = arith.constant 1 : i32
    %0 = arith.andi %arg1, %c1_i32 : i32
    %c0_i32 = arith.constant 0 : i32
    %1 = arith.cmpi eq, %arg1, %c0_i32 : i32
    %2 = arith.extui %1 : i1 to i32
    %c0_i32_0 = arith.constant 0 : i32
    %3 = arith.cmpi ne, %2, %c0_i32_0 : i32
    scf.if %3 {
      %c0_i32_69 = arith.constant 0 : i32
      %c0_i32_70 = arith.constant 0 : i32
      %c0_i32_71 = arith.constant 0 : i32
      %c0_i32_72 = arith.constant 0 : i32
      %c0_i32_73 = arith.constant 0 : i32
      %94 = tpu.memref_slice %arg2[%arg0, %c0_i32_71, %c0_i32_72, %c0_i32_73] : memref<2x20x20x128xf32, #tpu.memory_space<any>> -> memref<1x20x20x128xf32, #tpu.memory_space<any>>
      %95 = tpu.memref_squeeze %94 : memref<1x20x20x128xf32, #tpu.memory_space<any>> -> memref<20x20x128xf32, #tpu.memory_space<any>>
      %c0_i32_74 = arith.constant 0 : i32
      %c0_i32_75 = arith.constant 0 : i32
      %c0_i32_76 = arith.constant 0 : i32
      %96 = tpu.memref_slice %arg6[%c0_i32_69, %c0_i32_74, %c0_i32_75, %c0_i32_76] : memref<2x20x20x128xf32, #tpu.memory_space<vmem>> -> memref<1x20x20x128xf32, #tpu.memory_space<vmem>>
      %97 = tpu.memref_squeeze %96 : memref<1x20x20x128xf32, #tpu.memory_space<vmem>> -> memref<20x20x128xf32, #tpu.memory_space<vmem>>
      %98 = tpu.memref_slice %arg7[%c0_i32_70] : memref<2x!tpu.dma_semaphore, #tpu.memory_space<semaphore_mem>> -> memref<1x!tpu.dma_semaphore, #tpu.memory_space<semaphore_mem>>
      %99 = tpu.memref_squeeze %98 : memref<1x!tpu.dma_semaphore, #tpu.memory_space<semaphore_mem>> -> memref<!tpu.dma_semaphore, #tpu.memory_space<semaphore_mem>>
      tpu.enqueue_dma source(%95 : memref<20x20x128xf32, #tpu.memory_space<any>>) target(%97 : memref<20x20x128xf32, #tpu.memory_space<vmem>>) target_semaphore(%99 : memref<!tpu.dma_semaphore, #tpu.memory_space<semaphore_mem>>)
    } else {
    }
    %c1_i32_1 = arith.constant 1 : i32
    %4 = arith.addi %arg1, %c1_i32_1 : i32
    %c1_i32_2 = arith.constant 1 : i32
    %5 = arith.cmpi slt, %4, %c1_i32_2 : i32
    %6 = arith.extui %5 : i1 to i32
    %c0_i32_3 = arith.constant 0 : i32
    %7 = arith.cmpi ne, %6, %c0_i32_3 : i32
    scf.if %7 {
      %c1_i32_69 = arith.constant 1 : i32
      %94 = arith.addi %arg1, %c1_i32_69 : i32
      %c1_i32_70 = arith.constant 1 : i32
      %95 = arith.subi %c1_i32_70, %0 : i32
      %c16_i32 = arith.constant 16 : i32
      %96 = arith.muli %94, %c16_i32 : i32
      %97 = tpu.assume_multiple %96, 16 : i32
      %c0_i32_71 = arith.constant 0 : i32
      %c0_i32_72 = arith.constant 0 : i32
      %98 = tpu.memref_slice %arg2[%arg0, %97, %c0_i32_71, %c0_i32_72] : memref<2x20x20x128xf32, #tpu.memory_space<any>> -> memref<1x20x20x128xf32, #tpu.memory_space<any>>
      %99 = tpu.memref_squeeze %98 : memref<1x20x20x128xf32, #tpu.memory_space<any>> -> memref<20x20x128xf32, #tpu.memory_space<any>>
      %c0_i32_73 = arith.constant 0 : i32
      %c0_i32_74 = arith.constant 0 : i32
      %c0_i32_75 = arith.constant 0 : i32
      %100 = tpu.memref_slice %arg6[%95, %c0_i32_73, %c0_i32_74, %c0_i32_75] : memref<2x20x20x128xf32, #tpu.memory_space<vmem>> -> memref<1x20x20x128xf32, #tpu.memory_space<vmem>>
      %101 = tpu.memref_squeeze %100 : memref<1x20x20x128xf32, #tpu.memory_space<vmem>> -> memref<20x20x128xf32, #tpu.memory_space<vmem>>
      %102 = tpu.memref_slice %arg7[%95] : memref<2x!tpu.dma_semaphore, #tpu.memory_space<semaphore_mem>> -> memref<1x!tpu.dma_semaphore, #tpu.memory_space<semaphore_mem>>
      %103 = tpu.memref_squeeze %102 : memref<1x!tpu.dma_semaphore, #tpu.memory_space<semaphore_mem>> -> memref<!tpu.dma_semaphore, #tpu.memory_space<semaphore_mem>>
      tpu.enqueue_dma source(%99 : memref<20x20x128xf32, #tpu.memory_space<any>>) target(%101 : memref<20x20x128xf32, #tpu.memory_space<vmem>>) target_semaphore(%103 : memref<!tpu.dma_semaphore, #tpu.memory_space<semaphore_mem>>)
    } else {
    }
    %c0_i32_4 = arith.constant 0 : i32
    %c0_i32_5 = arith.constant 0 : i32
    %c0_i32_6 = arith.constant 0 : i32
    %8 = tpu.memref_slice %arg2[%arg0, %c0_i32_4, %c0_i32_5, %c0_i32_6] : memref<2x20x20x128xf32, #tpu.memory_space<any>> -> memref<1x20x20x128xf32, #tpu.memory_space<any>>
    %9 = tpu.memref_squeeze %8 : memref<1x20x20x128xf32, #tpu.memory_space<any>> -> memref<20x20x128xf32, #tpu.memory_space<any>>
    %c0_i32_7 = arith.constant 0 : i32
    %c0_i32_8 = arith.constant 0 : i32
    %c0_i32_9 = arith.constant 0 : i32
    %10 = tpu.memref_slice %arg6[%0, %c0_i32_7, %c0_i32_8, %c0_i32_9] : memref<2x20x20x128xf32, #tpu.memory_space<vmem>> -> memref<1x20x20x128xf32, #tpu.memory_space<vmem>>
    %11 = tpu.memref_squeeze %10 : memref<1x20x20x128xf32, #tpu.memory_space<vmem>> -> memref<20x20x128xf32, #tpu.memory_space<vmem>>
    %12 = tpu.memref_slice %arg7[%0] : memref<2x!tpu.dma_semaphore, #tpu.memory_space<semaphore_mem>> -> memref<1x!tpu.dma_semaphore, #tpu.memory_space<semaphore_mem>>
    %13 = tpu.memref_squeeze %12 : memref<1x!tpu.dma_semaphore, #tpu.memory_space<semaphore_mem>> -> memref<!tpu.dma_semaphore, #tpu.memory_space<semaphore_mem>>
    tpu.wait_dma2 semaphore(%13 : memref<!tpu.dma_semaphore, #tpu.memory_space<semaphore_mem>>) src(%9 : memref<20x20x128xf32, #tpu.memory_space<any>>) dst(%11 : memref<20x20x128xf32, #tpu.memory_space<vmem>>)
    %c0 = arith.constant 0 : index
    %c0_10 = arith.constant 0 : index
    %14 = vector.load %arg4[%c0, %c0_10] : memref<1x128xf32, #tpu.memory_space<vmem>>, vector<1x128xf32>
    %15 = vector.shape_cast %14 : vector<1x128xf32> to vector<128xf32>
    %16 = vector.shape_cast %15 : vector<128xf32> to vector<1x128xf32>
    %17 = vector.broadcast %16 : vector<1x128xf32> to vector<256x128xf32>
    %18 = arith.index_cast %0 : i32 to index
    %c0_11 = arith.constant 0 : index
    %c0_12 = arith.constant 0 : index
    %c0_13 = arith.constant 0 : index
    %19 = vector.load %arg6[%18, %c0_11, %c0_12, %c0_13] : memref<2x20x20x128xf32, #tpu.memory_space<vmem>>, vector<1x16x16x128xf32>
    %20 = vector.shape_cast %19 : vector<1x16x16x128xf32> to vector<16x16x128xf32>
    %21 = vector.shape_cast %20 : vector<16x16x128xf32> to vector<256x128xf32>
    %c0_14 = arith.constant 0 : index
    %c0_15 = arith.constant 0 : index
    %c0_16 = arith.constant 0 : index
    %22 = vector.load %arg3[%c0_14, %c0_15, %c0_16] : memref<9x128x128xf32, #tpu.memory_space<vmem>>, vector<1x128x128xf32>
    %23 = vector.shape_cast %22 : vector<1x128x128xf32> to vector<128x128xf32>
    %cst = arith.constant dense<0.000000e+00> : vector<256x128xf32>
    %24 = tpu.matmul %21, %23, %cst {dimension_numbers = #tpu.dot_dimension_numbers<[1], [0], [0], [1], [0, 0, 1, 1], [], []>} : vector<256x128xf32>, vector<128x128xf32>, vector<256x128xf32> -> vector<256x128xf32>
    %25 = arith.addf %17, %24 : vector<256x128xf32>
    %26 = arith.index_cast %0 : i32 to index
    %c0_17 = arith.constant 0 : index
    %c2 = arith.constant 2 : index
    %c0_18 = arith.constant 0 : index
    %27 = vector.load %arg6[%26, %c0_17, %c2, %c0_18] : memref<2x20x20x128xf32, #tpu.memory_space<vmem>>, vector<1x16x16x128xf32>
    %28 = vector.shape_cast %27 : vector<1x16x16x128xf32> to vector<16x16x128xf32>
    %29 = vector.shape_cast %28 : vector<16x16x128xf32> to vector<256x128xf32>
    %c1 = arith.constant 1 : index
    %c0_19 = arith.constant 0 : index
    %c0_20 = arith.constant 0 : index
    %30 = vector.load %arg3[%c1, %c0_19, %c0_20] : memref<9x128x128xf32, #tpu.memory_space<vmem>>, vector<1x128x128xf32>
    %31 = vector.shape_cast %30 : vector<1x128x128xf32> to vector<128x128xf32>
    %cst_21 = arith.constant dense<0.000000e+00> : vector<256x128xf32>
    %32 = tpu.matmul %29, %31, %cst_21 {dimension_numbers = #tpu.dot_dimension_numbers<[1], [0], [0], [1], [0, 0, 1, 1], [], []>} : vector<256x128xf32>, vector<128x128xf32>, vector<256x128xf32> -> vector<256x128xf32>
    %33 = arith.addf %25, %32 : vector<256x128xf32>
    %34 = arith.index_cast %0 : i32 to index
    %c0_22 = arith.constant 0 : index
    %c4 = arith.constant 4 : index
    %c0_23 = arith.constant 0 : index
    %35 = vector.load %arg6[%34, %c0_22, %c4, %c0_23] : memref<2x20x20x128xf32, #tpu.memory_space<vmem>>, vector<1x16x16x128xf32>
    %36 = vector.shape_cast %35 : vector<1x16x16x128xf32> to vector<16x16x128xf32>
    %37 = vector.shape_cast %36 : vector<16x16x128xf32> to vector<256x128xf32>
    %c2_24 = arith.constant 2 : index
    %c0_25 = arith.constant 0 : index
    %c0_26 = arith.constant 0 : index
    %38 = vector.load %arg3[%c2_24, %c0_25, %c0_26] : memref<9x128x128xf32, #tpu.memory_space<vmem>>, vector<1x128x128xf32>
    %39 = vector.shape_cast %38 : vector<1x128x128xf32> to vector<128x128xf32>
    %cst_27 = arith.constant dense<0.000000e+00> : vector<256x128xf32>
    %40 = tpu.matmul %37, %39, %cst_27 {dimension_numbers = #tpu.dot_dimension_numbers<[1], [0], [0], [1], [0, 0, 1, 1], [], []>} : vector<256x128xf32>, vector<128x128xf32>, vector<256x128xf32> -> vector<256x128xf32>
    %41 = arith.addf %33, %40 : vector<256x128xf32>
    %42 = arith.index_cast %0 : i32 to index
    %c2_28 = arith.constant 2 : index
    %c0_29 = arith.constant 0 : index
    %c0_30 = arith.constant 0 : index
    %43 = vector.load %arg6[%42, %c2_28, %c0_29, %c0_30] : memref<2x20x20x128xf32, #tpu.memory_space<vmem>>, vector<1x16x16x128xf32>
    %44 = vector.shape_cast %43 : vector<1x16x16x128xf32> to vector<16x16x128xf32>
    %45 = vector.shape_cast %44 : vector<16x16x128xf32> to vector<256x128xf32>
    %c3 = arith.constant 3 : index
    %c0_31 = arith.constant 0 : index
    %c0_32 = arith.constant 0 : index
    %46 = vector.load %arg3[%c3, %c0_31, %c0_32] : memref<9x128x128xf32, #tpu.memory_space<vmem>>, vector<1x128x128xf32>
    %47 = vector.shape_cast %46 : vector<1x128x128xf32> to vector<128x128xf32>
    %cst_33 = arith.constant dense<0.000000e+00> : vector<256x128xf32>
    %48 = tpu.matmul %45, %47, %cst_33 {dimension_numbers = #tpu.dot_dimension_numbers<[1], [0], [0], [1], [0, 0, 1, 1], [], []>} : vector<256x128xf32>, vector<128x128xf32>, vector<256x128xf32> -> vector<256x128xf32>
    %49 = arith.addf %41, %48 : vector<256x128xf32>
    %50 = arith.index_cast %0 : i32 to index
    %c2_34 = arith.constant 2 : index
    %c2_35 = arith.constant 2 : index
    %c0_36 = arith.constant 0 : index
    %51 = vector.load %arg6[%50, %c2_34, %c2_35, %c0_36] : memref<2x20x20x128xf32, #tpu.memory_space<vmem>>, vector<1x16x16x128xf32>
    %52 = vector.shape_cast %51 : vector<1x16x16x128xf32> to vector<16x16x128xf32>
    %53 = vector.shape_cast %52 : vector<16x16x128xf32> to vector<256x128xf32>
    %c4_37 = arith.constant 4 : index
    %c0_38 = arith.constant 0 : index
    %c0_39 = arith.constant 0 : index
    %54 = vector.load %arg3[%c4_37, %c0_38, %c0_39] : memref<9x128x128xf32, #tpu.memory_space<vmem>>, vector<1x128x128xf32>
    %55 = vector.shape_cast %54 : vector<1x128x128xf32> to vector<128x128xf32>
    %cst_40 = arith.constant dense<0.000000e+00> : vector<256x128xf32>
    %56 = tpu.matmul %53, %55, %cst_40 {dimension_numbers = #tpu.dot_dimension_numbers<[1], [0], [0], [1], [0, 0, 1, 1], [], []>} : vector<256x128xf32>, vector<128x128xf32>, vector<256x128xf32> -> vector<256x128xf32>
    %57 = arith.addf %49, %56 : vector<256x128xf32>
    %58 = arith.index_cast %0 : i32 to index
    %c2_41 = arith.constant 2 : index
    %c4_42 = arith.constant 4 : index
    %c0_43 = arith.constant 0 : index
    %59 = vector.load %arg6[%58, %c2_41, %c4_42, %c0_43] : memref<2x20x20x128xf32, #tpu.memory_space<vmem>>, vector<1x16x16x128xf32>
    %60 = vector.shape_cast %59 : vector<1x16x16x128xf32> to vector<16x16x128xf32>
    %61 = vector.shape_cast %60 : vector<16x16x128xf32> to vector<256x128xf32>
    %c5 = arith.constant 5 : index
    %c0_44 = arith.constant 0 : index
    %c0_45 = arith.constant 0 : index
    %62 = vector.load %arg3[%c5, %c0_44, %c0_45] : memref<9x128x128xf32, #tpu.memory_space<vmem>>, vector<1x128x128xf32>
    %63 = vector.shape_cast %62 : vector<1x128x128xf32> to vector<128x128xf32>
    %cst_46 = arith.constant dense<0.000000e+00> : vector<256x128xf32>
    %64 = tpu.matmul %61, %63, %cst_46 {dimension_numbers = #tpu.dot_dimension_numbers<[1], [0], [0], [1], [0, 0, 1, 1], [], []>} : vector<256x128xf32>, vector<128x128xf32>, vector<256x128xf32> -> vector<256x128xf32>
    %65 = arith.addf %57, %64 : vector<256x128xf32>
    %66 = arith.index_cast %0 : i32 to index
    %c4_47 = arith.constant 4 : index
    %c0_48 = arith.constant 0 : index
    %c0_49 = arith.constant 0 : index
    %67 = vector.load %arg6[%66, %c4_47, %c0_48, %c0_49] : memref<2x20x20x128xf32, #tpu.memory_space<vmem>>, vector<1x16x16x128xf32>
    %68 = vector.shape_cast %67 : vector<1x16x16x128xf32> to vector<16x16x128xf32>
    %69 = vector.shape_cast %68 : vector<16x16x128xf32> to vector<256x128xf32>
    %c6 = arith.constant 6 : index
    %c0_50 = arith.constant 0 : index
    %c0_51 = arith.constant 0 : index
    %70 = vector.load %arg3[%c6, %c0_50, %c0_51] : memref<9x128x128xf32, #tpu.memory_space<vmem>>, vector<1x128x128xf32>
    %71 = vector.shape_cast %70 : vector<1x128x128xf32> to vector<128x128xf32>
    %cst_52 = arith.constant dense<0.000000e+00> : vector<256x128xf32>
    %72 = tpu.matmul %69, %71, %cst_52 {dimension_numbers = #tpu.dot_dimension_numbers<[1], [0], [0], [1], [0, 0, 1, 1], [], []>} : vector<256x128xf32>, vector<128x128xf32>, vector<256x128xf32> -> vector<256x128xf32>
    %73 = arith.addf %65, %72 : vector<256x128xf32>
    %74 = arith.index_cast %0 : i32 to index
    %c4_53 = arith.constant 4 : index
    %c2_54 = arith.constant 2 : index
    %c0_55 = arith.constant 0 : index
    %75 = vector.load %arg6[%74, %c4_53, %c2_54, %c0_55] : memref<2x20x20x128xf32, #tpu.memory_space<vmem>>, vector<1x16x16x128xf32>
    %76 = vector.shape_cast %75 : vector<1x16x16x128xf32> to vector<16x16x128xf32>
    %77 = vector.shape_cast %76 : vector<16x16x128xf32> to vector<256x128xf32>
    %c7 = arith.constant 7 : index
    %c0_56 = arith.constant 0 : index
    %c0_57 = arith.constant 0 : index
    %78 = vector.load %arg3[%c7, %c0_56, %c0_57] : memref<9x128x128xf32, #tpu.memory_space<vmem>>, vector<1x128x128xf32>
    %79 = vector.shape_cast %78 : vector<1x128x128xf32> to vector<128x128xf32>
    %cst_58 = arith.constant dense<0.000000e+00> : vector<256x128xf32>
    %80 = tpu.matmul %77, %79, %cst_58 {dimension_numbers = #tpu.dot_dimension_numbers<[1], [0], [0], [1], [0, 0, 1, 1], [], []>} : vector<256x128xf32>, vector<128x128xf32>, vector<256x128xf32> -> vector<256x128xf32>
    %81 = arith.addf %73, %80 : vector<256x128xf32>
    %82 = arith.index_cast %0 : i32 to index
    %c4_59 = arith.constant 4 : index
    %c4_60 = arith.constant 4 : index
    %c0_61 = arith.constant 0 : index
    %83 = vector.load %arg6[%82, %c4_59, %c4_60, %c0_61] : memref<2x20x20x128xf32, #tpu.memory_space<vmem>>, vector<1x16x16x128xf32>
    %84 = vector.shape_cast %83 : vector<1x16x16x128xf32> to vector<16x16x128xf32>
    %85 = vector.shape_cast %84 : vector<16x16x128xf32> to vector<256x128xf32>
    %c8 = arith.constant 8 : index
    %c0_62 = arith.constant 0 : index
    %c0_63 = arith.constant 0 : index
    %86 = vector.load %arg3[%c8, %c0_62, %c0_63] : memref<9x128x128xf32, #tpu.memory_space<vmem>>, vector<1x128x128xf32>
    %87 = vector.shape_cast %86 : vector<1x128x128xf32> to vector<128x128xf32>
    %cst_64 = arith.constant dense<0.000000e+00> : vector<256x128xf32>
    %88 = tpu.matmul %85, %87, %cst_64 {dimension_numbers = #tpu.dot_dimension_numbers<[1], [0], [0], [1], [0, 0, 1, 1], [], []>} : vector<256x128xf32>, vector<128x128xf32>, vector<256x128xf32> -> vector<256x128xf32>
    %89 = arith.addf %81, %88 : vector<256x128xf32>
    %90 = vector.shape_cast %89 : vector<256x128xf32> to vector<16x16x128xf32>
    %c0_65 = arith.constant 0 : index
    %c0_66 = arith.constant 0 : index
    %c0_67 = arith.constant 0 : index
    %c0_68 = arith.constant 0 : index
    %91 = vector.load %arg5[%c0_65, %c0_66, %c0_67, %c0_68] : memref<1x16x16x128xf32, #tpu.memory_space<vmem>>, vector<1x16x16x128xf32>
    %92 = vector.shape_cast %91 : vector<1x16x16x128xf32> to vector<16x16x128xf32>
    %93 = vector.shape_cast %90 : vector<16x16x128xf32> to vector<1x16x16x128xf32>
    tpu.vector_store %arg5[%c0_65, %c0_66, %c0_67, %c0_68], %93 {strides = array<i32>} : memref<1x16x16x128xf32, #tpu.memory_space<vmem>>, vector<1x16x16x128xf32>,
    return
  }
  func.func @transform_1(%arg0: i32, %arg1: i32) -> (i32, i32, i32) {
    %c0_i32 = arith.constant 0 : i32
    %c0_i32_0 = arith.constant 0 : i32
    %c0_i32_1 = arith.constant 0 : i32
    %c0_i32_2 = arith.constant 0 : i32
    return %c0_i32, %c0_i32_0, %c0_i32_1 : i32, i32, i32
  }
  func.func @transform_2(%arg0: i32, %arg1: i32) -> (i32, i32) {
    %c0_i32 = arith.constant 0 : i32
    %c0_i32_0 = arith.constant 0 : i32
    %c0_i32_1 = arith.constant 0 : i32
    return %c0_i32, %c0_i32_0 : i32, i32
  }
  func.func @transform_3(%arg0: i32, %arg1: i32) -> (i32, i32, i32, i32) {
    %c0_i32 = arith.constant 0 : i32
    %c0_i32_0 = arith.constant 0 : i32
    %c0_i32_1 = arith.constant 0 : i32
    return %arg0, %arg1, %c0_i32, %c0_i32_0 : i32, i32, i32, i32
  }
}

</mosaic_0001>

<llo_original>
// kernel: tpu_custom_call.1
$region0: #{tpu_custom_call.1}
  #allocation0 [shape = 'u32[]', space=smem, size = 0x4, offset = 0x4, fixed_abs, tag = 'smem constant byte address 0x4 - core index']
  #allocation1 [shape = 'u32[144,128]{1,0:T(1,128)}', space=vmem, size = 0x12000, scoped, tag = 'internal scratch']
  #allocation2 [shape = 'f32[2,20,20,128]{3,2,1,0:T(8,128)}', space=vmem, size = 0x78000, scoped, tag = 'scratch operand']
  #allocation3 [shape = 's32[2]{0}', space=sflag, size = 0x8, scoped, tag = 'scratch operand']
  #allocation6 [shape = 's32[]', space=sflag, size = 0x4, offset = 0, fixed_abs, tag = 'sflag constant byte address 0x0 - dummy sync flag']
  #allocation7 [shape = 's32[]', space=sflag, size = 0x4, offset = 0, fixed_abs, tag = 'sflag constant byte address 0x0 - dummy sync flag']
  %s0 = inlined_call_operand.vmem [shape: f32[2,20,20,128], index: 0, kind: input, shape index: {}]
  %s1 = inlined_call_operand.vmem [shape: f32[9,128,128], index: 1, kind: input, shape index: {}]
  %s2 = inlined_call_operand.vmem [shape: f32[1,128], index: 2, kind: input, shape index: {}]
  %s3 = inlined_call_operand.hbm [shape: f32[2,16,16,128], index: 3, kind: output, shape index: {}]
  %s4 = sld [smem:[#allocation0]]
  $region123: #{tpu_custom_call.1} parent=0
    _
  %s6 = ssub.s32 1, %s4
  %s7 = scalar_select 0, %s6, %s4
  $region1: #{tpu_custom_call.1} parent=0
    #allocation4 [shape = 'u8[262144]{0}', space=vmem, size = 0x40000, scoped, tag = 'output window, operand 0']
    #allocation5 [shape = 's32[2]{0}', space=sflag, size = 0x8, scoped, tag = 'scoped memory for tpu_custom_call.1']
    %8 = vsyncpa [#allocation5], 0
    %s9 = scalar_lea.sflag [#allocation5], 1
    %10 = vsyncpa %s9, 0
    loop: start=0, step=1, limit=4
    $region2: #{tpu_custom_call.1} parent=1 // loop_pre_header
      _
    $region3: #{tpu_custom_call.1} parent=1 // loop_header
      %s12 = sphi 0, %s16
      %p13 = scmp.ge.s32.totalorder %s12, 4
      %s19 = sphi 0, %s31
      %s20 = sphi 0, %s27
      %s21 = sphi 0, %s19
      %s22 = sphi 0, %s20
      %s23 = sphi 0, %s21
      %s24 = sphi 0, %s22
      %s32 = sphi 0, %s32
      %s34 = sphi 0, %s32
      %s35 = sphi 0, %s34
      %s49 = sphi 0, %s35
      %s53 = sphi 0, %s53
      %s55 = sphi 0, %s53
      %s56 = sphi 0, %s55
      %s70 = sphi 0, %s56
      %s78 = sphi 0, %s80
      %s81 = sphi 0, %s78
      %s82 = sphi 0, %s81
      %s98 = sphi 0, %s82
    $region4: #{tpu_custom_call.1} parent=1 // loop_header_branch
      %15 = sbr.rel (%p13) target = $region8
    $region5: #{tpu_custom_call.1} parent=1 // loop_body
      %s17 = ssub.s32 %s12, 1
      %s18 = ssub.s32 %s12, 2
      %s25 = sadd.s32 1, %s20
      %p26 = scmp.ge.s32.totalorder %s25, 1
      %s27 = scalar_select %p26, 0, %s25
      %s28 = sadd.s32 1, %s19
      %s29 = scalar_select %p26, %s28, %s19
      %p30 = scmp.ge.s32.totalorder %s29, 2
      %s31 = scalar_select %p30, 0, %s29
      %s33 = sadd.s32 %s32, 1
      %p36 = scmp.eq.s32.totalorder %s12, 1
      %p37 = scmp.ne.s32.totalorder %s32, %s34
      %p38 = scmp.eq.s32.totalorder %s12, 0
      %p39 = por %p37, %p38
      %p40 = scmp.ne.s32.totalorder %s32, %s34
      %p41 = scmp.eq.s32.totalorder %s17, 1
      %p42 = por %p40, %p41
      %p43 = scmp.ne.s32.totalorder %s34, %s35
      %p44 = scmp.eq.s32.totalorder %s17, 0
      %p45 = por %p43, %p44
      %p46 = scmp.ne.s32.totalorder %s34, %s35
      %p47 = scmp.eq.s32.totalorder %s18, 1
      %p48 = por %p46, %p47
      %p50 = scmp.ne.s32.totalorder %s35, %s49
      %p51 = scmp.eq.s32.totalorder %s18, 0
      %p52 = por %p50, %p51
      %s54 = sadd.s32 %s53, 1
      %p57 = scmp.eq.s32.totalorder %s12, 1
      %p58 = scmp.ne.s32.totalorder %s53, %s55
      %p59 = scmp.eq.s32.totalorder %s12, 0
      %p60 = por %p58, %p59
      %p61 = scmp.ne.s32.totalorder %s53, %s55
      %p62 = scmp.eq.s32.totalorder %s17, 1
      %p63 = por %p61, %p62
      %p64 = scmp.ne.s32.totalorder %s55, %s56
      %p65 = scmp.eq.s32.totalorder %s17, 0
      %p66 = por %p64, %p65
      %p67 = scmp.ne.s32.totalorder %s55, %s56
      %p68 = scmp.eq.s32.totalorder %s18, 1
      %p69 = por %p67, %p68
      %p71 = scmp.ne.s32.totalorder %s56, %s70
      %p72 = scmp.eq.s32.totalorder %s18, 0
      %p73 = por %p71, %p72
      %s74 = ssub.s32 %s19, %s31
      %s75 = ssub.s32 %s20, %s27
      %s76 = sor.u32 %s74, %s75
      %p77 = scmp.eq.s32.totalorder %s76, 0
      %s79 = sadd.s32 %s78, 1
      %s80 = scalar_select %p77, %s78, %s79
      %p83 = pneg %p77
      %p84 = scmp.eq.s32.totalorder %s12, 1
      %p85 = por %p83, %p84
      %p86 = scmp.ne.s32.totalorder %s78, %s81
      %p87 = scmp.eq.s32.totalorder %s12, 0
      %p88 = por %p86, %p87
      %p89 = scmp.ne.s32.totalorder %s78, %s81
      %p90 = scmp.eq.s32.totalorder %s17, 1
      %p91 = por %p89, %p90
      %p92 = scmp.ne.s32.totalorder %s81, %s82
      %p93 = scmp.eq.s32.totalorder %s17, 0
      %p94 = por %p92, %p93
      %p95 = scmp.ne.s32.totalorder %s81, %s82
      %p96 = scmp.eq.s32.totalorder %s18, 1
      %p97 = por %p95, %p96
      %p99 = scmp.ne.s32.totalorder %s82, %s98
      %p100 = scmp.eq.s32.totalorder %s18, 0
      %p101 = por %p99, %p100
      %p102 = scmp.le.s32.totalorder 1, %s12
      %p103 = scmp.lt.s32.totalorder %s12, 3
      %p104 = pnand %p102, %p103
      %p105 = pneg %p104
      // Predicated region
      $region9: #{tpu_custom_call.1} parent=5 // pred_check
        _
      $region10: #{tpu_custom_call.1} parent=5 // pred_check_branch
        %107 = sbr.rel (%p104) target = $region12
      $region11: #{tpu_custom_call.1} parent=5 // pred_region
        %s108 = ssub.s32 %s12, 1
        // Predicated region
        $region13: #{tpu_custom_call.1} parent=11 // pred_check
          %p109 = pneg %p45
        $region14: #{tpu_custom_call.1} parent=11 // pred_check_branch
          %111 = sbr.rel (%p109) target = $region16
        $region15: #{tpu_custom_call.1} parent=11 // pred_region
          _
        $region16: #{tpu_custom_call.1} parent=11 // pred_fallthru
          _
        // Predicated region
        $region17: #{tpu_custom_call.1} parent=11 // pred_check
          %p112 = pneg %p66
        $region18: #{tpu_custom_call.1} parent=11 // pred_check_branch
          %114 = sbr.rel (%p112) target = $region20
        $region19: #{tpu_custom_call.1} parent=11 // pred_region
          _
        $region20: #{tpu_custom_call.1} parent=11 // pred_fallthru
          _
      $region12: #{tpu_custom_call.1} parent=5 // pred_fallthru
        _
      %p115 = scmp.lt.s32.totalorder %s12, 2
      // Predicated region
      $region21: #{tpu_custom_call.1} parent=5 // pred_check
        %p116 = pneg %p115
      $region22: #{tpu_custom_call.1} parent=5 // pred_check_branch
        %118 = sbr.rel (%p116) target = $region24
      $region23: #{tpu_custom_call.1} parent=5 // pred_region
        _
      $region24: #{tpu_custom_call.1} parent=5 // pred_fallthru
        _
      %p119 = scmp.le.s32.totalorder 1, %s12
      %p120 = scmp.lt.s32.totalorder %s12, 3
      %p121 = pnand %p119, %p120
      %p122 = pneg %p121
      // Predicated region
      $region25: #{tpu_custom_call.1} parent=5 // pred_check
        _
      $region26: #{tpu_custom_call.1} parent=5 // pred_check_branch
        %124 = sbr.rel (%p121) target = $region28
      $region27: #{tpu_custom_call.1} parent=5 // pred_region
        %s125 = ssub.s32 %s12, 1
        %p126 = pneg %p45
        %p127 = pneg %p42
        %p128 = pneg %p66
        %p129 = pneg %p63
        %p130 = pneg %p94
        %p131 = pneg %p91
        %s132 = sand.u32 %s81, 1
        %s133 = scalar_lea.sflag [#allocation5], %s132
        %s134 = sand.u32 %s81, 1
        %s135 = smul.addr %s134, 256
        %s136 = scalar_lea.vmem [#allocation4], %s135
        %s137 = smul.u32 16, %s22
        %s138 = sand.u32 %s22, 1
        %p139 = scmp.eq.s32.totalorder %s22, 0
        // Predicated region
        $region29: #{tpu_custom_call.1} parent=27 // pred_check
          %p140 = pneg %p139
        $region30: #{tpu_custom_call.1} parent=27 // pred_check_branch
          %142 = sbr.rel (%p140) target = $region32
        $region31: #{tpu_custom_call.1} parent=27 // pred_region
          %s143 = smul.u32 %s21, 480
          %s144 = scalar_lea.vmem %s0, %s143
          %p146 = scmp.lt.u32.totalorder 20, 8
          %p147 = pneg %p146
          // Predicated region
          $region33: #{tpu_custom_call.1} parent=31 // pred_check
            _
          $region34: #{tpu_custom_call.1} parent=31 // pred_check_branch
            %149 = sbr.rel (%p146) target = $region36
          $region35: #{tpu_custom_call.1} parent=31 // pred_region
            %s202 = sand.u32 20, 7
            %p203 = scmp.eq.s32.totalorder %s202, 0
            %p204 = pneg %p203
            // Predicated region
            $region48: #{tpu_custom_call.1} parent=35 // pred_check
              _
            $region49: #{tpu_custom_call.1} parent=35 // pred_check_branch
              %206 = sbr.rel (%p203) target = $region51
            $region50: #{tpu_custom_call.1} parent=35 // pred_region
              %s207 = sand.u32 20, 7
              %s208 = ssub.s32 20, %s207
              %s209 = scalar_lea.vmem %s144, %s208
              %s210 = ssub.s32 20, %s207
              %s211 = scalar_lea.vmem [#allocation2], %s210
              loop: start=0, step=1, limit=1
              $region52: #{tpu_custom_call.1} parent=50 // loop_pre_header
                _
              $region53: #{tpu_custom_call.1} parent=50 // loop_header
                %s213 = sphi 0, %s217
                %p214 = scmp.ge.s32.totalorder %s213, 1
                %s218 = sphi %s144, %s144
                %s219 = sphi [#allocation2], [#allocation2]
              $region54: #{tpu_custom_call.1} parent=50 // loop_header_branch
                %216 = sbr.rel (%p214) target = $region58
              $region55: #{tpu_custom_call.1} parent=50 // loop_body
                %v220 = vld [vmem:[%s218] sm:$0xff]
                %221 = vst [vmem:[%s219] sm:$0xff] %v220
                %v222 = vld [vmem:[%s218 + $0x8] sm:$0xff]
                %223 = vst [vmem:[%s219 + $0x8] sm:$0xff] %v222
                %v224 = vld [vmem:[%s218 + $0x18] sm:$0xff]
                %225 = vst [vmem:[%s219 + $0x18] sm:$0xff] %v224
                %v226 = vld [vmem:[%s218 + $0x20] sm:$0xff]
                %227 = vst [vmem:[%s219 + $0x20] sm:$0xff] %v226
                %v228 = vld [vmem:[%s218 + $0x30] sm:$0xff]
                %229 = vst [vmem:[%s219 + $0x30] sm:$0xff] %v228
                %v230 = vld [vmem:[%s218 + $0x38] sm:$0xff]
                %231 = vst [vmem:[%s219 + $0x38] sm:$0xff] %v230
                %v232 = vld [vmem:[%s218 + $0x48] sm:$0xff]
                %233 = vst [vmem:[%s219 + $0x48] sm:$0xff] %v232
                %v234 = vld [vmem:[%s218 + $0x50] sm:$0xff]
                %235 = vst [vmem:[%s219 + $0x50] sm:$0xff] %v234
                %v236 = vld [vmem:[%s218 + $0x60] sm:$0xff]
                %237 = vst [vmem:[%s219 + $0x60] sm:$0xff] %v236
                %v238 = vld [vmem:[%s218 + $0x68] sm:$0xff]
                %239 = vst [vmem:[%s219 + $0x68] sm:$0xff] %v238
                %v240 = vld [vmem:[%s218 + $0x78] sm:$0xff]
                %241 = vst [vmem:[%s219 + $0x78] sm:$0xff] %v240
                %v242 = vld [vmem:[%s218 + $0x80] sm:$0xff]
                %243 = vst [vmem:[%s219 + $0x80] sm:$0xff] %v242
                %v244 = vld [vmem:[%s218 + $0x90] sm:$0xff]
                %245 = vst [vmem:[%s219 + $0x90] sm:$0xff] %v244
                %v246 = vld [vmem:[%s218 + $0x98] sm:$0xff]
                %247 = vst [vmem:[%s219 + $0x98] sm:$0xff] %v246
                %v248 = vld [vmem:[%s218 + $0xa8] sm:$0xff]
                %249 = vst [vmem:[%s219 + $0xa8] sm:$0xff] %v248
                %v250 = vld [vmem:[%s218 + $0xb0] sm:$0xff]
                %251 = vst [vmem:[%s219 + $0xb0] sm:$0xff] %v250
                %v252 = vld [vmem:[%s218 + $0xc0] sm:$0xff]
                %253 = vst [vmem:[%s219 + $0xc0] sm:$0xff] %v252
                %v254 = vld [vmem:[%s218 + $0xc8] sm:$0xff]
                %255 = vst [vmem:[%s219 + $0xc8] sm:$0xff] %v254
                %v256 = vld [vmem:[%s218 + $0xd8] sm:$0xff]
                %257 = vst [vmem:[%s219 + $0xd8] sm:$0xff] %v256
                %v258 = vld [vmem:[%s218 + $0xe0] sm:$0xff]
                %259 = vst [vmem:[%s219 + $0xe0] sm:$0xff] %v258
                %v260 = vld [vmem:[%s218 + $0xf0] sm:$0xff]
                %261 = vst [vmem:[%s219 + $0xf0] sm:$0xff] %v260
                %v262 = vld [vmem:[%s218 + $0xf8] sm:$0xff]
                %263 = vst [vmem:[%s219 + $0xf8] sm:$0xff] %v262
                %v264 = vld [vmem:[%s218 + $0x108] sm:$0xff]
                %265 = vst [vmem:[%s219 + $0x108] sm:$0xff] %v264
                %v266 = vld [vmem:[%s218 + $0x110] sm:$0xff]
                %267 = vst [vmem:[%s219 + $0x110] sm:$0xff] %v266
                %v268 = vld [vmem:[%s218 + $0x120] sm:$0xff]
                %269 = vst [vmem:[%s219 + $0x120] sm:$0xff] %v268
                %v270 = vld [vmem:[%s218 + $0x128] sm:$0xff]
                %271 = vst [vmem:[%s219 + $0x128] sm:$0xff] %v270
                %v272 = vld [vmem:[%s218 + $0x138] sm:$0xff]
                %273 = vst [vmem:[%s219 + $0x138] sm:$0xff] %v272
                %v274 = vld [vmem:[%s218 + $0x140] sm:$0xff]
                %275 = vst [vmem:[%s219 + $0x140] sm:$0xff] %v274
                %v276 = vld [vmem:[%s218 + $0x150] sm:$0xff]
                %277 = vst [vmem:[%s219 + $0x150] sm:$0xff] %v276
                %v278 = vld [vmem:[%s218 + $0x158] sm:$0xff]
                %279 = vst [vmem:[%s219 + $0x158] sm:$0xff] %v278
                %v280 = vld [vmem:[%s218 + $0x168] sm:$0xff]
                %281 = vst [vmem:[%s219 + $0x168] sm:$0xff] %v280
                %v282 = vld [vmem:[%s218 + $0x170] sm:$0xff]
                %283 = vst [vmem:[%s219 + $0x170] sm:$0xff] %v282
                %v284 = vld [vmem:[%s218 + $0x180] sm:$0xff]
                %285 = vst [vmem:[%s219 + $0x180] sm:$0xff] %v284
                %v286 = vld [vmem:[%s218 + $0x188] sm:$0xff]
                %287 = vst [vmem:[%s219 + $0x188] sm:$0xff] %v286
                %v288 = vld [vmem:[%s218 + $0x198] sm:$0xff]
                %289 = vst [vmem:[%s219 + $0x198] sm:$0xff] %v288
                %v290 = vld [vmem:[%s218 + $0x1a0] sm:$0xff]
                %291 = vst [vmem:[%s219 + $0x1a0] sm:$0xff] %v290
                %v292 = vld [vmem:[%s218 + $0x1b0] sm:$0xff]
                %293 = vst [vmem:[%s219 + $0x1b0] sm:$0xff] %v292
                %v294 = vld [vmem:[%s218 + $0x1b8] sm:$0xff]
                %295 = vst [vmem:[%s219 + $0x1b8] sm:$0xff] %v294
                %v296 = vld [vmem:[%s218 + $0x1c8] sm:$0xff]
                %297 = vst [vmem:[%s219 + $0x1c8] sm:$0xff] %v296
                %v298 = vld [vmem:[%s218 + $0x1d0] sm:$0xff]
                %299 = vst [vmem:[%s219 + $0x1d0] sm:$0xff] %v298
              $region56: #{tpu_custom_call.1} parent=50 // loop_footer
                %s217 = sadd.s32 1, %s213
              $region57: #{tpu_custom_call.1} parent=50 // loop_footer_branch
                %212 = sbr.rel target = $region53
              $region58: #{tpu_custom_call.1} parent=50 // loop_exit
                _
              %s300 = sshllo.u32 0, %s207
              loop: start=0, step=1, limit=1
              $region59: #{tpu_custom_call.1} parent=50 // loop_pre_header
                _
              $region60: #{tpu_custom_call.1} parent=50 // loop_header
                %s302 = sphi 0, %s306
                %p303 = scmp.ge.s32.totalorder %s302, 1
                %s307 = sphi %s209, %s209
                %s308 = sphi %s211, %s211
              $region61: #{tpu_custom_call.1} parent=50 // loop_header_branch
                %305 = sbr.rel (%p303) target = $region65
              $region62: #{tpu_custom_call.1} parent=50 // loop_body
                %v309 = vld [vmem:[%s307] sm:%s300]
                %310 = vst [vmem:[%s308] sm:%s300] %v309
                %v311 = vld [vmem:[%s307 + $0x18] sm:%s300]
                %312 = vst [vmem:[%s308 + $0x18] sm:%s300] %v311
                %v313 = vld [vmem:[%s307 + $0x30] sm:%s300]
                %314 = vst [vmem:[%s308 + $0x30] sm:%s300] %v313
                %v315 = vld [vmem:[%s307 + $0x48] sm:%s300]
                %316 = vst [vmem:[%s308 + $0x48] sm:%s300] %v315
                %v317 = vld [vmem:[%s307 + $0x60] sm:%s300]
                %318 = vst [vmem:[%s308 + $0x60] sm:%s300] %v317
                %v319 = vld [vmem:[%s307 + $0x78] sm:%s300]
                %320 = vst [vmem:[%s308 + $0x78] sm:%s300] %v319
                %v321 = vld [vmem:[%s307 + $0x90] sm:%s300]
                %322 = vst [vmem:[%s308 + $0x90] sm:%s300] %v321
                %v323 = vld [vmem:[%s307 + $0xa8] sm:%s300]
                %324 = vst [vmem:[%s308 + $0xa8] sm:%s300] %v323
                %v325 = vld [vmem:[%s307 + $0xc0] sm:%s300]
                %326 = vst [vmem:[%s308 + $0xc0] sm:%s300] %v325
                %v327 = vld [vmem:[%s307 + $0xd8] sm:%s300]
                %328 = vst [vmem:[%s308 + $0xd8] sm:%s300] %v327
                %v329 = vld [vmem:[%s307 + $0xf0] sm:%s300]
                %330 = vst [vmem:[%s308 + $0xf0] sm:%s300] %v329
                %v331 = vld [vmem:[%s307 + $0x108] sm:%s300]
                %332 = vst [vmem:[%s308 + $0x108] sm:%s300] %v331
                %v333 = vld [vmem:[%s307 + $0x120] sm:%s300]
                %334 = vst [vmem:[%s308 + $0x120] sm:%s300] %v333
                %v335 = vld [vmem:[%s307 + $0x138] sm:%s300]
                %336 = vst [vmem:[%s308 + $0x138] sm:%s300] %v335
                %v337 = vld [vmem:[%s307 + $0x150] sm:%s300]
                %338 = vst [vmem:[%s308 + $0x150] sm:%s300] %v337
                %v339 = vld [vmem:[%s307 + $0x168] sm:%s300]
                %340 = vst [vmem:[%s308 + $0x168] sm:%s300] %v339
                %v341 = vld [vmem:[%s307 + $0x180] sm:%s300]
                %342 = vst [vmem:[%s308 + $0x180] sm:%s300] %v341
                %v343 = vld [vmem:[%s307 + $0x198] sm:%s300]
                %344 = vst [vmem:[%s308 + $0x198] sm:%s300] %v343
                %v345 = vld [vmem:[%s307 + $0x1b0] sm:%s300]
                %346 = vst [vmem:[%s308 + $0x1b0] sm:%s300] %v345
                %v347 = vld [vmem:[%s307 + $0x1c8] sm:%s300]
                %348 = vst [vmem:[%s308 + $0x1c8] sm:%s300] %v347
              $region63: #{tpu_custom_call.1} parent=50 // loop_footer
                %s306 = sadd.s32 1, %s302
              $region64: #{tpu_custom_call.1} parent=50 // loop_footer_branch
                %301 = sbr.rel target = $region60
              $region65: #{tpu_custom_call.1} parent=50 // loop_exit
                _
            $region51: #{tpu_custom_call.1} parent=35 // pred_fallthru
              _
          $region36: #{tpu_custom_call.1} parent=31 // pred_fallthru
            _
          // Predicated region
          $region37: #{tpu_custom_call.1} parent=31 // pred_check
            %p150 = pneg %p146
          $region38: #{tpu_custom_call.1} parent=31 // pred_check_branch
            %152 = sbr.rel (%p150) target = $region40
          $region39: #{tpu_custom_call.1} parent=31 // pred_region
            %s153 = sshllo.u32 0, 20
            loop: start=0, step=1, limit=1
            $region41: #{tpu_custom_call.1} parent=39 // loop_pre_header
              _
            $region42: #{tpu_custom_call.1} parent=39 // loop_header
              %s155 = sphi 0, %s159
              %p156 = scmp.ge.s32.totalorder %s155, 1
              %s160 = sphi %s144, %s144
              %s161 = sphi [#allocation2], [#allocation2]
            $region43: #{tpu_custom_call.1} parent=39 // loop_header_branch
              %158 = sbr.rel (%p156) target = $region47
            $region44: #{tpu_custom_call.1} parent=39 // loop_body
              %v162 = vld [vmem:[%s160] sm:%s153]
              %163 = vst [vmem:[%s161] sm:%s153] %v162
              %v164 = vld [vmem:[%s160 + $0x18] sm:%s153]
              %165 = vst [vmem:[%s161 + $0x18] sm:%s153] %v164
              %v166 = vld [vmem:[%s160 + $0x30] sm:%s153]
              %167 = vst [vmem:[%s161 + $0x30] sm:%s153] %v166
              %v168 = vld [vmem:[%s160 + $0x48] sm:%s153]
              %169 = vst [vmem:[%s161 + $0x48] sm:%s153] %v168
              %v170 = vld [vmem:[%s160 + $0x60] sm:%s153]
              %171 = vst [vmem:[%s161 + $0x60] sm:%s153] %v170
              %v172 = vld [vmem:[%s160 + $0x78] sm:%s153]
              %173 = vst [vmem:[%s161 + $0x78] sm:%s153] %v172
              %v174 = vld [vmem:[%s160 + $0x90] sm:%s153]
              %175 = vst [vmem:[%s161 + $0x90] sm:%s153] %v174
              %v176 = vld [vmem:[%s160 + $0xa8] sm:%s153]
              %177 = vst [vmem:[%s161 + $0xa8] sm:%s153] %v176
              %v178 = vld [vmem:[%s160 + $0xc0] sm:%s153]
              %179 = vst [vmem:[%s161 + $0xc0] sm:%s153] %v178
              %v180 = vld [vmem:[%s160 + $0xd8] sm:%s153]
              %181 = vst [vmem:[%s161 + $0xd8] sm:%s153] %v180
              %v182 = vld [vmem:[%s160 + $0xf0] sm:%s153]
              %183 = vst [vmem:[%s161 + $0xf0] sm:%s153] %v182
              %v184 = vld [vmem:[%s160 + $0x108] sm:%s153]
              %185 = vst [vmem:[%s161 + $0x108] sm:%s153] %v184
              %v186 = vld [vmem:[%s160 + $0x120] sm:%s153]
              %187 = vst [vmem:[%s161 + $0x120] sm:%s153] %v186
              %v188 = vld [vmem:[%s160 + $0x138] sm:%s153]
              %189 = vst [vmem:[%s161 + $0x138] sm:%s153] %v188
              %v190 = vld [vmem:[%s160 + $0x150] sm:%s153]
              %191 = vst [vmem:[%s161 + $0x150] sm:%s153] %v190
              %v192 = vld [vmem:[%s160 + $0x168] sm:%s153]
              %193 = vst [vmem:[%s161 + $0x168] sm:%s153] %v192
              %v194 = vld [vmem:[%s160 + $0x180] sm:%s153]
              %195 = vst [vmem:[%s161 + $0x180] sm:%s153] %v194
              %v196 = vld [vmem:[%s160 + $0x198] sm:%s153]
              %197 = vst [vmem:[%s161 + $0x198] sm:%s153] %v196
              %v198 = vld [vmem:[%s160 + $0x1b0] sm:%s153]
              %199 = vst [vmem:[%s161 + $0x1b0] sm:%s153] %v198
              %v200 = vld [vmem:[%s160 + $0x1c8] sm:%s153]
              %201 = vst [vmem:[%s161 + $0x1c8] sm:%s153] %v200
            $region45: #{tpu_custom_call.1} parent=39 // loop_footer
              %s159 = sadd.s32 1, %s155
            $region46: #{tpu_custom_call.1} parent=39 // loop_footer_branch
              %154 = sbr.rel target = $region42
            $region47: #{tpu_custom_call.1} parent=39 // loop_exit
              _
          $region40: #{tpu_custom_call.1} parent=31 // pred_fallthru
            _
          // Predicated region
          $region66: #{tpu_custom_call.1} parent=31 // pred_check
            _
          $region67: #{tpu_custom_call.1} parent=31 // pred_check_branch
            %351 = sbr.rel (0) target = $region69
          $region68: #{tpu_custom_call.1} parent=31 // pred_region
            %352 = vsyncadd [#allocation3], 6400
          $region69: #{tpu_custom_call.1} parent=31 // pred_fallthru
            _
        $region32: #{tpu_custom_call.1} parent=27 // pred_fallthru
          _
        %s353 = sadd.s32 %s22, 1
        %p354 = scmp.lt.s32.totalorder %s353, 1
        // Predicated region
        $region70: #{tpu_custom_call.1} parent=27 // pred_check
          %p355 = pneg %p354
        $region71: #{tpu_custom_call.1} parent=27 // pred_check_branch
          %357 = sbr.rel (%p355) target = $region73
        $region72: #{tpu_custom_call.1} parent=27 // pred_region
          %s358 = ssub.s32 1, %s138
          %s359 = smul.u32 %s353, 16
          %s360 = smul.u32 %s359, 24
          %s361 = smul.u32 %s21, 480
          %s362 = sadd.s32 %s360, %s361
          %s363 = scalar_lea.vmem %s0, %s362
          %s364 = smul.u32 %s358, 480
          %s365 = scalar_lea.vmem [#allocation2], %s364
          %s366 = scalar_lea.sflag [#allocation3], %s358
          %p368 = scmp.lt.u32.totalorder 20, 8
          %p369 = pneg %p368
          // Predicated region
          $region74: #{tpu_custom_call.1} parent=72 // pred_check
            _
          $region75: #{tpu_custom_call.1} parent=72 // pred_check_branch
            %371 = sbr.rel (%p368) target = $region77
          $region76: #{tpu_custom_call.1} parent=72 // pred_region
            %s424 = sand.u32 20, 7
            %p425 = scmp.eq.s32.totalorder %s424, 0
            %p426 = pneg %p425
            // Predicated region
            $region89: #{tpu_custom_call.1} parent=76 // pred_check
              _
            $region90: #{tpu_custom_call.1} parent=76 // pred_check_branch
              %428 = sbr.rel (%p425) target = $region92
            $region91: #{tpu_custom_call.1} parent=76 // pred_region
              %s429 = sand.u32 20, 7
              %s430 = ssub.s32 20, %s429
              %s431 = scalar_lea.vmem %s363, %s430
              %s432 = ssub.s32 20, %s429
              %s433 = scalar_lea.vmem %s365, %s432 [#allocation2]
              loop: start=0, step=1, limit=1
              $region93: #{tpu_custom_call.1} parent=91 // loop_pre_header
                _
              $region94: #{tpu_custom_call.1} parent=91 // loop_header
                %s435 = sphi 0, %s439
                %p436 = scmp.ge.s32.totalorder %s435, 1
                %s440 = sphi %s363, %s363
                %s441 = sphi %s365, %s365
              $region95: #{tpu_custom_call.1} parent=91 // loop_header_branch
                %438 = sbr.rel (%p436) target = $region99
              $region96: #{tpu_custom_call.1} parent=91 // loop_body
                %v442 = vld [vmem:[%s440] sm:$0xff]
                %443 = vst [vmem:[%s441] sm:$0xff] %v442
                %v444 = vld [vmem:[%s440 + $0x8] sm:$0xff]
                %445 = vst [vmem:[%s441 + $0x8] sm:$0xff] %v444
                %v446 = vld [vmem:[%s440 + $0x18] sm:$0xff]
                %447 = vst [vmem:[%s441 + $0x18] sm:$0xff] %v446
                %v448 = vld [vmem:[%s440 + $0x20] sm:$0xff]
                %449 = vst [vmem:[%s441 + $0x20] sm:$0xff] %v448
                %v450 = vld [vmem:[%s440 + $0x30] sm:$0xff]
                %451 = vst [vmem:[%s441 + $0x30] sm:$0xff] %v450
                %v452 = vld [vmem:[%s440 + $0x38] sm:$0xff]
                %453 = vst [vmem:[%s441 + $0x38] sm:$0xff] %v452
                %v454 = vld [vmem:[%s440 + $0x48] sm:$0xff]
                %455 = vst [vmem:[%s441 + $0x48] sm:$0xff] %v454
                %v456 = vld [vmem:[%s440 + $0x50] sm:$0xff]
                %457 = vst [vmem:[%s441 + $0x50] sm:$0xff] %v456
                %v458 = vld [vmem:[%s440 + $0x60] sm:$0xff]
                %459 = vst [vmem:[%s441 + $0x60] sm:$0xff] %v458
                %v460 = vld [vmem:[%s440 + $0x68] sm:$0xff]
                %461 = vst [vmem:[%s441 + $0x68] sm:$0xff] %v460
                %v462 = vld [vmem:[%s440 + $0x78] sm:$0xff]
                %463 = vst [vmem:[%s441 + $0x78] sm:$0xff] %v462
                %v464 = vld [vmem:[%s440 + $0x80] sm:$0xff]
                %465 = vst [vmem:[%s441 + $0x80] sm:$0xff] %v464
                %v466 = vld [vmem:[%s440 + $0x90] sm:$0xff]
                %467 = vst [vmem:[%s441 + $0x90] sm:$0xff] %v466
                %v468 = vld [vmem:[%s440 + $0x98] sm:$0xff]
                %469 = vst [vmem:[%s441 + $0x98] sm:$0xff] %v468
                %v470 = vld [vmem:[%s440 + $0xa8] sm:$0xff]
                %471 = vst [vmem:[%s441 + $0xa8] sm:$0xff] %v470
                %v472 = vld [vmem:[%s440 + $0xb0] sm:$0xff]
                %473 = vst [vmem:[%s441 + $0xb0] sm:$0xff] %v472
                %v474 = vld [vmem:[%s440 + $0xc0] sm:$0xff]
                %475 = vst [vmem:[%s441 + $0xc0] sm:$0xff] %v474
                %v476 = vld [vmem:[%s440 + $0xc8] sm:$0xff]
                %477 = vst [vmem:[%s441 + $0xc8] sm:$0xff] %v476
                %v478 = vld [vmem:[%s440 + $0xd8] sm:$0xff]
                %479 = vst [vmem:[%s441 + $0xd8] sm:$0xff] %v478
                %v480 = vld [vmem:[%s440 + $0xe0] sm:$0xff]
                %481 = vst [vmem:[%s441 + $0xe0] sm:$0xff] %v480
                %v482 = vld [vmem:[%s440 + $0xf0] sm:$0xff]
                %483 = vst [vmem:[%s441 + $0xf0] sm:$0xff] %v482
                %v484 = vld [vmem:[%s440 + $0xf8] sm:$0xff]
                %485 = vst [vmem:[%s441 + $0xf8] sm:$0xff] %v484
                %v486 = vld [vmem:[%s440 + $0x108] sm:$0xff]
                %487 = vst [vmem:[%s441 + $0x108] sm:$0xff] %v486
                %v488 = vld [vmem:[%s440 + $0x110] sm:$0xff]
                %489 = vst [vmem:[%s441 + $0x110] sm:$0xff] %v488
                %v490 = vld [vmem:[%s440 + $0x120] sm:$0xff]
                %491 = vst [vmem:[%s441 + $0x120] sm:$0xff] %v490
                %v492 = vld [vmem:[%s440 + $0x128] sm:$0xff]
                %493 = vst [vmem:[%s441 + $0x128] sm:$0xff] %v492
                %v494 = vld [vmem:[%s440 + $0x138] sm:$0xff]
                %495 = vst [vmem:[%s441 + $0x138] sm:$0xff] %v494
                %v496 = vld [vmem:[%s440 + $0x140] sm:$0xff]
                %497 = vst [vmem:[%s441 + $0x140] sm:$0xff] %v496
                %v498 = vld [vmem:[%s440 + $0x150] sm:$0xff]
                %499 = vst [vmem:[%s441 + $0x150] sm:$0xff] %v498
                %v500 = vld [vmem:[%s440 + $0x158] sm:$0xff]
                %501 = vst [vmem:[%s441 + $0x158] sm:$0xff] %v500
                %v502 = vld [vmem:[%s440 + $0x168] sm:$0xff]
                %503 = vst [vmem:[%s441 + $0x168] sm:$0xff] %v502
                %v504 = vld [vmem:[%s440 + $0x170] sm:$0xff]
                %505 = vst [vmem:[%s441 + $0x170] sm:$0xff] %v504
                %v506 = vld [vmem:[%s440 + $0x180] sm:$0xff]
                %507 = vst [vmem:[%s441 + $0x180] sm:$0xff] %v506
                %v508 = vld [vmem:[%s440 + $0x188] sm:$0xff]
                %509 = vst [vmem:[%s441 + $0x188] sm:$0xff] %v508
                %v510 = vld [vmem:[%s440 + $0x198] sm:$0xff]
                %511 = vst [vmem:[%s441 + $0x198] sm:$0xff] %v510
                %v512 = vld [vmem:[%s440 + $0x1a0] sm:$0xff]
                %513 = vst [vmem:[%s441 + $0x1a0] sm:$0xff] %v512
                %v514 = vld [vmem:[%s440 + $0x1b0] sm:$0xff]
                %515 = vst [vmem:[%s441 + $0x1b0] sm:$0xff] %v514
                %v516 = vld [vmem:[%s440 + $0x1b8] sm:$0xff]
                %517 = vst [vmem:[%s441 + $0x1b8] sm:$0xff] %v516
                %v518 = vld [vmem:[%s440 + $0x1c8] sm:$0xff]
                %519 = vst [vmem:[%s441 + $0x1c8] sm:$0xff] %v518
                %v520 = vld [vmem:[%s440 + $0x1d0] sm:$0xff]
                %521 = vst [vmem:[%s441 + $0x1d0] sm:$0xff] %v520
              $region97: #{tpu_custom_call.1} parent=91 // loop_footer
                %s439 = sadd.s32 1, %s435
              $region98: #{tpu_custom_call.1} parent=91 // loop_footer_branch
                %434 = sbr.rel target = $region94
              $region99: #{tpu_custom_call.1} parent=91 // loop_exit
                _
              %s522 = sshllo.u32 0, %s429
              loop: start=0, step=1, limit=1
              $region100: #{tpu_custom_call.1} parent=91 // loop_pre_header
                _
              $region101: #{tpu_custom_call.1} parent=91 // loop_header
                %s524 = sphi 0, %s528
                %p525 = scmp.ge.s32.totalorder %s524, 1
                %s529 = sphi %s431, %s431
                %s530 = sphi %s433, %s433
              $region102: #{tpu_custom_call.1} parent=91 // loop_header_branch
                %527 = sbr.rel (%p525) target = $region106
              $region103: #{tpu_custom_call.1} parent=91 // loop_body
                %v531 = vld [vmem:[%s529] sm:%s522]
                %532 = vst [vmem:[%s530] sm:%s522] %v531
                %v533 = vld [vmem:[%s529 + $0x18] sm:%s522]
                %534 = vst [vmem:[%s530 + $0x18] sm:%s522] %v533
                %v535 = vld [vmem:[%s529 + $0x30] sm:%s522]
                %536 = vst [vmem:[%s530 + $0x30] sm:%s522] %v535
                %v537 = vld [vmem:[%s529 + $0x48] sm:%s522]
                %538 = vst [vmem:[%s530 + $0x48] sm:%s522] %v537
                %v539 = vld [vmem:[%s529 + $0x60] sm:%s522]
                %540 = vst [vmem:[%s530 + $0x60] sm:%s522] %v539
                %v541 = vld [vmem:[%s529 + $0x78] sm:%s522]
                %542 = vst [vmem:[%s530 + $0x78] sm:%s522] %v541
                %v543 = vld [vmem:[%s529 + $0x90] sm:%s522]
                %544 = vst [vmem:[%s530 + $0x90] sm:%s522] %v543
                %v545 = vld [vmem:[%s529 + $0xa8] sm:%s522]
                %546 = vst [vmem:[%s530 + $0xa8] sm:%s522] %v545
                %v547 = vld [vmem:[%s529 + $0xc0] sm:%s522]
                %548 = vst [vmem:[%s530 + $0xc0] sm:%s522] %v547
                %v549 = vld [vmem:[%s529 + $0xd8] sm:%s522]
                %550 = vst [vmem:[%s530 + $0xd8] sm:%s522] %v549
                %v551 = vld [vmem:[%s529 + $0xf0] sm:%s522]
                %552 = vst [vmem:[%s530 + $0xf0] sm:%s522] %v551
                %v553 = vld [vmem:[%s529 + $0x108] sm:%s522]
                %554 = vst [vmem:[%s530 + $0x108] sm:%s522] %v553
                %v555 = vld [vmem:[%s529 + $0x120] sm:%s522]
                %556 = vst [vmem:[%s530 + $0x120] sm:%s522] %v555
                %v557 = vld [vmem:[%s529 + $0x138] sm:%s522]
                %558 = vst [vmem:[%s530 + $0x138] sm:%s522] %v557
                %v559 = vld [vmem:[%s529 + $0x150] sm:%s522]
                %560 = vst [vmem:[%s530 + $0x150] sm:%s522] %v559
                %v561 = vld [vmem:[%s529 + $0x168] sm:%s522]
                %562 = vst [vmem:[%s530 + $0x168] sm:%s522] %v561
                %v563 = vld [vmem:[%s529 + $0x180] sm:%s522]
                %564 = vst [vmem:[%s530 + $0x180] sm:%s522] %v563
                %v565 = vld [vmem:[%s529 + $0x198] sm:%s522]
                %566 = vst [vmem:[%s530 + $0x198] sm:%s522] %v565
                %v567 = vld [vmem:[%s529 + $0x1b0] sm:%s522]
                %568 = vst [vmem:[%s530 + $0x1b0] sm:%s522] %v567
                %v569 = vld [vmem:[%s529 + $0x1c8] sm:%s522]
                %570 = vst [vmem:[%s530 + $0x1c8] sm:%s522] %v569
              $region104: #{tpu_custom_call.1} parent=91 // loop_footer
                %s528 = sadd.s32 1, %s524
              $region105: #{tpu_custom_call.1} parent=91 // loop_footer_branch
                %523 = sbr.rel target = $region101
              $region106: #{tpu_custom_call.1} parent=91 // loop_exit
                _
            $region92: #{tpu_custom_call.1} parent=76 // pred_fallthru
              _
          $region77: #{tpu_custom_call.1} parent=72 // pred_fallthru
            _
          // Predicated region
          $region78: #{tpu_custom_call.1} parent=72 // pred_check
            %p372 = pneg %p368
          $region79: #{tpu_custom_call.1} parent=72 // pred_check_branch
            %374 = sbr.rel (%p372) target = $region81
          $region80: #{tpu_custom_call.1} parent=72 // pred_region
            %s375 = sshllo.u32 0, 20
            loop: start=0, step=1, limit=1
            $region82: #{tpu_custom_call.1} parent=80 // loop_pre_header
              _
            $region83: #{tpu_custom_call.1} parent=80 // loop_header
              %s377 = sphi 0, %s381
              %p378 = scmp.ge.s32.totalorder %s377, 1
              %s382 = sphi %s363, %s363
              %s383 = sphi %s365, %s365
            $region84: #{tpu_custom_call.1} parent=80 // loop_header_branch
              %380 = sbr.rel (%p378) target = $region88
            $region85: #{tpu_custom_call.1} parent=80 // loop_body
              %v384 = vld [vmem:[%s382] sm:%s375]
              %385 = vst [vmem:[%s383] sm:%s375] %v384
              %v386 = vld [vmem:[%s382 + $0x18] sm:%s375]
              %387 = vst [vmem:[%s383 + $0x18] sm:%s375] %v386
              %v388 = vld [vmem:[%s382 + $0x30] sm:%s375]
              %389 = vst [vmem:[%s383 + $0x30] sm:%s375] %v388
              %v390 = vld [vmem:[%s382 + $0x48] sm:%s375]
              %391 = vst [vmem:[%s383 + $0x48] sm:%s375] %v390
              %v392 = vld [vmem:[%s382 + $0x60] sm:%s375]
              %393 = vst [vmem:[%s383 + $0x60] sm:%s375] %v392
              %v394 = vld [vmem:[%s382 + $0x78] sm:%s375]
              %395 = vst [vmem:[%s383 + $0x78] sm:%s375] %v394
              %v396 = vld [vmem:[%s382 + $0x90] sm:%s375]
              %397 = vst [vmem:[%s383 + $0x90] sm:%s375] %v396
              %v398 = vld [vmem:[%s382 + $0xa8] sm:%s375]
              %399 = vst [vmem:[%s383 + $0xa8] sm:%s375] %v398
              %v400 = vld [vmem:[%s382 + $0xc0] sm:%s375]
              %401 = vst [vmem:[%s383 + $0xc0] sm:%s375] %v400
              %v402 = vld [vmem:[%s382 + $0xd8] sm:%s375]
              %403 = vst [vmem:[%s383 + $0xd8] sm:%s375] %v402
              %v404 = vld [vmem:[%s382 + $0xf0] sm:%s375]
              %405 = vst [vmem:[%s383 + $0xf0] sm:%s375] %v404
              %v406 = vld [vmem:[%s382 + $0x108] sm:%s375]
              %407 = vst [vmem:[%s383 + $0x108] sm:%s375] %v406
              %v408 = vld [vmem:[%s382 + $0x120] sm:%s375]
              %409 = vst [vmem:[%s383 + $0x120] sm:%s375] %v408
              %v410 = vld [vmem:[%s382 + $0x138] sm:%s375]
              %411 = vst [vmem:[%s383 + $0x138] sm:%s375] %v410
              %v412 = vld [vmem:[%s382 + $0x150] sm:%s375]
              %413 = vst [vmem:[%s383 + $0x150] sm:%s375] %v412
              %v414 = vld [vmem:[%s382 + $0x168] sm:%s375]
              %415 = vst [vmem:[%s383 + $0x168] sm:%s375] %v414
              %v416 = vld [vmem:[%s382 + $0x180] sm:%s375]
              %417 = vst [vmem:[%s383 + $0x180] sm:%s375] %v416
              %v418 = vld [vmem:[%s382 + $0x198] sm:%s375]
              %419 = vst [vmem:[%s383 + $0x198] sm:%s375] %v418
              %v420 = vld [vmem:[%s382 + $0x1b0] sm:%s375]
              %421 = vst [vmem:[%s383 + $0x1b0] sm:%s375] %v420
              %v422 = vld [vmem:[%s382 + $0x1c8] sm:%s375]
              %423 = vst [vmem:[%s383 + $0x1c8] sm:%s375] %v422
            $region86: #{tpu_custom_call.1} parent=80 // loop_footer
              %s381 = sadd.s32 1, %s377
            $region87: #{tpu_custom_call.1} parent=80 // loop_footer_branch
              %376 = sbr.rel target = $region83
            $region88: #{tpu_custom_call.1} parent=80 // loop_exit
              _
          $region81: #{tpu_custom_call.1} parent=72 // pred_fallthru
            _
          // Predicated region
          $region107: #{tpu_custom_call.1} parent=72 // pred_check
            _
          $region108: #{tpu_custom_call.1} parent=72 // pred_check_branch
            %573 = sbr.rel (0) target = $region110
          $region109: #{tpu_custom_call.1} parent=72 // pred_region
            %574 = vsyncadd %s366, 6400
          $region110: #{tpu_custom_call.1} parent=72 // pred_fallthru
            _
        $region73: #{tpu_custom_call.1} parent=27 // pred_fallthru
          _
        %s575 = scalar_lea.sflag [#allocation3], %s138
        %s576 = smul.u32 20, 20
        %s577 = smul.u32 %s576, 1
        %s578 = sshll.u32 %s577, 4
        %579 = dma.done %s575, %s578
        %v580 = vld [vmem:[%s2] sm:$0x1]
        %v582 = vlaneseq
        %v583 = vshrl.u32 %v582, 7
        %v584 = vsub.s32 0, %v583
        %v585 = vrot.slane %v580, %v584
        %s587 = smul.u32 %s138, 480
        %s588 = scalar_lea.vmem [#allocation2], %s587
        %v589 = vld [vmem:[%s588] sm:$0xff]
        %v590 = vld [vmem:[%s588 + $0x8] sm:$0xff]
        %v591 = vld [vmem:[%s588 + $0x18] sm:$0xff]
        %v592 = vld [vmem:[%s588 + $0x20] sm:$0xff]
        %v593 = vld [vmem:[%s588 + $0x30] sm:$0xff]
        %v594 = vld [vmem:[%s588 + $0x38] sm:$0xff]
        %v595 = vld [vmem:[%s588 + $0x48] sm:$0xff]
        %v596 = vld [vmem:[%s588 + $0x50] sm:$0xff]
        %v597 = vld [vmem:[%s588 + $0x60] sm:$0xff]
        %v598 = vld [vmem:[%s588 + $0x68] sm:$0xff]
        %v599 = vld [vmem:[%s588 + $0x78] sm:$0xff]
        %v600 = vld [vmem:[%s588 + $0x80] sm:$0xff]
        %v601 = vld [vmem:[%s588 + $0x90] sm:$0xff]
        %v602 = vld [vmem:[%s588 + $0x98] sm:$0xff]
        %v603 = vld [vmem:[%s588 + $0xa8] sm:$0xff]
        %v604 = vld [vmem:[%s588 + $0xb0] sm:$0xff]
        %v605 = vld [vmem:[%s588 + $0xc0] sm:$0xff]
        %v606 = vld [vmem:[%s588 + $0xc8] sm:$0xff]
        %v607 = vld [vmem:[%s588 + $0xd8] sm:$0xff]
        %v608 = vld [vmem:[%s588 + $0xe0] sm:$0xff]
        %v609 = vld [vmem:[%s588 + $0xf0] sm:$0xff]
        %v610 = vld [vmem:[%s588 + $0xf8] sm:$0xff]
        %v611 = vld [vmem:[%s588 + $0x108] sm:$0xff]
        %v612 = vld [vmem:[%s588 + $0x110] sm:$0xff]
        %v613 = vld [vmem:[%s588 + $0x120] sm:$0xff]
        %v614 = vld [vmem:[%s588 + $0x128] sm:$0xff]
        %v615 = vld [vmem:[%s588 + $0x138] sm:$0xff]
        %v616 = vld [vmem:[%s588 + $0x140] sm:$0xff]
        %v617 = vld [vmem:[%s588 + $0x150] sm:$0xff]
        %v618 = vld [vmem:[%s588 + $0x158] sm:$0xff]
        %v619 = vld [vmem:[%s588 + $0x168] sm:$0xff]
        %v620 = vld [vmem:[%s588 + $0x170] sm:$0xff]
        %v621 = vld [vmem:[%s1] sm:$0xff]
        %v622 = vld [vmem:[%s1 + $0x8] sm:$0xff]
        %v623 = vld [vmem:[%s1 + $0x10] sm:$0xff]
        %v624 = vld [vmem:[%s1 + $0x18] sm:$0xff]
        %v625 = vld [vmem:[%s1 + $0x20] sm:$0xff]
        %v626 = vld [vmem:[%s1 + $0x28] sm:$0xff]
        %v627 = vld [vmem:[%s1 + $0x30] sm:$0xff]
        %v628 = vld [vmem:[%s1 + $0x38] sm:$0xff]
        %v629 = vld [vmem:[%s1 + $0x40] sm:$0xff]
        %v630 = vld [vmem:[%s1 + $0x48] sm:$0xff]
        %v631 = vld [vmem:[%s1 + $0x50] sm:$0xff]
        %v632 = vld [vmem:[%s1 + $0x58] sm:$0xff]
        %v633 = vld [vmem:[%s1 + $0x60] sm:$0xff]
        %v634 = vld [vmem:[%s1 + $0x68] sm:$0xff]
        %v635 = vld [vmem:[%s1 + $0x70] sm:$0xff]
        %v636 = vld [vmem:[%s1 + $0x78] sm:$0xff]
        %637 = vmatprep.subr.mxu0 0.0
        %638 = vmatpush1.msra.mxu0 %v621
        %639 = vmatprep.subr.mxu0 0.0
        %640 = vmatpush1.msra.mxu0 %v622
        %641 = vmatprep.subr.mxu0 0.0
        %642 = vmatpush1.msra.mxu0 %v623
        %643 = vmatprep.subr.mxu0 0.0
        %644 = vmatpush1.msra.mxu0 %v624
        %645 = vmatprep.subr.mxu0 0.0
        %646 = vmatpush1.msra.mxu0 %v625
        %647 = vmatprep.subr.mxu0 0.0
        %648 = vmatpush1.msra.mxu0 %v626
        %649 = vmatprep.subr.mxu0 0.0
        %650 = vmatpush1.msra.mxu0 %v627
        %651 = vmatprep.subr.mxu0 0.0
        %652 = vmatpush1.msra.mxu0 %v628
        %653 = vmatprep.subr.mxu0 0.0
        %654 = vmatpush1.msra.mxu0 %v629
        %655 = vmatprep.subr.mxu0 0.0
        %656 = vmatpush1.msra.mxu0 %v630
        %657 = vmatprep.subr.mxu0 0.0
        %658 = vmatpush1.msra.mxu0 %v631
        %659 = vmatprep.subr.mxu0 0.0
        %660 = vmatpush1.msra.mxu0 %v632
        %661 = vmatprep.subr.mxu0 0.0
        %662 = vmatpush1.msra.mxu0 %v633
        %663 = vmatprep.subr.mxu0 0.0
        %664 = vmatpush1.msra.mxu0 %v634
        %665 = vmatprep.subr.mxu0 0.0
        %666 = vmatpush1.msra.mxu0 %v635
        %667 = vmatprep.subr.mxu0 0.0
        %668 = vmatpush1.msra.mxu0 %v636
        %669 = vmatprep.subr.mxu0 0.0
        %670 = vmatpush1.msra.mxu0 0.0
        %671 = vmatprep.subr.mxu0 0.0
        %672 = vmatpush1.msra.mxu0 0.0
        %673 = vmatprep.subr.mxu0 0.0
        %674 = vmatpush1.msra.mxu0 0.0
        %675 = vmatprep.subr.mxu0 0.0
        %676 = vmatpush1.msra.mxu0 0.0
        %677 = vmatprep.subr.mxu0 0.0
        %678 = vmatpush1.msra.mxu0 0.0
        %679 = vmatprep.subr.mxu0 0.0
        %680 = vmatpush1.msra.mxu0 0.0
        %681 = vmatprep.subr.mxu0 0.0
        %682 = vmatpush1.msra.mxu0 0.0
        %683 = vmatprep.subr.mxu0 0.0
        %684 = vmatpush1.msra.mxu0 0.0
        %685 = vmatprep.subr.mxu0 0.0
        %686 = vmatpush1.msra.mxu0 0.0
        %687 = vmatprep.subr.mxu0 0.0
        %688 = vmatpush1.msra.mxu0 0.0
        %689 = vmatprep.subr.mxu0 0.0
        %690 = vmatpush1.msra.mxu0 0.0
        %691 = vmatprep.subr.mxu0 0.0
        %692 = vmatpush1.msra.mxu0 0.0
        %693 = vmatprep.subr.mxu0 0.0
        %694 = vmatpush1.msra.mxu0 0.0
        %695 = vmatprep.subr.mxu0 0.0
        %696 = vmatpush1.msra.mxu0 0.0
        %697 = vmatprep.subr.mxu0 0.0
        %698 = vmatpush1.msra.mxu0 0.0
        %699 = vmatprep.subr.mxu0 0.0
        %700 = vmatpush1.msra.mxu0 0.0
        %701 = vmatprep.mubr.f32.mxu0 0.0
        %702 = vmatmul.mubr.f32.gmra.mrb[0].mxu0 %v589
        %v703 = vpop.f32.mrb[0].mxu0
        %v704 = vadd.f32 0.0, %v703
        %v705 = vpop.f32.mrb[0].mxu0
        %706 = vmatprep.mubr.f32.mxu0 0.0
        %707 = vmatmul.mubr.f32.gmra.mrb[0].mxu0 %v590
        %v708 = vpop.f32.mrb[0].mxu0
        %v709 = vadd.f32 0.0, %v708
        %v710 = vpop.f32.mrb[0].mxu0
        %711 = vmatprep.mubr.f32.mxu0 0.0
        %712 = vmatmul.mubr.f32.gmra.mrb[0].mxu0 %v591
        %v713 = vpop.f32.mrb[0].mxu0
        %v714 = vadd.f32 0.0, %v713
        %v715 = vpop.f32.mrb[0].mxu0
        %716 = vmatprep.mubr.f32.mxu0 0.0
        %717 = vmatmul.mubr.f32.gmra.mrb[0].mxu0 %v592
        %v718 = vpop.f32.mrb[0].mxu0
        %v719 = vadd.f32 0.0, %v718
        %v720 = vpop.f32.mrb[0].mxu0
        %721 = vmatprep.mubr.f32.mxu0 0.0
        %722 = vmatmul.mubr.f32.gmra.mrb[0].mxu0 %v593
        %v723 = vpop.f32.mrb[0].mxu0
        %v724 = vadd.f32 0.0, %v723
        %v725 = vpop.f32.mrb[0].mxu0
        %726 = vmatprep.mubr.f32.mxu0 0.0
        %727 = vmatmul.mubr.f32.gmra.mrb[0].mxu0 %v594
        %v728 = vpop.f32.mrb[0].mxu0
        %v729 = vadd.f32 0.0, %v728
        %v730 = vpop.f32.mrb[0].mxu0
        %731 = vmatprep.mubr.f32.mxu0 0.0
        %732 = vmatmul.mubr.f32.gmra.mrb[0].mxu0 %v595
        %v733 = vpop.f32.mrb[0].mxu0
        %v734 = vadd.f32 0.0, %v733
        %v735 = vpop.f32.mrb[0].mxu0
        %736 = vmatprep.mubr.f32.mxu0 0.0
        %737 = vmatmul.mubr.f32.gmra.mrb[0].mxu0 %v596
        %v738 = vpop.f32.mrb[0].mxu0
        %v739 = vadd.f32 0.0, %v738
        %v740 = vpop.f32.mrb[0].mxu0
        %741 = vmatprep.mubr.f32.mxu0 0.0
        %742 = vmatmul.mubr.f32.gmra.mrb[0].mxu0 %v597
        %v743 = vpop.f32.mrb[0].mxu0
        %v744 = vadd.f32 0.0, %v743
        %v745 = vpop.f32.mrb[0].mxu0
        %746 = vmatprep.mubr.f32.mxu0 0.0
        %747 = vmatmul.mubr.f32.gmra.mrb[0].mxu0 %v598
        %v748 = vpop.f32.mrb[0].mxu0
        %v749 = vadd.f32 0.0, %v748
        %v750 = vpop.f32.mrb[0].mxu0
        %751 = vmatprep.mubr.f32.mxu0 0.0
        %752 = vmatmul.mubr.f32.gmra.mrb[0].mxu0 %v599
        %v753 = vpop.f32.mrb[0].mxu0
        %v754 = vadd.f32 0.0, %v753
        %v755 = vpop.f32.mrb[0].mxu0
        %756 = vmatprep.mubr.f32.mxu0 0.0
        %757 = vmatmul.mubr.f32.gmra.mrb[0].mxu0 %v600
        %v758 = vpop.f32.mrb[0].mxu0
        %v759 = vadd.f32 0.0, %v758
        %v760 = vpop.f32.mrb[0].mxu0
        %761 = vmatprep.mubr.f32.mxu0 0.0
        %762 = vmatmul.mubr.f32.gmra.mrb[0].mxu0 %v601
        %v763 = vpop.f32.mrb[0].mxu0
        %v764 = vadd.f32 0.0, %v763
        %v765 = vpop.f32.mrb[0].mxu0
        %766 = vmatprep.mubr.f32.mxu0 0.0
        %767 = vmatmul.mubr.f32.gmra.mrb[0].mxu0 %v602
        %v768 = vpop.f32.mrb[0].mxu0
        %v769 = vadd.f32 0.0, %v768
        %v770 = vpop.f32.mrb[0].mxu0
        %771 = vmatprep.mubr.f32.mxu0 0.0
        %772 = vmatmul.mubr.f32.gmra.mrb[0].mxu0 %v603
        %v773 = vpop.f32.mrb[0].mxu0
        %v774 = vadd.f32 0.0, %v773
        %v775 = vpop.f32.mrb[0].mxu0
        %776 = vmatprep.mubr.f32.mxu0 0.0
        %777 = vmatmul.mubr.f32.gmra.mrb[0].mxu0 %v604
        %v778 = vpop.f32.mrb[0].mxu0
        %v779 = vadd.f32 0.0, %v778
        %v780 = vpop.f32.mrb[0].mxu0
        %781 = vmatprep.mubr.f32.mxu0 0.0
        %782 = vmatmul.mubr.f32.gmra.mrb[0].mxu0 %v605
        %v783 = vpop.f32.mrb[0].mxu0
        %v784 = vadd.f32 0.0, %v783
        %v785 = vpop.f32.mrb[0].mxu0
        %786 = vmatprep.mubr.f32.mxu0 0.0
        %787 = vmatmul.mubr.f32.gmra.mrb[0].mxu0 %v606
        %v788 = vpop.f32.mrb[0].mxu0
        %v789 = vadd.f32 0.0, %v788
        %v790 = vpop.f32.mrb[0].mxu0
        %791 = vmatprep.mubr.f32.mxu0 0.0
        %792 = vmatmul.mubr.f32.gmra.mrb[0].mxu0 %v607
        %v793 = vpop.f32.mrb[0].mxu0
        %v794 = vadd.f32 0.0, %v793
        %v795 = vpop.f32.mrb[0].mxu0
        %796 = vmatprep.mubr.f32.mxu0 0.0
        %797 = vmatmul.mubr.f32.gmra.mrb[0].mxu0 %v608
        %v798 = vpop.f32.mrb[0].mxu0
        %v799 = vadd.f32 0.0, %v798
        %v800 = vpop.f32.mrb[0].mxu0
        %801 = vmatprep.mubr.f32.mxu0 0.0
        %802 = vmatmul.mubr.f32.gmra.mrb[0].mxu0 %v609
        %v803 = vpop.f32.mrb[0].mxu0
        %v804 = vadd.f32 0.0, %v803
        %v805 = vpop.f32.mrb[0].mxu0
        %806 = vmatprep.mubr.f32.mxu0 0.0
        %807 = vmatmul.mubr.f32.gmra.mrb[0].mxu0 %v610
        %v808 = vpop.f32.mrb[0].mxu0
        %v809 = vadd.f32 0.0, %v808
        %v810 = vpop.f32.mrb[0].mxu0
        %811 = vmatprep.mubr.f32.mxu0 0.0
        %812 = vmatmul.mubr.f32.gmra.mrb[0].mxu0 %v611
        %v813 = vpop.f32.mrb[0].mxu0
        %v814 = vadd.f32 0.0, %v813
        %v815 = vpop.f32.mrb[0].mxu0
        %816 = vmatprep.mubr.f32.mxu0 0.0
        %817 = vmatmul.mubr.f32.gmra.mrb[0].mxu0 %v612
        %v818 = vpop.f32.mrb[0].mxu0
        %v819 = vadd.f32 0.0, %v818
        %v820 = vpop.f32.mrb[0].mxu0
        %821 = vmatprep.mubr.f32.mxu0 0.0
        %822 = vmatmul.mubr.f32.gmra.mrb[0].mxu0 %v613
        %v823 = vpop.f32.mrb[0].mxu0
        %v824 = vadd.f32 0.0, %v823
        %v825 = vpop.f32.mrb[0].mxu0
        %826 = vmatprep.mubr.f32.mxu0 0.0
        %827 = vmatmul.mubr.f32.gmra.mrb[0].mxu0 %v614
        %v828 = vpop.f32.mrb[0].mxu0
        %v829 = vadd.f32 0.0, %v828
        %v830 = vpop.f32.mrb[0].mxu0
        %831 = vmatprep.mubr.f32.mxu0 0.0
        %832 = vmatmul.mubr.f32.gmra.mrb[0].mxu0 %v615
        %v833 = vpop.f32.mrb[0].mxu0
        %v834 = vadd.f32 0.0, %v833
        %v835 = vpop.f32.mrb[0].mxu0
        %836 = vmatprep.mubr.f32.mxu0 0.0
        %837 = vmatmul.mubr.f32.gmra.mrb[0].mxu0 %v616
        %v838 = vpop.f32.mrb[0].mxu0
        %v839 = vadd.f32 0.0, %v838
        %v840 = vpop.f32.mrb[0].mxu0
        %841 = vmatprep.mubr.f32.mxu0 0.0
        %842 = vmatmul.mubr.f32.gmra.mrb[0].mxu0 %v617
        %v843 = vpop.f32.mrb[0].mxu0
        %v844 = vadd.f32 0.0, %v843
        %v845 = vpop.f32.mrb[0].mxu0
        %846 = vmatprep.mubr.f32.mxu0 0.0
        %847 = vmatmul.mubr.f32.gmra.mrb[0].mxu0 %v618
        %v848 = vpop.f32.mrb[0].mxu0
        %v849 = vadd.f32 0.0, %v848
        %v850 = vpop.f32.mrb[0].mxu0
        %851 = vmatprep.mubr.f32.mxu0 0.0
        %852 = vmatmul.mubr.f32.gmra.mrb[0].mxu0 %v619
        %v853 = vpop.f32.mrb[0].mxu0
        %v854 = vadd.f32 0.0, %v853
        %v855 = vpop.f32.mrb[0].mxu0
        %856 = vmatprep.mubr.f32.mxu0 0.0
        %857 = vmatmul.mubr.f32.gmra.mrb[0].mxu0 %v620
        %v858 = vpop.f32.mrb[0].mxu0
        %v859 = vadd.f32 0.0, %v858
        %v860 = vpop.f32.mrb[0].mxu0
        %861 = vdwg.mxu0
        %v862 = vadd.f32 %v585, %v704
        %v863 = vadd.f32 %v585, %v709
        %v864 = vadd.f32 %v585, %v714
        %v865 = vadd.f32 %v585, %v719
        %v866 = vadd.f32 %v585, %v724
        %v867 = vadd.f32 %v585, %v729
        %v868 = vadd.f32 %v585, %v734
        %v869 = vadd.f32 %v585, %v739
        %v870 = vadd.f32 %v585, %v744
        %v871 = vadd.f32 %v585, %v749
        %v872 = vadd.f32 %v585, %v754
        %v873 = vadd.f32 %v585, %v759
        %v874 = vadd.f32 %v585, %v764
        %v875 = vadd.f32 %v585, %v769
        %v876 = vadd.f32 %v585, %v774
        %v877 = vadd.f32 %v585, %v779
        %v878 = vadd.f32 %v585, %v784
        %v879 = vadd.f32 %v585, %v789
        %v880 = vadd.f32 %v585, %v794
        %v881 = vadd.f32 %v585, %v799
        %v882 = vadd.f32 %v585, %v804
        %v883 = vadd.f32 %v585, %v809
        %v884 = vadd.f32 %v585, %v814
        %v885 = vadd.f32 %v585, %v819
        %v886 = vadd.f32 %v585, %v824
        %v887 = vadd.f32 %v585, %v829
        %v888 = vadd.f32 %v585, %v834
        %v889 = vadd.f32 %v585, %v839
        %v890 = vadd.f32 %v585, %v844
        %v891 = vadd.f32 %v585, %v849
        %v892 = vadd.f32 %v585, %v854
        %v893 = vadd.f32 %v585, %v859
        %v894 = vld [vmem:[%s588 + $0x2] sm:$0xff]
        %v895 = vld [vmem:[%s588 + $0xa] sm:$0xff]
        %v896 = vld [vmem:[%s588 + $0x1a] sm:$0xff]
        %v897 = vld [vmem:[%s588 + $0x22] sm:$0xff]
        %v898 = vld [vmem:[%s588 + $0x32] sm:$0xff]
        %v899 = vld [vmem:[%s588 + $0x3a] sm:$0xff]
        %v900 = vld [vmem:[%s588 + $0x4a] sm:$0xff]
        %v901 = vld [vmem:[%s588 + $0x52] sm:$0xff]
        %v902 = vld [vmem:[%s588 + $0x62] sm:$0xff]
        %v903 = vld [vmem:[%s588 + $0x6a] sm:$0xff]
        %v904 = vld [vmem:[%s588 + $0x7a] sm:$0xff]
        %v905 = vld [vmem:[%s588 + $0x82] sm:$0xff]
        %v906 = vld [vmem:[%s588 + $0x92] sm:$0xff]
        %v907 = vld [vmem:[%s588 + $0x9a] sm:$0xff]
        %v908 = vld [vmem:[%s588 + $0xaa] sm:$0xff]
        %v909 = vld [vmem:[%s588 + $0xb2] sm:$0xff]
        %v910 = vld [vmem:[%s588 + $0xc2] sm:$0xff]
        %v911 = vld [vmem:[%s588 + $0xca] sm:$0xff]
        %v912 = vld [vmem:[%s588 + $0xda] sm:$0xff]
        %v913 = vld [vmem:[%s588 + $0xe2] sm:$0xff]
        %v914 = vld [vmem:[%s588 + $0xf2] sm:$0xff]
        %v915 = vld [vmem:[%s588 + $0xfa] sm:$0xff]
        %v916 = vld [vmem:[%s588 + $0x10a] sm:$0xff]
        %v917 = vld [vmem:[%s588 + $0x112] sm:$0xff]
        %v918 = vld [vmem:[%s588 + $0x122] sm:$0xff]
        %v919 = vld [vmem:[%s588 + $0x12a] sm:$0xff]
        %v920 = vld [vmem:[%s588 + $0x13a] sm:$0xff]
        %v921 = vld [vmem:[%s588 + $0x142] sm:$0xff]
        %v922 = vld [vmem:[%s588 + $0x152] sm:$0xff]
        %v923 = vld [vmem:[%s588 + $0x15a] sm:$0xff]
        %v924 = vld [vmem:[%s588 + $0x16a] sm:$0xff]
        %v925 = vld [vmem:[%s588 + $0x172] sm:$0xff]
        %s926 = scalar_lea.vmem %s1, 128
        %v927 = vld [vmem:[%s926] sm:$0xff]
        %v928 = vld [vmem:[%s926 + $0x8] sm:$0xff]
        %v929 = vld [vmem:[%s926 + $0x10] sm:$0xff]
        %v930 = vld [vmem:[%s926 + $0x18] sm:$0xff]
        %v931 = vld [vmem:[%s926 + $0x20] sm:$0xff]
        %v932 = vld [vmem:[%s926 + $0x28] sm:$0xff]
        %v933 = vld [vmem:[%s926 + $0x30] sm:$0xff]
        %v934 = vld [vmem:[%s926 + $0x38] sm:$0xff]
        %v935 = vld [vmem:[%s926 + $0x40] sm:$0xff]
        %v936 = vld [vmem:[%s926 + $0x48] sm:$0xff]
        %v937 = vld [vmem:[%s926 + $0x50] sm:$0xff]
        %v938 = vld [vmem:[%s926 + $0x58] sm:$0xff]
        %v939 = vld [vmem:[%s926 + $0x60] sm:$0xff]
        %v940 = vld [vmem:[%s926 + $0x68] sm:$0xff]
        %v941 = vld [vmem:[%s926 + $0x70] sm:$0xff]
        %v942 = vld [vmem:[%s926 + $0x78] sm:$0xff]
        %943 = vmatprep.subr.mxu0 0.0
        %944 = vmatpush1.msra.mxu0 %v927
        %945 = vmatprep.subr.mxu0 0.0
        %946 = vmatpush1.msra.mxu0 %v928
        %947 = vmatprep.subr.mxu0 0.0
        %948 = vmatpush1.msra.mxu0 %v929
        %949 = vmatprep.subr.mxu0 0.0
        %950 = vmatpush1.msra.mxu0 %v930
        %951 = vmatprep.subr.mxu0 0.0
        %952 = vmatpush1.msra.mxu0 %v931
        %953 = vmatprep.subr.mxu0 0.0
        %954 = vmatpush1.msra.mxu0 %v932
        %955 = vmatprep.subr.mxu0 0.0
        %956 = vmatpush1.msra.mxu0 %v933
        %957 = vmatprep.subr.mxu0 0.0
        %958 = vmatpush1.msra.mxu0 %v934
        %959 = vmatprep.subr.mxu0 0.0
        %960 = vmatpush1.msra.mxu0 %v935
        %961 = vmatprep.subr.mxu0 0.0
        %962 = vmatpush1.msra.mxu0 %v936
        %963 = vmatprep.subr.mxu0 0.0
        %964 = vmatpush1.msra.mxu0 %v937
        %965 = vmatprep.subr.mxu0 0.0
        %966 = vmatpush1.msra.mxu0 %v938
        %967 = vmatprep.subr.mxu0 0.0
        %968 = vmatpush1.msra.mxu0 %v939
        %969 = vmatprep.subr.mxu0 0.0
        %970 = vmatpush1.msra.mxu0 %v940
        %971 = vmatprep.subr.mxu0 0.0
        %972 = vmatpush1.msra.mxu0 %v941
        %973 = vmatprep.subr.mxu0 0.0
        %974 = vmatpush1.msra.mxu0 %v942
        %975 = vmatprep.subr.mxu0 0.0
        %976 = vmatpush1.msra.mxu0 0.0
        %977 = vmatprep.subr.mxu0 0.0
        %978 = vmatpush1.msra.mxu0 0.0
        %979 = vmatprep.subr.mxu0 0.0
        %980 = vmatpush1.msra.mxu0 0.0
        %981 = vmatprep.subr.mxu0 0.0
        %982 = vmatpush1.msra.mxu0 0.0
        %983 = vmatprep.subr.mxu0 0.0
        %984 = vmatpush1.msra.mxu0 0.0
        %985 = vmatprep.subr.mxu0 0.0
        %986 = vmatpush1.msra.mxu0 0.0
        %987 = vmatprep.subr.mxu0 0.0
        %988 = vmatpush1.msra.mxu0 0.0
        %989 = vmatprep.subr.mxu0 0.0
        %990 = vmatpush1.msra.mxu0 0.0
        %991 = vmatprep.subr.mxu0 0.0
        %992 = vmatpush1.msra.mxu0 0.0
        %993 = vmatprep.subr.mxu0 0.0
        %994 = vmatpush1.msra.mxu0 0.0
        %995 = vmatprep.subr.mxu0 0.0
        %996 = vmatpush1.msra.mxu0 0.0
        %997 = vmatprep.subr.mxu0 0.0
        %998 = vmatpush1.msra.mxu0 0.0
        %999 = vmatprep.subr.mxu0 0.0
        %1000 = vmatpush1.msra.mxu0 0.0
        %1001 = vmatprep.subr.mxu0 0.0
        %1002 = vmatpush1.msra.mxu0 0.0
        %1003 = vmatprep.subr.mxu0 0.0
        %1004 = vmatpush1.msra.mxu0 0.0
        %1005 = vmatprep.subr.mxu0 0.0
        %1006 = vmatpush1.msra.mxu0 0.0
        %1007 = vmatprep.mubr.f32.mxu0 0.0
        %1008 = vmatmul.mubr.f32.gmra.mrb[0].mxu0 %v894
        %v1009 = vpop.f32.mrb[0].mxu0
        %v1010 = vadd.f32 0.0, %v1009
        %v1011 = vpop.f32.mrb[0].mxu0
        %1012 = vmatprep.mubr.f32.mxu0 0.0
        %1013 = vmatmul.mubr.f32.gmra.mrb[0].mxu0 %v895
        %v1014 = vpop.f32.mrb[0].mxu0
        %v1015 = vadd.f32 0.0, %v1014
        %v1016 = vpop.f32.mrb[0].mxu0
        %1017 = vmatprep.mubr.f32.mxu0 0.0
        %1018 = vmatmul.mubr.f32.gmra.mrb[0].mxu0 %v896
        %v1019 = vpop.f32.mrb[0].mxu0
        %v1020 = vadd.f32 0.0, %v1019
        %v1021 = vpop.f32.mrb[0].mxu0
        %1022 = vmatprep.mubr.f32.mxu0 0.0
        %1023 = vmatmul.mubr.f32.gmra.mrb[0].mxu0 %v897
        %v1024 = vpop.f32.mrb[0].mxu0
        %v1025 = vadd.f32 0.0, %v1024
        %v1026 = vpop.f32.mrb[0].mxu0
        %1027 = vmatprep.mubr.f32.mxu0 0.0
        %1028 = vmatmul.mubr.f32.gmra.mrb[0].mxu0 %v898
        %v1029 = vpop.f32.mrb[0].mxu0
        %v1030 = vadd.f32 0.0, %v1029
        %v1031 = vpop.f32.mrb[0].mxu0
        %1032 = vmatprep.mubr.f32.mxu0 0.0
        %1033 = vmatmul.mubr.f32.gmra.mrb[0].mxu0 %v899
        %v1034 = vpop.f32.mrb[0].mxu0
        %v1035 = vadd.f32 0.0, %v1034
        %v1036 = vpop.f32.mrb[0].mxu0
        %1037 = vmatprep.mubr.f32.mxu0 0.0
        %1038 = vmatmul.mubr.f32.gmra.mrb[0].mxu0 %v900
        %v1039 = vpop.f32.mrb[0].mxu0
        %v1040 = vadd.f32 0.0, %v1039
        %v1041 = vpop.f32.mrb[0].mxu0
        %1042 = vmatprep.mubr.f32.mxu0 0.0
        %1043 = vmatmul.mubr.f32.gmra.mrb[0].mxu0 %v901
        %v1044 = vpop.f32.mrb[0].mxu0
        %v1045 = vadd.f32 0.0, %v1044
        %v1046 = vpop.f32.mrb[0].mxu0
        %1047 = vmatprep.mubr.f32.mxu0 0.0
        %1048 = vmatmul.mubr.f32.gmra.mrb[0].mxu0 %v902
        %v1049 = vpop.f32.mrb[0].mxu0
        %v1050 = vadd.f32 0.0, %v1049
        %v1051 = vpop.f32.mrb[0].mxu0
        %1052 = vmatprep.mubr.f32.mxu0 0.0
        %1053 = vmatmul.mubr.f32.gmra.mrb[0].mxu0 %v903
        %v1054 = vpop.f32.mrb[0].mxu0
        %v1055 = vadd.f32 0.0, %v1054
        %v1056 = vpop.f32.mrb[0].mxu0
        %1057 = vmatprep.mubr.f32.mxu0 0.0
        %1058 = vmatmul.mubr.f32.gmra.mrb[0].mxu0 %v904
        %v1059 = vpop.f32.mrb[0].mxu0
        %v1060 = vadd.f32 0.0, %v1059
        %v1061 = vpop.f32.mrb[0].mxu0
        %1062 = vmatprep.mubr.f32.mxu0 0.0
        %1063 = vmatmul.mubr.f32.gmra.mrb[0].mxu0 %v905
        %v1064 = vpop.f32.mrb[0].mxu0
        %v1065 = vadd.f32 0.0, %v1064
        %v1066 = vpop.f32.mrb[0].mxu0
        %1067 = vmatprep.mubr.f32.mxu0 0.0
        %1068 = vmatmul.mubr.f32.gmra.mrb[0].mxu0 %v906
        %v1069 = vpop.f32.mrb[0].mxu0
        %v1070 = vadd.f32 0.0, %v1069
        %v1071 = vpop.f32.mrb[0].mxu0
        %1072 = vmatprep.mubr.f32.mxu0 0.0
        %1073 = vmatmul.mubr.f32.gmra.mrb[0].mxu0 %v907
        %v1074 = vpop.f32.mrb[0].mxu0
        %v1075 = vadd.f32 0.0, %v1074
        %v1076 = vpop.f32.mrb[0].mxu0
        %1077 = vmatprep.mubr.f32.mxu0 0.0
        %1078 = vmatmul.mubr.f32.gmra.mrb[0].mxu0 %v908
        %v1079 = vpop.f32.mrb[0].mxu0
        %v1080 = vadd.f32 0.0, %v1079
        %v1081 = vpop.f32.mrb[0].mxu0
        %1082 = vmatprep.mubr.f32.mxu0 0.0
        %1083 = vmatmul.mubr.f32.gmra.mrb[0].mxu0 %v909
        %v1084 = vpop.f32.mrb[0].mxu0
        %v1085 = vadd.f32 0.0, %v1084
        %v1086 = vpop.f32.mrb[0].mxu0
        %1087 = vmatprep.mubr.f32.mxu0 0.0
        %1088 = vmatmul.mubr.f32.gmra.mrb[0].mxu0 %v910
        %v1089 = vpop.f32.mrb[0].mxu0
        %v1090 = vadd.f32 0.0, %v1089
        %v1091 = vpop.f32.mrb[0].mxu0
        %1092 = vmatprep.mubr.f32.mxu0 0.0
        %1093 = vmatmul.mubr.f32.gmra.mrb[0].mxu0 %v911
        %v1094 = vpop.f32.mrb[0].mxu0
        %v1095 = vadd.f32 0.0, %v1094
        %v1096 = vpop.f32.mrb[0].mxu0
        %1097 = vmatprep.mubr.f32.mxu0 0.0
        %1098 = vmatmul.mubr.f32.gmra.mrb[0].mxu0 %v912
        %v1099 = vpop.f32.mrb[0].mxu0
        %v1100 = vadd.f32 0.0, %v1099
        %v1101 = vpop.f32.mrb[0].mxu0
        %1102 = vmatprep.mubr.f32.mxu0 0.0
        %1103 = vmatmul.mubr.f32.gmra.mrb[0].mxu0 %v913
        %v1104 = vpop.f32.mrb[0].mxu0
        %v1105 = vadd.f32 0.0, %v1104
        %v1106 = vpop.f32.mrb[0].mxu0
        %1107 = vmatprep.mubr.f32.mxu0 0.0
        %1108 = vmatmul.mubr.f32.gmra.mrb[0].mxu0 %v914
        %v1109 = vpop.f32.mrb[0].mxu0
        %v1110 = vadd.f32 0.0, %v1109
        %v1111 = vpop.f32.mrb[0].mxu0
        %1112 = vmatprep.mubr.f32.mxu0 0.0
        %1113 = vmatmul.mubr.f32.gmra.mrb[0].mxu0 %v915
        %v1114 = vpop.f32.mrb[0].mxu0
        %v1115 = vadd.f32 0.0, %v1114
        %v1116 = vpop.f32.mrb[0].mxu0
        %1117 = vmatprep.mubr.f32.mxu0 0.0
        %1118 = vmatmul.mubr.f32.gmra.mrb[0].mxu0 %v916
        %v1119 = vpop.f32.mrb[0].mxu0
        %v1120 = vadd.f32 0.0, %v1119
        %v1121 = vpop.f32.mrb[0].mxu0
        %1122 = vmatprep.mubr.f32.mxu0 0.0
        %1123 = vmatmul.mubr.f32.gmra.mrb[0].mxu0 %v917
        %v1124 = vpop.f32.mrb[0].mxu0
        %v1125 = vadd.f32 0.0, %v1124
        %v1126 = vpop.f32.mrb[0].mxu0
        %1127 = vmatprep.mubr.f32.mxu0 0.0
        %1128 = vmatmul.mubr.f32.gmra.mrb[0].mxu0 %v918
        %v1129 = vpop.f32.mrb[0].mxu0
        %v1130 = vadd.f32 0.0, %v1129
        %v1131 = vpop.f32.mrb[0].mxu0
        %1132 = vmatprep.mubr.f32.mxu0 0.0
        %1133 = vmatmul.mubr.f32.gmra.mrb[0].mxu0 %v919
        %v1134 = vpop.f32.mrb[0].mxu0
        %v1135 = vadd.f32 0.0, %v1134
        %v1136 = vpop.f32.mrb[0].mxu0
        %1137 = vmatprep.mubr.f32.mxu0 0.0
        %1138 = vmatmul.mubr.f32.gmra.mrb[0].mxu0 %v920
        %v1139 = vpop.f32.mrb[0].mxu0
        %v1140 = vadd.f32 0.0, %v1139
        %v1141 = vpop.f32.mrb[0].mxu0
        %1142 = vmatprep.mubr.f32.mxu0 0.0
        %1143 = vmatmul.mubr.f32.gmra.mrb[0].mxu0 %v921
        %v1144 = vpop.f32.mrb[0].mxu0
        %v1145 = vadd.f32 0.0, %v1144
        %v1146 = vpop.f32.mrb[0].mxu0
        %1147 = vmatprep.mubr.f32.mxu0 0.0
        %1148 = vmatmul.mubr.f32.gmra.mrb[0].mxu0 %v922
        %v1149 = vpop.f32.mrb[0].mxu0
        %v1150 = vadd.f32 0.0, %v1149
        %v1151 = vpop.f32.mrb[0].mxu0
        %1152 = vmatprep.mubr.f32.mxu0 0.0
        %1153 = vmatmul.mubr.f32.gmra.mrb[0].mxu0 %v923
        %v1154 = vpop.f32.mrb[0].mxu0
        %v1155 = vadd.f32 0.0, %v1154
        %v1156 = vpop.f32.mrb[0].mxu0
        %1157 = vmatprep.mubr.f32.mxu0 0.0
        %1158 = vmatmul.mubr.f32.gmra.mrb[0].mxu0 %v924
        %v1159 = vpop.f32.mrb[0].mxu0
        %v1160 = vadd.f32 0.0, %v1159
        %v1161 = vpop.f32.mrb[0].mxu0
        %1162 = vmatprep.mubr.f32.mxu0 0.0
        %1163 = vmatmul.mubr.f32.gmra.mrb[0].mxu0 %v925
        %v1164 = vpop.f32.mrb[0].mxu0
        %v1165 = vadd.f32 0.0, %v1164
        %v1166 = vpop.f32.mrb[0].mxu0
        %1167 = vdwg.mxu0
        %v1168 = vadd.f32 %v862, %v1010
        %v1169 = vadd.f32 %v863, %v1015
        %v1170 = vadd.f32 %v864, %v1020
        %v1171 = vadd.f32 %v865, %v1025
        %v1172 = vadd.f32 %v866, %v1030
        %v1173 = vadd.f32 %v867, %v1035
        %v1174 = vadd.f32 %v868, %v1040
        %v1175 = vadd.f32 %v869, %v1045
        %v1176 = vadd.f32 %v870, %v1050
        %v1177 = vadd.f32 %v871, %v1055
        %v1178 = vadd.f32 %v872, %v1060
        %v1179 = vadd.f32 %v873, %v1065
        %v1180 = vadd.f32 %v874, %v1070
        %v1181 = vadd.f32 %v875, %v1075
        %v1182 = vadd.f32 %v876, %v1080
        %v1183 = vadd.f32 %v877, %v1085
        %v1184 = vadd.f32 %v878, %v1090
        %v1185 = vadd.f32 %v879, %v1095
        %v1186 = vadd.f32 %v880, %v1100
        %v1187 = vadd.f32 %v881, %v1105
        %v1188 = vadd.f32 %v882, %v1110
        %v1189 = vadd.f32 %v883, %v1115
        %v1190 = vadd.f32 %v884, %v1120
        %v1191 = vadd.f32 %v885, %v1125
        %v1192 = vadd.f32 %v886, %v1130
        %v1193 = vadd.f32 %v887, %v1135
        %v1194 = vadd.f32 %v888, %v1140
        %v1195 = vadd.f32 %v889, %v1145
        %v1196 = vadd.f32 %v890, %v1150
        %v1197 = vadd.f32 %v891, %v1155
        %v1198 = vadd.f32 %v892, %v1160
        %v1199 = vadd.f32 %v893, %v1165
        %v1200 = vld [vmem:[%s588 + $0x4] sm:$0xff]
        %v1201 = vld [vmem:[%s588 + $0xc] sm:$0xff]
        %v1202 = vld [vmem:[%s588 + $0x1c] sm:$0xff]
        %v1203 = vld [vmem:[%s588 + $0x24] sm:$0xff]
        %v1204 = vld [vmem:[%s588 + $0x34] sm:$0xff]
        %v1205 = vld [vmem:[%s588 + $0x3c] sm:$0xff]
        %v1206 = vld [vmem:[%s588 + $0x4c] sm:$0xff]
        %v1207 = vld [vmem:[%s588 + $0x54] sm:$0xff]
        %v1208 = vld [vmem:[%s588 + $0x64] sm:$0xff]
        %v1209 = vld [vmem:[%s588 + $0x6c] sm:$0xff]
        %v1210 = vld [vmem:[%s588 + $0x7c] sm:$0xff]
        %v1211 = vld [vmem:[%s588 + $0x84] sm:$0xff]
        %v1212 = vld [vmem:[%s588 + $0x94] sm:$0xff]
        %v1213 = vld [vmem:[%s588 + $0x9c] sm:$0xff]
        %v1214 = vld [vmem:[%s588 + $0xac] sm:$0xff]
        %v1215 = vld [vmem:[%s588 + $0xb4] sm:$0xff]
        %v1216 = vld [vmem:[%s588 + $0xc4] sm:$0xff]
        %v1217 = vld [vmem:[%s588 + $0xcc] sm:$0xff]
        %v1218 = vld [vmem:[%s588 + $0xdc] sm:$0xff]
        %v1219 = vld [vmem:[%s588 + $0xe4] sm:$0xff]
        %v1220 = vld [vmem:[%s588 + $0xf4] sm:$0xff]
        %v1221 = vld [vmem:[%s588 + $0xfc] sm:$0xff]
        %v1222 = vld [vmem:[%s588 + $0x10c] sm:$0xff]
        %v1223 = vld [vmem:[%s588 + $0x114] sm:$0xff]
        %v1224 = vld [vmem:[%s588 + $0x124] sm:$0xff]
        %v1225 = vld [vmem:[%s588 + $0x12c] sm:$0xff]
        %v1226 = vld [vmem:[%s588 + $0x13c] sm:$0xff]
        %v1227 = vld [vmem:[%s588 + $0x144] sm:$0xff]
        %v1228 = vld [vmem:[%s588 + $0x154] sm:$0xff]
        %v1229 = vld [vmem:[%s588 + $0x15c] sm:$0xff]
        %v1230 = vld [vmem:[%s588 + $0x16c] sm:$0xff]
        %v1231 = vld [vmem:[%s588 + $0x174] sm:$0xff]
        %s1232 = scalar_lea.vmem %s1, 256
        %v1233 = vld [vmem:[%s1232] sm:$0xff]
        %v1234 = vld [vmem:[%s1232 + $0x8] sm:$0xff]
        %v1235 = vld [vmem:[%s1232 + $0x10] sm:$0xff]
        %v1236 = vld [vmem:[%s1232 + $0x18] sm:$0xff]
        %v1237 = vld [vmem:[%s1232 + $0x20] sm:$0xff]
        %v1238 = vld [vmem:[%s1232 + $0x28] sm:$0xff]
        %v1239 = vld [vmem:[%s1232 + $0x30] sm:$0xff]
        %v1240 = vld [vmem:[%s1232 + $0x38] sm:$0xff]
        %v1241 = vld [vmem:[%s1232 + $0x40] sm:$0xff]
        %v1242 = vld [vmem:[%s1232 + $0x48] sm:$0xff]
        %v1243 = vld [vmem:[%s1232 + $0x50] sm:$0xff]
        %v1244 = vld [vmem:[%s1232 + $0x58] sm:$0xff]
        %v1245 = vld [vmem:[%s1232 + $0x60] sm:$0xff]
        %v1246 = vld [vmem:[%s1232 + $0x68] sm:$0xff]
        %v1247 = vld [vmem:[%s1232 + $0x70] sm:$0xff]
        %v1248 = vld [vmem:[%s1232 + $0x78] sm:$0xff]
        %1249 = vmatprep.subr.mxu0 0.0
        %1250 = vmatpush1.msra.mxu0 %v1233
        %1251 = vmatprep.subr.mxu0 0.0
        %1252 = vmatpush1.msra.mxu0 %v1234
        %1253 = vmatprep.subr.mxu0 0.0
        %1254 = vmatpush1.msra.mxu0 %v1235
        %1255 = vmatprep.subr.mxu0 0.0
        %1256 = vmatpush1.msra.mxu0 %v1236
        %1257 = vmatprep.subr.mxu0 0.0
        %1258 = vmatpush1.msra.mxu0 %v1237
        %1259 = vmatprep.subr.mxu0 0.0
        %1260 = vmatpush1.msra.mxu0 %v1238
        %1261 = vmatprep.subr.mxu0 0.0
        %1262 = vmatpush1.msra.mxu0 %v1239
        %1263 = vmatprep.subr.mxu0 0.0
        %1264 = vmatpush1.msra.mxu0 %v1240
        %1265 = vmatprep.subr.mxu0 0.0
        %1266 = vmatpush1.msra.mxu0 %v1241
        %1267 = vmatprep.subr.mxu0 0.0
        %1268 = vmatpush1.msra.mxu0 %v1242
        %1269 = vmatprep.subr.mxu0 0.0
        %1270 = vmatpush1.msra.mxu0 %v1243
        %1271 = vmatprep.subr.mxu0 0.0
        %1272 = vmatpush1.msra.mxu0 %v1244
        %1273 = vmatprep.subr.mxu0 0.0
        %1274 = vmatpush1.msra.mxu0 %v1245
        %1275 = vmatprep.subr.mxu0 0.0
        %1276 = vmatpush1.msra.mxu0 %v1246
        %1277 = vmatprep.subr.mxu0 0.0
        %1278 = vmatpush1.msra.mxu0 %v1247
        %1279 = vmatprep.subr.mxu0 0.0
        %1280 = vmatpush1.msra.mxu0 %v1248
        %1281 = vmatprep.subr.mxu0 0.0
        %1282 = vmatpush1.msra.mxu0 0.0
        %1283 = vmatprep.subr.mxu0 0.0
        %1284 = vmatpush1.msra.mxu0 0.0
        %1285 = vmatprep.subr.mxu0 0.0
        %1286 = vmatpush1.msra.mxu0 0.0
        %1287 = vmatprep.subr.mxu0 0.0
        %1288 = vmatpush1.msra.mxu0 0.0
        %1289 = vmatprep.subr.mxu0 0.0
        %1290 = vmatpush1.msra.mxu0 0.0
        %1291 = vmatprep.subr.mxu0 0.0
        %1292 = vmatpush1.msra.mxu0 0.0
        %1293 = vmatprep.subr.mxu0 0.0
        %1294 = vmatpush1.msra.mxu0 0.0
        %1295 = vmatprep.subr.mxu0 0.0
        %1296 = vmatpush1.msra.mxu0 0.0
        %1297 = vmatprep.subr.mxu0 0.0
        %1298 = vmatpush1.msra.mxu0 0.0
        %1299 = vmatprep.subr.mxu0 0.0
        %1300 = vmatpush1.msra.mxu0 0.0
        %1301 = vmatprep.subr.mxu0 0.0
        %1302 = vmatpush1.msra.mxu0 0.0
        %1303 = vmatprep.subr.mxu0 0.0
        %1304 = vmatpush1.msra.mxu0 0.0
        %1305 = vmatprep.subr.mxu0 0.0
        %1306 = vmatpush1.msra.mxu0 0.0
        %1307 = vmatprep.subr.mxu0 0.0
        %1308 = vmatpush1.msra.mxu0 0.0
        %1309 = vmatprep.subr.mxu0 0.0
        %1310 = vmatpush1.msra.mxu0 0.0
        %1311 = vmatprep.subr.mxu0 0.0
        %1312 = vmatpush1.msra.mxu0 0.0
        %1313 = vmatprep.mubr.f32.mxu0 0.0
        %1314 = vmatmul.mubr.f32.gmra.mrb[0].mxu0 %v1200
        %v1315 = vpop.f32.mrb[0].mxu0
        %v1316 = vadd.f32 0.0, %v1315
        %v1317 = vpop.f32.mrb[0].mxu0
        %1318 = vmatprep.mubr.f32.mxu0 0.0
        %1319 = vmatmul.mubr.f32.gmra.mrb[0].mxu0 %v1201
        %v1320 = vpop.f32.mrb[0].mxu0
        %v1321 = vadd.f32 0.0, %v1320
        %v1322 = vpop.f32.mrb[0].mxu0
        %1323 = vmatprep.mubr.f32.mxu0 0.0
        %1324 = vmatmul.mubr.f32.gmra.mrb[0].mxu0 %v1202
        %v1325 = vpop.f32.mrb[0].mxu0
        %v1326 = vadd.f32 0.0, %v1325
        %v1327 = vpop.f32.mrb[0].mxu0
        %1328 = vmatprep.mubr.f32.mxu0 0.0
        %1329 = vmatmul.mubr.f32.gmra.mrb[0].mxu0 %v1203
        %v1330 = vpop.f32.mrb[0].mxu0
        %v1331 = vadd.f32 0.0, %v1330
        %v1332 = vpop.f32.mrb[0].mxu0
        %1333 = vmatprep.mubr.f32.mxu0 0.0
        %1334 = vmatmul.mubr.f32.gmra.mrb[0].mxu0 %v1204
        %v1335 = vpop.f32.mrb[0].mxu0
        %v1336 = vadd.f32 0.0, %v1335
        %v1337 = vpop.f32.mrb[0].mxu0
        %1338 = vmatprep.mubr.f32.mxu0 0.0
        %1339 = vmatmul.mubr.f32.gmra.mrb[0].mxu0 %v1205
        %v1340 = vpop.f32.mrb[0].mxu0
        %v1341 = vadd.f32 0.0, %v1340
        %v1342 = vpop.f32.mrb[0].mxu0
        %1343 = vmatprep.mubr.f32.mxu0 0.0
        %1344 = vmatmul.mubr.f32.gmra.mrb[0].mxu0 %v1206
        %v1345 = vpop.f32.mrb[0].mxu0
        %v1346 = vadd.f32 0.0, %v1345
        %v1347 = vpop.f32.mrb[0].mxu0
        %1348 = vmatprep.mubr.f32.mxu0 0.0
        %1349 = vmatmul.mubr.f32.gmra.mrb[0].mxu0 %v1207
        %v1350 = vpop.f32.mrb[0].mxu0
        %v1351 = vadd.f32 0.0, %v1350
        %v1352 = vpop.f32.mrb[0].mxu0
        %1353 = vmatprep.mubr.f32.mxu0 0.0
        %1354 = vmatmul.mubr.f32.gmra.mrb[0].mxu0 %v1208
        %v1355 = vpop.f32.mrb[0].mxu0
        %v1356 = vadd.f32 0.0, %v1355
        %v1357 = vpop.f32.mrb[0].mxu0
        %1358 = vmatprep.mubr.f32.mxu0 0.0
        %1359 = vmatmul.mubr.f32.gmra.mrb[0].mxu0 %v1209
        %v1360 = vpop.f32.mrb[0].mxu0
        %v1361 = vadd.f32 0.0, %v1360
        %v1362 = vpop.f32.mrb[0].mxu0
        %1363 = vmatprep.mubr.f32.mxu0 0.0
        %1364 = vmatmul.mubr.f32.gmra.mrb[0].mxu0 %v1210
        %v1365 = vpop.f32.mrb[0].mxu0
        %v1366 = vadd.f32 0.0, %v1365
        %v1367 = vpop.f32.mrb[0].mxu0
        %1368 = vmatprep.mubr.f32.mxu0 0.0
        %1369 = vmatmul.mubr.f32.gmra.mrb[0].mxu0 %v1211
        %v1370 = vpop.f32.mrb[0].mxu0
        %v1371 = vadd.f32 0.0, %v1370
        %v1372 = vpop.f32.mrb[0].mxu0
        %1373 = vmatprep.mubr.f32.mxu0 0.0
        %1374 = vmatmul.mubr.f32.gmra.mrb[0].mxu0 %v1212
        %v1375 = vpop.f32.mrb[0].mxu0
        %v1376 = vadd.f32 0.0, %v1375
        %v1377 = vpop.f32.mrb[0].mxu0
        %1378 = vmatprep.mubr.f32.mxu0 0.0
        %1379 = vmatmul.mubr.f32.gmra.mrb[0].mxu0 %v1213
        %v1380 = vpop.f32.mrb[0].mxu0
        %v1381 = vadd.f32 0.0, %v1380
        %v1382 = vpop.f32.mrb[0].mxu0
        %1383 = vmatprep.mubr.f32.mxu0 0.0
        %1384 = vmatmul.mubr.f32.gmra.mrb[0].mxu0 %v1214
        %v1385 = vpop.f32.mrb[0].mxu0
        %v1386 = vadd.f32 0.0, %v1385
        %v1387 = vpop.f32.mrb[0].mxu0
        %1388 = vmatprep.mubr.f32.mxu0 0.0
        %1389 = vmatmul.mubr.f32.gmra.mrb[0].mxu0 %v1215
        %v1390 = vpop.f32.mrb[0].mxu0
        %v1391 = vadd.f32 0.0, %v1390
        %v1392 = vpop.f32.mrb[0].mxu0
        %1393 = vmatprep.mubr.f32.mxu0 0.0
        %1394 = vmatmul.mubr.f32.gmra.mrb[0].mxu0 %v1216
        %v1395 = vpop.f32.mrb[0].mxu0
        %v1396 = vadd.f32 0.0, %v1395
        %v1397 = vpop.f32.mrb[0].mxu0
        %1398 = vmatprep.mubr.f32.mxu0 0.0
        %1399 = vmatmul.mubr.f32.gmra.mrb[0].mxu0 %v1217
        %v1400 = vpop.f32.mrb[0].mxu0
        %v1401 = vadd.f32 0.0, %v1400
        %v1402 = vpop.f32.mrb[0].mxu0
        %1403 = vmatprep.mubr.f32.mxu0 0.0
        %1404 = vmatmul.mubr.f32.gmra.mrb[0].mxu0 %v1218
        %v1405 = vpop.f32.mrb[0].mxu0
        %v1406 = vadd.f32 0.0, %v1405
        %v1407 = vpop.f32.mrb[0].mxu0
        %1408 = vmatprep.mubr.f32.mxu0 0.0
        %1409 = vmatmul.mubr.f32.gmra.mrb[0].mxu0 %v1219
        %v1410 = vpop.f32.mrb[0].mxu0
        %v1411 = vadd.f32 0.0, %v1410
        %v1412 = vpop.f32.mrb[0].mxu0
        %1413 = vmatprep.mubr.f32.mxu0 0.0
        %1414 = vmatmul.mubr.f32.gmra.mrb[0].mxu0 %v1220
        %v1415 = vpop.f32.mrb[0].mxu0
        %v1416 = vadd.f32 0.0, %v1415
        %v1417 = vpop.f32.mrb[0].mxu0
        %1418 = vmatprep.mubr.f32.mxu0 0.0
        %1419 = vmatmul.mubr.f32.gmra.mrb[0].mxu0 %v1221
        %v1420 = vpop.f32.mrb[0].mxu0
        %v1421 = vadd.f32 0.0, %v1420
        %v1422 = vpop.f32.mrb[0].mxu0
        %1423 = vmatprep.mubr.f32.mxu0 0.0
        %1424 = vmatmul.mubr.f32.gmra.mrb[0].mxu0 %v1222
        %v1425 = vpop.f32.mrb[0].mxu0
        %v1426 = vadd.f32 0.0, %v1425
        %v1427 = vpop.f32.mrb[0].mxu0
        %1428 = vmatprep.mubr.f32.mxu0 0.0
        %1429 = vmatmul.mubr.f32.gmra.mrb[0].mxu0 %v1223
        %v1430 = vpop.f32.mrb[0].mxu0
        %v1431 = vadd.f32 0.0, %v1430
        %v1432 = vpop.f32.mrb[0].mxu0
        %1433 = vmatprep.mubr.f32.mxu0 0.0
        %1434 = vmatmul.mubr.f32.gmra.mrb[0].mxu0 %v1224
        %v1435 = vpop.f32.mrb[0].mxu0
        %v1436 = vadd.f32 0.0, %v1435
        %v1437 = vpop.f32.mrb[0].mxu0
        %1438 = vmatprep.mubr.f32.mxu0 0.0
        %1439 = vmatmul.mubr.f32.gmra.mrb[0].mxu0 %v1225
        %v1440 = vpop.f32.mrb[0].mxu0
        %v1441 = vadd.f32 0.0, %v1440
        %v1442 = vpop.f32.mrb[0].mxu0
        %1443 = vmatprep.mubr.f32.mxu0 0.0
        %1444 = vmatmul.mubr.f32.gmra.mrb[0].mxu0 %v1226
        %v1445 = vpop.f32.mrb[0].mxu0
        %v1446 = vadd.f32 0.0, %v1445
        %v1447 = vpop.f32.mrb[0].mxu0
        %1448 = vmatprep.mubr.f32.mxu0 0.0
        %1449 = vmatmul.mubr.f32.gmra.mrb[0].mxu0 %v1227
        %v1450 = vpop.f32.mrb[0].mxu0
        %v1451 = vadd.f32 0.0, %v1450
        %v1452 = vpop.f32.mrb[0].mxu0
        %1453 = vmatprep.mubr.f32.mxu0 0.0
        %1454 = vmatmul.mubr.f32.gmra.mrb[0].mxu0 %v1228
        %v1455 = vpop.f32.mrb[0].mxu0
        %v1456 = vadd.f32 0.0, %v1455
        %v1457 = vpop.f32.mrb[0].mxu0
        %1458 = vmatprep.mubr.f32.mxu0 0.0
        %1459 = vmatmul.mubr.f32.gmra.mrb[0].mxu0 %v1229
        %v1460 = vpop.f32.mrb[0].mxu0
        %v1461 = vadd.f32 0.0, %v1460
        %v1462 = vpop.f32.mrb[0].mxu0
        %1463 = vmatprep.mubr.f32.mxu0 0.0
        %1464 = vmatmul.mubr.f32.gmra.mrb[0].mxu0 %v1230
        %v1465 = vpop.f32.mrb[0].mxu0
        %v1466 = vadd.f32 0.0, %v1465
        %v1467 = vpop.f32.mrb[0].mxu0
        %1468 = vmatprep.mubr.f32.mxu0 0.0
        %1469 = vmatmul.mubr.f32.gmra.mrb[0].mxu0 %v1231
        %v1470 = vpop.f32.mrb[0].mxu0
        %v1471 = vadd.f32 0.0, %v1470
        %v1472 = vpop.f32.mrb[0].mxu0
        %1473 = vdwg.mxu0
        %v1474 = vadd.f32 %v1168, %v1316
        %v1475 = vadd.f32 %v1169, %v1321
        %v1476 = vadd.f32 %v1170, %v1326
        %v1477 = vadd.f32 %v1171, %v1331
        %v1478 = vadd.f32 %v1172, %v1336
        %v1479 = vadd.f32 %v1173, %v1341
        %v1480 = vadd.f32 %v1174, %v1346
        %v1481 = vadd.f32 %v1175, %v1351
        %v1482 = vadd.f32 %v1176, %v1356
        %v1483 = vadd.f32 %v1177, %v1361
        %v1484 = vadd.f32 %v1178, %v1366
        %v1485 = vadd.f32 %v1179, %v1371
        %v1486 = vadd.f32 %v1180, %v1376
        %v1487 = vadd.f32 %v1181, %v1381
        %v1488 = vadd.f32 %v1182, %v1386
        %v1489 = vadd.f32 %v1183, %v1391
        %v1490 = vadd.f32 %v1184, %v1396
        %v1491 = vadd.f32 %v1185, %v1401
        %v1492 = vadd.f32 %v1186, %v1406
        %v1493 = vadd.f32 %v1187, %v1411
        %v1494 = vadd.f32 %v1188, %v1416
        %v1495 = vadd.f32 %v1189, %v1421
        %v1496 = vadd.f32 %v1190, %v1426
        %v1497 = vadd.f32 %v1191, %v1431
        %v1498 = vadd.f32 %v1192, %v1436
        %v1499 = vadd.f32 %v1193, %v1441
        %v1500 = vadd.f32 %v1194, %v1446
        %v1501 = vadd.f32 %v1195, %v1451
        %v1502 = vadd.f32 %v1196, %v1456
        %v1503 = vadd.f32 %v1197, %v1461
        %v1504 = vadd.f32 %v1198, %v1466
        %v1505 = vadd.f32 %v1199, %v1471
        %s1506 = sadd.s32 48, %s587
        %s1507 = scalar_lea.vmem [#allocation2], %s1506
        %v1508 = vld [vmem:[%s1507] sm:$0xff]
        %v1509 = vld [vmem:[%s1507 + $0x8] sm:$0xff]
        %v1510 = vld [vmem:[%s1507 + $0x18] sm:$0xff]
        %v1511 = vld [vmem:[%s1507 + $0x20] sm:$0xff]
        %v1512 = vld [vmem:[%s1507 + $0x30] sm:$0xff]
        %v1513 = vld [vmem:[%s1507 + $0x38] sm:$0xff]
        %v1514 = vld [vmem:[%s1507 + $0x48] sm:$0xff]
        %v1515 = vld [vmem:[%s1507 + $0x50] sm:$0xff]
        %v1516 = vld [vmem:[%s1507 + $0x60] sm:$0xff]
        %v1517 = vld [vmem:[%s1507 + $0x68] sm:$0xff]
        %v1518 = vld [vmem:[%s1507 + $0x78] sm:$0xff]
        %v1519 = vld [vmem:[%s1507 + $0x80] sm:$0xff]
        %v1520 = vld [vmem:[%s1507 + $0x90] sm:$0xff]
        %v1521 = vld [vmem:[%s1507 + $0x98] sm:$0xff]
        %v1522 = vld [vmem:[%s1507 + $0xa8] sm:$0xff]
        %v1523 = vld [vmem:[%s1507 + $0xb0] sm:$0xff]
        %v1524 = vld [vmem:[%s1507 + $0xc0] sm:$0xff]
        %v1525 = vld [vmem:[%s1507 + $0xc8] sm:$0xff]
        %v1526 = vld [vmem:[%s1507 + $0xd8] sm:$0xff]
        %v1527 = vld [vmem:[%s1507 + $0xe0] sm:$0xff]
        %v1528 = vld [vmem:[%s1507 + $0xf0] sm:$0xff]
        %v1529 = vld [vmem:[%s1507 + $0xf8] sm:$0xff]
        %v1530 = vld [vmem:[%s1507 + $0x108] sm:$0xff]
        %v1531 = vld [vmem:[%s1507 + $0x110] sm:$0xff]
        %v1532 = vld [vmem:[%s1507 + $0x120] sm:$0xff]
        %v1533 = vld [vmem:[%s1507 + $0x128] sm:$0xff]
        %v1534 = vld [vmem:[%s1507 + $0x138] sm:$0xff]
        %v1535 = vld [vmem:[%s1507 + $0x140] sm:$0xff]
        %v1536 = vld [vmem:[%s1507 + $0x150] sm:$0xff]
        %v1537 = vld [vmem:[%s1507 + $0x158] sm:$0xff]
        %v1538 = vld [vmem:[%s1507 + $0x168] sm:$0xff]
        %v1539 = vld [vmem:[%s1507 + $0x170] sm:$0xff]
        %s1540 = scalar_lea.vmem %s1, 384
        %v1541 = vld [vmem:[%s1540] sm:$0xff]
        %v1542 = vld [vmem:[%s1540 + $0x8] sm:$0xff]
        %v1543 = vld [vmem:[%s1540 + $0x10] sm:$0xff]
        %v1544 = vld [vmem:[%s1540 + $0x18] sm:$0xff]
        %v1545 = vld [vmem:[%s1540 + $0x20] sm:$0xff]
        %v1546 = vld [vmem:[%s1540 + $0x28] sm:$0xff]
        %v1547 = vld [vmem:[%s1540 + $0x30] sm:$0xff]
        %v1548 = vld [vmem:[%s1540 + $0x38] sm:$0xff]
        %v1549 = vld [vmem:[%s1540 + $0x40] sm:$0xff]
        %v1550 = vld [vmem:[%s1540 + $0x48] sm:$0xff]
        %v1551 = vld [vmem:[%s1540 + $0x50] sm:$0xff]
        %v1552 = vld [vmem:[%s1540 + $0x58] sm:$0xff]
        %v1553 = vld [vmem:[%s1540 + $0x60] sm:$0xff]
        %v1554 = vld [vmem:[%s1540 + $0x68] sm:$0xff]
        %v1555 = vld [vmem:[%s1540 + $0x70] sm:$0xff]
        %v1556 = vld [vmem:[%s1540 + $0x78] sm:$0xff]
        %1557 = vmatprep.subr.mxu0 0.0
        %1558 = vmatpush1.msra.mxu0 %v1541
        %1559 = vmatprep.subr.mxu0 0.0
        %1560 = vmatpush1.msra.mxu0 %v1542
        %1561 = vmatprep.subr.mxu0 0.0
        %1562 = vmatpush1.msra.mxu0 %v1543
        %1563 = vmatprep.subr.mxu0 0.0
        %1564 = vmatpush1.msra.mxu0 %v1544
        %1565 = vmatprep.subr.mxu0 0.0
        %1566 = vmatpush1.msra.mxu0 %v1545
        %1567 = vmatprep.subr.mxu0 0.0
        %1568 = vmatpush1.msra.mxu0 %v1546
        %1569 = vmatprep.subr.mxu0 0.0
        %1570 = vmatpush1.msra.mxu0 %v1547
        %1571 = vmatprep.subr.mxu0 0.0
        %1572 = vmatpush1.msra.mxu0 %v1548
        %1573 = vmatprep.subr.mxu0 0.0
        %1574 = vmatpush1.msra.mxu0 %v1549
        %1575 = vmatprep.subr.mxu0 0.0
        %1576 = vmatpush1.msra.mxu0 %v1550
        %1577 = vmatprep.subr.mxu0 0.0
        %1578 = vmatpush1.msra.mxu0 %v1551
        %1579 = vmatprep.subr.mxu0 0.0
        %1580 = vmatpush1.msra.mxu0 %v1552
        %1581 = vmatprep.subr.mxu0 0.0
        %1582 = vmatpush1.msra.mxu0 %v1553
        %1583 = vmatprep.subr.mxu0 0.0
        %1584 = vmatpush1.msra.mxu0 %v1554
        %1585 = vmatprep.subr.mxu0 0.0
        %1586 = vmatpush1.msra.mxu0 %v1555
        %1587 = vmatprep.subr.mxu0 0.0
        %1588 = vmatpush1.msra.mxu0 %v1556
        %1589 = vmatprep.subr.mxu0 0.0
        %1590 = vmatpush1.msra.mxu0 0.0
        %1591 = vmatprep.subr.mxu0 0.0
        %1592 = vmatpush1.msra.mxu0 0.0
        %1593 = vmatprep.subr.mxu0 0.0
        %1594 = vmatpush1.msra.mxu0 0.0
        %1595 = vmatprep.subr.mxu0 0.0
        %1596 = vmatpush1.msra.mxu0 0.0
        %1597 = vmatprep.subr.mxu0 0.0
        %1598 = vmatpush1.msra.mxu0 0.0
        %1599 = vmatprep.subr.mxu0 0.0
        %1600 = vmatpush1.msra.mxu0 0.0
        %1601 = vmatprep.subr.mxu0 0.0
        %1602 = vmatpush1.msra.mxu0 0.0
        %1603 = vmatprep.subr.mxu0 0.0
        %1604 = vmatpush1.msra.mxu0 0.0
        %1605 = vmatprep.subr.mxu0 0.0
        %1606 = vmatpush1.msra.mxu0 0.0
        %1607 = vmatprep.subr.mxu0 0.0
        %1608 = vmatpush1.msra.mxu0 0.0
        %1609 = vmatprep.subr.mxu0 0.0
        %1610 = vmatpush1.msra.mxu0 0.0
        %1611 = vmatprep.subr.mxu0 0.0
        %1612 = vmatpush1.msra.mxu0 0.0
        %1613 = vmatprep.subr.mxu0 0.0
        %1614 = vmatpush1.msra.mxu0 0.0
        %1615 = vmatprep.subr.mxu0 0.0
        %1616 = vmatpush1.msra.mxu0 0.0
        %1617 = vmatprep.subr.mxu0 0.0
        %1618 = vmatpush1.msra.mxu0 0.0
        %1619 = vmatprep.subr.mxu0 0.0
        %1620 = vmatpush1.msra.mxu0 0.0
        %1621 = vmatprep.mubr.f32.mxu0 0.0
        %1622 = vmatmul.mubr.f32.gmra.mrb[0].mxu0 %v1508
        %v1623 = vpop.f32.mrb[0].mxu0
        %v1624 = vadd.f32 0.0, %v1623
        %v1625 = vpop.f32.mrb[0].mxu0
        %1626 = vmatprep.mubr.f32.mxu0 0.0
        %1627 = vmatmul.mubr.f32.gmra.mrb[0].mxu0 %v1509
        %v1628 = vpop.f32.mrb[0].mxu0
        %v1629 = vadd.f32 0.0, %v1628
        %v1630 = vpop.f32.mrb[0].mxu0
        %1631 = vmatprep.mubr.f32.mxu0 0.0
        %1632 = vmatmul.mubr.f32.gmra.mrb[0].mxu0 %v1510
        %v1633 = vpop.f32.mrb[0].mxu0
        %v1634 = vadd.f32 0.0, %v1633
        %v1635 = vpop.f32.mrb[0].mxu0
        %1636 = vmatprep.mubr.f32.mxu0 0.0
        %1637 = vmatmul.mubr.f32.gmra.mrb[0].mxu0 %v1511
        %v1638 = vpop.f32.mrb[0].mxu0
        %v1639 = vadd.f32 0.0, %v1638
        %v1640 = vpop.f32.mrb[0].mxu0
        %1641 = vmatprep.mubr.f32.mxu0 0.0
        %1642 = vmatmul.mubr.f32.gmra.mrb[0].mxu0 %v1512
        %v1643 = vpop.f32.mrb[0].mxu0
        %v1644 = vadd.f32 0.0, %v1643
        %v1645 = vpop.f32.mrb[0].mxu0
        %1646 = vmatprep.mubr.f32.mxu0 0.0
        %1647 = vmatmul.mubr.f32.gmra.mrb[0].mxu0 %v1513
        %v1648 = vpop.f32.mrb[0].mxu0
        %v1649 = vadd.f32 0.0, %v1648
        %v1650 = vpop.f32.mrb[0].mxu0
        %1651 = vmatprep.mubr.f32.mxu0 0.0
        %1652 = vmatmul.mubr.f32.gmra.mrb[0].mxu0 %v1514
        %v1653 = vpop.f32.mrb[0].mxu0
        %v1654 = vadd.f32 0.0, %v1653
        %v1655 = vpop.f32.mrb[0].mxu0
        %1656 = vmatprep.mubr.f32.mxu0 0.0
        %1657 = vmatmul.mubr.f32.gmra.mrb[0].mxu0 %v1515
        %v1658 = vpop.f32.mrb[0].mxu0
        %v1659 = vadd.f32 0.0, %v1658
        %v1660 = vpop.f32.mrb[0].mxu0
        %1661 = vmatprep.mubr.f32.mxu0 0.0
        %1662 = vmatmul.mubr.f32.gmra.mrb[0].mxu0 %v1516
        %v1663 = vpop.f32.mrb[0].mxu0
        %v1664 = vadd.f32 0.0, %v1663
        %v1665 = vpop.f32.mrb[0].mxu0
        %1666 = vmatprep.mubr.f32.mxu0 0.0
        %1667 = vmatmul.mubr.f32.gmra.mrb[0].mxu0 %v1517
        %v1668 = vpop.f32.mrb[0].mxu0
        %v1669 = vadd.f32 0.0, %v1668
        %v1670 = vpop.f32.mrb[0].mxu0
        %1671 = vmatprep.mubr.f32.mxu0 0.0
        %1672 = vmatmul.mubr.f32.gmra.mrb[0].mxu0 %v1518
        %v1673 = vpop.f32.mrb[0].mxu0
        %v1674 = vadd.f32 0.0, %v1673
        %v1675 = vpop.f32.mrb[0].mxu0
        %1676 = vmatprep.mubr.f32.mxu0 0.0
        %1677 = vmatmul.mubr.f32.gmra.mrb[0].mxu0 %v1519
        %v1678 = vpop.f32.mrb[0].mxu0
        %v1679 = vadd.f32 0.0, %v1678
        %v1680 = vpop.f32.mrb[0].mxu0
        %1681 = vmatprep.mubr.f32.mxu0 0.0
        %1682 = vmatmul.mubr.f32.gmra.mrb[0].mxu0 %v1520
        %v1683 = vpop.f32.mrb[0].mxu0
        %v1684 = vadd.f32 0.0, %v1683
        %v1685 = vpop.f32.mrb[0].mxu0
        %1686 = vmatprep.mubr.f32.mxu0 0.0
        %1687 = vmatmul.mubr.f32.gmra.mrb[0].mxu0 %v1521
        %v1688 = vpop.f32.mrb[0].mxu0
        %v1689 = vadd.f32 0.0, %v1688
        %v1690 = vpop.f32.mrb[0].mxu0
        %1691 = vmatprep.mubr.f32.mxu0 0.0
        %1692 = vmatmul.mubr.f32.gmra.mrb[0].mxu0 %v1522
        %v1693 = vpop.f32.mrb[0].mxu0
        %v1694 = vadd.f32 0.0, %v1693
        %v1695 = vpop.f32.mrb[0].mxu0
        %1696 = vmatprep.mubr.f32.mxu0 0.0
        %1697 = vmatmul.mubr.f32.gmra.mrb[0].mxu0 %v1523
        %v1698 = vpop.f32.mrb[0].mxu0
        %v1699 = vadd.f32 0.0, %v1698
        %v1700 = vpop.f32.mrb[0].mxu0
        %1701 = vmatprep.mubr.f32.mxu0 0.0
        %1702 = vmatmul.mubr.f32.gmra.mrb[0].mxu0 %v1524
        %v1703 = vpop.f32.mrb[0].mxu0
        %v1704 = vadd.f32 0.0, %v1703
        %v1705 = vpop.f32.mrb[0].mxu0
        %1706 = vmatprep.mubr.f32.mxu0 0.0
        %1707 = vmatmul.mubr.f32.gmra.mrb[0].mxu0 %v1525
        %v1708 = vpop.f32.mrb[0].mxu0
        %v1709 = vadd.f32 0.0, %v1708
        %v1710 = vpop.f32.mrb[0].mxu0
        %1711 = vmatprep.mubr.f32.mxu0 0.0
        %1712 = vmatmul.mubr.f32.gmra.mrb[0].mxu0 %v1526
        %v1713 = vpop.f32.mrb[0].mxu0
        %v1714 = vadd.f32 0.0, %v1713
        %v1715 = vpop.f32.mrb[0].mxu0
        %1716 = vmatprep.mubr.f32.mxu0 0.0
        %1717 = vmatmul.mubr.f32.gmra.mrb[0].mxu0 %v1527
        %v1718 = vpop.f32.mrb[0].mxu0
        %v1719 = vadd.f32 0.0, %v1718
        %v1720 = vpop.f32.mrb[0].mxu0
        %1721 = vmatprep.mubr.f32.mxu0 0.0
        %1722 = vmatmul.mubr.f32.gmra.mrb[0].mxu0 %v1528
        %v1723 = vpop.f32.mrb[0].mxu0
        %v1724 = vadd.f32 0.0, %v1723
        %v1725 = vpop.f32.mrb[0].mxu0
        %1726 = vmatprep.mubr.f32.mxu0 0.0
        %1727 = vmatmul.mubr.f32.gmra.mrb[0].mxu0 %v1529
        %v1728 = vpop.f32.mrb[0].mxu0
        %v1729 = vadd.f32 0.0, %v1728
        %v1730 = vpop.f32.mrb[0].mxu0
        %1731 = vmatprep.mubr.f32.mxu0 0.0
        %1732 = vmatmul.mubr.f32.gmra.mrb[0].mxu0 %v1530
        %v1733 = vpop.f32.mrb[0].mxu0
        %v1734 = vadd.f32 0.0, %v1733
        %v1735 = vpop.f32.mrb[0].mxu0
        %1736 = vmatprep.mubr.f32.mxu0 0.0
        %1737 = vmatmul.mubr.f32.gmra.mrb[0].mxu0 %v1531
        %v1738 = vpop.f32.mrb[0].mxu0
        %v1739 = vadd.f32 0.0, %v1738
        %v1740 = vpop.f32.mrb[0].mxu0
        %1741 = vmatprep.mubr.f32.mxu0 0.0
        %1742 = vmatmul.mubr.f32.gmra.mrb[0].mxu0 %v1532
        %v1743 = vpop.f32.mrb[0].mxu0
        %v1744 = vadd.f32 0.0, %v1743
        %v1745 = vpop.f32.mrb[0].mxu0
        %1746 = vmatprep.mubr.f32.mxu0 0.0
        %1747 = vmatmul.mubr.f32.gmra.mrb[0].mxu0 %v1533
        %v1748 = vpop.f32.mrb[0].mxu0
        %v1749 = vadd.f32 0.0, %v1748
        %v1750 = vpop.f32.mrb[0].mxu0
        %1751 = vmatprep.mubr.f32.mxu0 0.0
        %1752 = vmatmul.mubr.f32.gmra.mrb[0].mxu0 %v1534
        %v1753 = vpop.f32.mrb[0].mxu0
        %v1754 = vadd.f32 0.0, %v1753
        %v1755 = vpop.f32.mrb[0].mxu0
        %1756 = vmatprep.mubr.f32.mxu0 0.0
        %1757 = vmatmul.mubr.f32.gmra.mrb[0].mxu0 %v1535
        %v1758 = vpop.f32.mrb[0].mxu0
        %v1759 = vadd.f32 0.0, %v1758
        %v1760 = vpop.f32.mrb[0].mxu0
        %1761 = vmatprep.mubr.f32.mxu0 0.0
        %1762 = vmatmul.mubr.f32.gmra.mrb[0].mxu0 %v1536
        %v1763 = vpop.f32.mrb[0].mxu0
        %v1764 = vadd.f32 0.0, %v1763
        %v1765 = vpop.f32.mrb[0].mxu0
        %1766 = vmatprep.mubr.f32.mxu0 0.0
        %1767 = vmatmul.mubr.f32.gmra.mrb[0].mxu0 %v1537
        %v1768 = vpop.f32.mrb[0].mxu0
        %v1769 = vadd.f32 0.0, %v1768
        %v1770 = vpop.f32.mrb[0].mxu0
        %1771 = vmatprep.mubr.f32.mxu0 0.0
        %1772 = vmatmul.mubr.f32.gmra.mrb[0].mxu0 %v1538
        %v1773 = vpop.f32.mrb[0].mxu0
        %v1774 = vadd.f32 0.0, %v1773
        %v1775 = vpop.f32.mrb[0].mxu0
        %1776 = vmatprep.mubr.f32.mxu0 0.0
        %1777 = vmatmul.mubr.f32.gmra.mrb[0].mxu0 %v1539
        %v1778 = vpop.f32.mrb[0].mxu0
        %v1779 = vadd.f32 0.0, %v1778
        %v1780 = vpop.f32.mrb[0].mxu0
        %1781 = vdwg.mxu0
        %v1782 = vadd.f32 %v1474, %v1624
        %v1783 = vadd.f32 %v1475, %v1629
        %v1784 = vadd.f32 %v1476, %v1634
        %v1785 = vadd.f32 %v1477, %v1639
        %v1786 = vadd.f32 %v1478, %v1644
        %v1787 = vadd.f32 %v1479, %v1649
        %v1788 = vadd.f32 %v1480, %v1654
        %v1789 = vadd.f32 %v1481, %v1659
        %v1790 = vadd.f32 %v1482, %v1664
        %v1791 = vadd.f32 %v1483, %v1669
        %v1792 = vadd.f32 %v1484, %v1674
        %v1793 = vadd.f32 %v1485, %v1679
        %v1794 = vadd.f32 %v1486, %v1684
        %v1795 = vadd.f32 %v1487, %v1689
        %v1796 = vadd.f32 %v1488, %v1694
        %v1797 = vadd.f32 %v1489, %v1699
        %v1798 = vadd.f32 %v1490, %v1704
        %v1799 = vadd.f32 %v1491, %v1709
        %v1800 = vadd.f32 %v1492, %v1714
        %v1801 = vadd.f32 %v1493, %v1719
        %v1802 = vadd.f32 %v1494, %v1724
        %v1803 = vadd.f32 %v1495, %v1729
        %v1804 = vadd.f32 %v1496, %v1734
        %v1805 = vadd.f32 %v1497, %v1739
        %v1806 = vadd.f32 %v1498, %v1744
        %v1807 = vadd.f32 %v1499, %v1749
        %v1808 = vadd.f32 %v1500, %v1754
        %v1809 = vadd.f32 %v1501, %v1759
        %v1810 = vadd.f32 %v1502, %v1764
        %v1811 = vadd.f32 %v1503, %v1769
        %v1812 = vadd.f32 %v1504, %v1774
        %v1813 = vadd.f32 %v1505, %v1779
        %v1814 = vld [vmem:[%s1507 + $0x2] sm:$0xff]
        %v1815 = vld [vmem:[%s1507 + $0xa] sm:$0xff]
        %v1816 = vld [vmem:[%s1507 + $0x1a] sm:$0xff]
        %v1817 = vld [vmem:[%s1507 + $0x22] sm:$0xff]
        %v1818 = vld [vmem:[%s1507 + $0x32] sm:$0xff]
        %v1819 = vld [vmem:[%s1507 + $0x3a] sm:$0xff]
        %v1820 = vld [vmem:[%s1507 + $0x4a] sm:$0xff]
        %v1821 = vld [vmem:[%s1507 + $0x52] sm:$0xff]
        %v1822 = vld [vmem:[%s1507 + $0x62] sm:$0xff]
        %v1823 = vld [vmem:[%s1507 + $0x6a] sm:$0xff]
        %v1824 = vld [vmem:[%s1507 + $0x7a] sm:$0xff]
        %v1825 = vld [vmem:[%s1507 + $0x82] sm:$0xff]
        %v1826 = vld [vmem:[%s1507 + $0x92] sm:$0xff]
        %v1827 = vld [vmem:[%s1507 + $0x9a] sm:$0xff]
        %v1828 = vld [vmem:[%s1507 + $0xaa] sm:$0xff]
        %v1829 = vld [vmem:[%s1507 + $0xb2] sm:$0xff]
        %v1830 = vld [vmem:[%s1507 + $0xc2] sm:$0xff]
        %v1831 = vld [vmem:[%s1507 + $0xca] sm:$0xff]
        %v1832 = vld [vmem:[%s1507 + $0xda] sm:$0xff]
        %v1833 = vld [vmem:[%s1507 + $0xe2] sm:$0xff]
        %v1834 = vld [vmem:[%s1507 + $0xf2] sm:$0xff]
        %v1835 = vld [vmem:[%s1507 + $0xfa] sm:$0xff]
        %v1836 = vld [vmem:[%s1507 + $0x10a] sm:$0xff]
        %v1837 = vld [vmem:[%s1507 + $0x112] sm:$0xff]
        %v1838 = vld [vmem:[%s1507 + $0x122] sm:$0xff]
        %v1839 = vld [vmem:[%s1507 + $0x12a] sm:$0xff]
        %v1840 = vld [vmem:[%s1507 + $0x13a] sm:$0xff]
        %v1841 = vld [vmem:[%s1507 + $0x142] sm:$0xff]
        %v1842 = vld [vmem:[%s1507 + $0x152] sm:$0xff]
        %v1843 = vld [vmem:[%s1507 + $0x15a] sm:$0xff]
        %v1844 = vld [vmem:[%s1507 + $0x16a] sm:$0xff]
        %v1845 = vld [vmem:[%s1507 + $0x172] sm:$0xff]
        %s1846 = scalar_lea.vmem %s1, 512
        %v1847 = vld [vmem:[%s1846] sm:$0xff]
        %v1848 = vld [vmem:[%s1846 + $0x8] sm:$0xff]
        %v1849 = vld [vmem:[%s1846 + $0x10] sm:$0xff]
        %v1850 = vld [vmem:[%s1846 + $0x18] sm:$0xff]
        %v1851 = vld [vmem:[%s1846 + $0x20] sm:$0xff]
        %v1852 = vld [vmem:[%s1846 + $0x28] sm:$0xff]
        %v1853 = vld [vmem:[%s1846 + $0x30] sm:$0xff]
        %v1854 = vld [vmem:[%s1846 + $0x38] sm:$0xff]
        %v1855 = vld [vmem:[%s1846 + $0x40] sm:$0xff]
        %v1856 = vld [vmem:[%s1846 + $0x48] sm:$0xff]
        %v1857 = vld [vmem:[%s1846 + $0x50] sm:$0xff]
        %v1858 = vld [vmem:[%s1846 + $0x58] sm:$0xff]
        %v1859 = vld [vmem:[%s1846 + $0x60] sm:$0xff]
        %v1860 = vld [vmem:[%s1846 + $0x68] sm:$0xff]
        %v1861 = vld [vmem:[%s1846 + $0x70] sm:$0xff]
        %v1862 = vld [vmem:[%s1846 + $0x78] sm:$0xff]
        %1863 = vmatprep.subr.mxu0 0.0
        %1864 = vmatpush1.msra.mxu0 %v1847
        %1865 = vmatprep.subr.mxu0 0.0
        %1866 = vmatpush1.msra.mxu0 %v1848
        %1867 = vmatprep.subr.mxu0 0.0
        %1868 = vmatpush1.msra.mxu0 %v1849
        %1869 = vmatprep.subr.mxu0 0.0
        %1870 = vmatpush1.msra.mxu0 %v1850
        %1871 = vmatprep.subr.mxu0 0.0
        %1872 = vmatpush1.msra.mxu0 %v1851
        %1873 = vmatprep.subr.mxu0 0.0
        %1874 = vmatpush1.msra.mxu0 %v1852
        %1875 = vmatprep.subr.mxu0 0.0
        %1876 = vmatpush1.msra.mxu0 %v1853
        %1877 = vmatprep.subr.mxu0 0.0
        %1878 = vmatpush1.msra.mxu0 %v1854
        %1879 = vmatprep.subr.mxu0 0.0
        %1880 = vmatpush1.msra.mxu0 %v1855
        %1881 = vmatprep.subr.mxu0 0.0
        %1882 = vmatpush1.msra.mxu0 %v1856
        %1883 = vmatprep.subr.mxu0 0.0
        %1884 = vmatpush1.msra.mxu0 %v1857
        %1885 = vmatprep.subr.mxu0 0.0
        %1886 = vmatpush1.msra.mxu0 %v1858
        %1887 = vmatprep.subr.mxu0 0.0
        %1888 = vmatpush1.msra.mxu0 %v1859
        %1889 = vmatprep.subr.mxu0 0.0
        %1890 = vmatpush1.msra.mxu0 %v1860
        %1891 = vmatprep.subr.mxu0 0.0
        %1892 = vmatpush1.msra.mxu0 %v1861
        %1893 = vmatprep.subr.mxu0 0.0
        %1894 = vmatpush1.msra.mxu0 %v1862
        %1895 = vmatprep.subr.mxu0 0.0
        %1896 = vmatpush1.msra.mxu0 0.0
        %1897 = vmatprep.subr.mxu0 0.0
        %1898 = vmatpush1.msra.mxu0 0.0
        %1899 = vmatprep.subr.mxu0 0.0
        %1900 = vmatpush1.msra.mxu0 0.0
        %1901 = vmatprep.subr.mxu0 0.0
        %1902 = vmatpush1.msra.mxu0 0.0
        %1903 = vmatprep.subr.mxu0 0.0
        %1904 = vmatpush1.msra.mxu0 0.0
        %1905 = vmatprep.subr.mxu0 0.0
        %1906 = vmatpush1.msra.mxu0 0.0
        %1907 = vmatprep.subr.mxu0 0.0
        %1908 = vmatpush1.msra.mxu0 0.0
        %1909 = vmatprep.subr.mxu0 0.0
        %1910 = vmatpush1.msra.mxu0 0.0
        %1911 = vmatprep.subr.mxu0 0.0
        %1912 = vmatpush1.msra.mxu0 0.0
        %1913 = vmatprep.subr.mxu0 0.0
        %1914 = vmatpush1.msra.mxu0 0.0
        %1915 = vmatprep.subr.mxu0 0.0
        %1916 = vmatpush1.msra.mxu0 0.0
        %1917 = vmatprep.subr.mxu0 0.0
        %1918 = vmatpush1.msra.mxu0 0.0
        %1919 = vmatprep.subr.mxu0 0.0
        %1920 = vmatpush1.msra.mxu0 0.0
        %1921 = vmatprep.subr.mxu0 0.0
        %1922 = vmatpush1.msra.mxu0 0.0
        %1923 = vmatprep.subr.mxu0 0.0
        %1924 = vmatpush1.msra.mxu0 0.0
        %1925 = vmatprep.subr.mxu0 0.0
        %1926 = vmatpush1.msra.mxu0 0.0
        %1927 = vmatprep.mubr.f32.mxu0 0.0
        %1928 = vmatmul.mubr.f32.gmra.mrb[0].mxu0 %v1814
        %v1929 = vpop.f32.mrb[0].mxu0
        %v1930 = vadd.f32 0.0, %v1929
        %v1931 = vpop.f32.mrb[0].mxu0
        %1932 = vmatprep.mubr.f32.mxu0 0.0
        %1933 = vmatmul.mubr.f32.gmra.mrb[0].mxu0 %v1815
        %v1934 = vpop.f32.mrb[0].mxu0
        %v1935 = vadd.f32 0.0, %v1934
        %v1936 = vpop.f32.mrb[0].mxu0
        %1937 = vmatprep.mubr.f32.mxu0 0.0
        %1938 = vmatmul.mubr.f32.gmra.mrb[0].mxu0 %v1816
        %v1939 = vpop.f32.mrb[0].mxu0
        %v1940 = vadd.f32 0.0, %v1939
        %v1941 = vpop.f32.mrb[0].mxu0
        %1942 = vmatprep.mubr.f32.mxu0 0.0
        %1943 = vmatmul.mubr.f32.gmra.mrb[0].mxu0 %v1817
        %v1944 = vpop.f32.mrb[0].mxu0
        %v1945 = vadd.f32 0.0, %v1944
        %v1946 = vpop.f32.mrb[0].mxu0
        %1947 = vmatprep.mubr.f32.mxu0 0.0
        %1948 = vmatmul.mubr.f32.gmra.mrb[0].mxu0 %v1818
        %v1949 = vpop.f32.mrb[0].mxu0
        %v1950 = vadd.f32 0.0, %v1949
        %v1951 = vpop.f32.mrb[0].mxu0
        %1952 = vmatprep.mubr.f32.mxu0 0.0
        %1953 = vmatmul.mubr.f32.gmra.mrb[0].mxu0 %v1819
        %v1954 = vpop.f32.mrb[0].mxu0
        %v1955 = vadd.f32 0.0, %v1954
        %v1956 = vpop.f32.mrb[0].mxu0
        %1957 = vmatprep.mubr.f32.mxu0 0.0
        %1958 = vmatmul.mubr.f32.gmra.mrb[0].mxu0 %v1820
        %v1959 = vpop.f32.mrb[0].mxu0
        %v1960 = vadd.f32 0.0, %v1959
        %v1961 = vpop.f32.mrb[0].mxu0
        %1962 = vmatprep.mubr.f32.mxu0 0.0
        %1963 = vmatmul.mubr.f32.gmra.mrb[0].mxu0 %v1821
        %v1964 = vpop.f32.mrb[0].mxu0
        %v1965 = vadd.f32 0.0, %v1964
        %v1966 = vpop.f32.mrb[0].mxu0
        %1967 = vmatprep.mubr.f32.mxu0 0.0
        %1968 = vmatmul.mubr.f32.gmra.mrb[0].mxu0 %v1822
        %v1969 = vpop.f32.mrb[0].mxu0
        %v1970 = vadd.f32 0.0, %v1969
        %v1971 = vpop.f32.mrb[0].mxu0
        %1972 = vmatprep.mubr.f32.mxu0 0.0
        %1973 = vmatmul.mubr.f32.gmra.mrb[0].mxu0 %v1823
        %v1974 = vpop.f32.mrb[0].mxu0
        %v1975 = vadd.f32 0.0, %v1974
        %v1976 = vpop.f32.mrb[0].mxu0
        %1977 = vmatprep.mubr.f32.mxu0 0.0
        %1978 = vmatmul.mubr.f32.gmra.mrb[0].mxu0 %v1824
        %v1979 = vpop.f32.mrb[0].mxu0
        %v1980 = vadd.f32 0.0, %v1979
        %v1981 = vpop.f32.mrb[0].mxu0
        %1982 = vmatprep.mubr.f32.mxu0 0.0
        %1983 = vmatmul.mubr.f32.gmra.mrb[0].mxu0 %v1825
        %v1984 = vpop.f32.mrb[0].mxu0
        %v1985 = vadd.f32 0.0, %v1984
        %v1986 = vpop.f32.mrb[0].mxu0
        %1987 = vmatprep.mubr.f32.mxu0 0.0
        %1988 = vmatmul.mubr.f32.gmra.mrb[0].mxu0 %v1826
        %v1989 = vpop.f32.mrb[0].mxu0
        %v1990 = vadd.f32 0.0, %v1989
        %v1991 = vpop.f32.mrb[0].mxu0
        %1992 = vmatprep.mubr.f32.mxu0 0.0
        %1993 = vmatmul.mubr.f32.gmra.mrb[0].mxu0 %v1827
        %v1994 = vpop.f32.mrb[0].mxu0
        %v1995 = vadd.f32 0.0, %v1994
        %v1996 = vpop.f32.mrb[0].mxu0
        %1997 = vmatprep.mubr.f32.mxu0 0.0
        %1998 = vmatmul.mubr.f32.gmra.mrb[0].mxu0 %v1828
        %v1999 = vpop.f32.mrb[0].mxu0
        %v2000 = vadd.f32 0.0, %v1999
        %v2001 = vpop.f32.mrb[0].mxu0
        %2002 = vmatprep.mubr.f32.mxu0 0.0
        %2003 = vmatmul.mubr.f32.gmra.mrb[0].mxu0 %v1829
        %v2004 = vpop.f32.mrb[0].mxu0
        %v2005 = vadd.f32 0.0, %v2004
        %v2006 = vpop.f32.mrb[0].mxu0
        %2007 = vmatprep.mubr.f32.mxu0 0.0
        %2008 = vmatmul.mubr.f32.gmra.mrb[0].mxu0 %v1830
        %v2009 = vpop.f32.mrb[0].mxu0
        %v2010 = vadd.f32 0.0, %v2009
        %v2011 = vpop.f32.mrb[0].mxu0
        %2012 = vmatprep.mubr.f32.mxu0 0.0
        %2013 = vmatmul.mubr.f32.gmra.mrb[0].mxu0 %v1831
        %v2014 = vpop.f32.mrb[0].mxu0
        %v2015 = vadd.f32 0.0, %v2014
        %v2016 = vpop.f32.mrb[0].mxu0
        %2017 = vmatprep.mubr.f32.mxu0 0.0
        %2018 = vmatmul.mubr.f32.gmra.mrb[0].mxu0 %v1832
        %v2019 = vpop.f32.mrb[0].mxu0
        %v2020 = vadd.f32 0.0, %v2019
        %v2021 = vpop.f32.mrb[0].mxu0
        %2022 = vmatprep.mubr.f32.mxu0 0.0
        %2023 = vmatmul.mubr.f32.gmra.mrb[0].mxu0 %v1833
        %v2024 = vpop.f32.mrb[0].mxu0
        %v2025 = vadd.f32 0.0, %v2024
        %v2026 = vpop.f32.mrb[0].mxu0
        %2027 = vmatprep.mubr.f32.mxu0 0.0
        %2028 = vmatmul.mubr.f32.gmra.mrb[0].mxu0 %v1834
        %v2029 = vpop.f32.mrb[0].mxu0
        %v2030 = vadd.f32 0.0, %v2029
        %v2031 = vpop.f32.mrb[0].mxu0
        %2032 = vmatprep.mubr.f32.mxu0 0.0
        %2033 = vmatmul.mubr.f32.gmra.mrb[0].mxu0 %v1835
        %v2034 = vpop.f32.mrb[0].mxu0
        %v2035 = vadd.f32 0.0, %v2034
        %v2036 = vpop.f32.mrb[0].mxu0
        %2037 = vmatprep.mubr.f32.mxu0 0.0
        %2038 = vmatmul.mubr.f32.gmra.mrb[0].mxu0 %v1836
        %v2039 = vpop.f32.mrb[0].mxu0
        %v2040 = vadd.f32 0.0, %v2039
        %v2041 = vpop.f32.mrb[0].mxu0
        %2042 = vmatprep.mubr.f32.mxu0 0.0
        %2043 = vmatmul.mubr.f32.gmra.mrb[0].mxu0 %v1837
        %v2044 = vpop.f32.mrb[0].mxu0
        %v2045 = vadd.f32 0.0, %v2044
        %v2046 = vpop.f32.mrb[0].mxu0
        %2047 = vmatprep.mubr.f32.mxu0 0.0
        %2048 = vmatmul.mubr.f32.gmra.mrb[0].mxu0 %v1838
        %v2049 = vpop.f32.mrb[0].mxu0
        %v2050 = vadd.f32 0.0, %v2049
        %v2051 = vpop.f32.mrb[0].mxu0
        %2052 = vmatprep.mubr.f32.mxu0 0.0
        %2053 = vmatmul.mubr.f32.gmra.mrb[0].mxu0 %v1839
        %v2054 = vpop.f32.mrb[0].mxu0
        %v2055 = vadd.f32 0.0, %v2054
        %v2056 = vpop.f32.mrb[0].mxu0
        %2057 = vmatprep.mubr.f32.mxu0 0.0
        %2058 = vmatmul.mubr.f32.gmra.mrb[0].mxu0 %v1840
        %v2059 = vpop.f32.mrb[0].mxu0
        %v2060 = vadd.f32 0.0, %v2059
        %v2061 = vpop.f32.mrb[0].mxu0
        %2062 = vmatprep.mubr.f32.mxu0 0.0
        %2063 = vmatmul.mubr.f32.gmra.mrb[0].mxu0 %v1841
        %v2064 = vpop.f32.mrb[0].mxu0
        %v2065 = vadd.f32 0.0, %v2064
        %v2066 = vpop.f32.mrb[0].mxu0
        %2067 = vmatprep.mubr.f32.mxu0 0.0
        %2068 = vmatmul.mubr.f32.gmra.mrb[0].mxu0 %v1842
        %v2069 = vpop.f32.mrb[0].mxu0
        %v2070 = vadd.f32 0.0, %v2069
        %v2071 = vpop.f32.mrb[0].mxu0
        %2072 = vmatprep.mubr.f32.mxu0 0.0
        %2073 = vmatmul.mubr.f32.gmra.mrb[0].mxu0 %v1843
        %v2074 = vpop.f32.mrb[0].mxu0
        %v2075 = vadd.f32 0.0, %v2074
        %v2076 = vpop.f32.mrb[0].mxu0
        %2077 = vmatprep.mubr.f32.mxu0 0.0
        %2078 = vmatmul.mubr.f32.gmra.mrb[0].mxu0 %v1844
        %v2079 = vpop.f32.mrb[0].mxu0
        %v2080 = vadd.f32 0.0, %v2079
        %v2081 = vpop.f32.mrb[0].mxu0
        %2082 = vmatprep.mubr.f32.mxu0 0.0
        %2083 = vmatmul.mubr.f32.gmra.mrb[0].mxu0 %v1845
        %v2084 = vpop.f32.mrb[0].mxu0
        %v2085 = vadd.f32 0.0, %v2084
        %v2086 = vpop.f32.mrb[0].mxu0
        %2087 = vdwg.mxu0
        %v2088 = vadd.f32 %v1782, %v1930
        %v2089 = vadd.f32 %v1783, %v1935
        %v2090 = vadd.f32 %v1784, %v1940
        %v2091 = vadd.f32 %v1785, %v1945
        %v2092 = vadd.f32 %v1786, %v1950
        %v2093 = vadd.f32 %v1787, %v1955
        %v2094 = vadd.f32 %v1788, %v1960
        %v2095 = vadd.f32 %v1789, %v1965
        %v2096 = vadd.f32 %v1790, %v1970
        %v2097 = vadd.f32 %v1791, %v1975
        %v2098 = vadd.f32 %v1792, %v1980
        %v2099 = vadd.f32 %v1793, %v1985
        %v2100 = vadd.f32 %v1794, %v1990
        %v2101 = vadd.f32 %v1795, %v1995
        %v2102 = vadd.f32 %v1796, %v2000
        %v2103 = vadd.f32 %v1797, %v2005
        %v2104 = vadd.f32 %v1798, %v2010
        %v2105 = vadd.f32 %v1799, %v2015
        %v2106 = vadd.f32 %v1800, %v2020
        %v2107 = vadd.f32 %v1801, %v2025
        %v2108 = vadd.f32 %v1802, %v2030
        %v2109 = vadd.f32 %v1803, %v2035
        %v2110 = vadd.f32 %v1804, %v2040
        %v2111 = vadd.f32 %v1805, %v2045
        %v2112 = vadd.f32 %v1806, %v2050
        %v2113 = vadd.f32 %v1807, %v2055
        %v2114 = vadd.f32 %v1808, %v2060
        %v2115 = vadd.f32 %v1809, %v2065
        %v2116 = vadd.f32 %v1810, %v2070
        %v2117 = vadd.f32 %v1811, %v2075
        %v2118 = vadd.f32 %v1812, %v2080
        %v2119 = vadd.f32 %v1813, %v2085
        %v2120 = vld [vmem:[%s1507 + $0x4] sm:$0xff]
        %v2121 = vld [vmem:[%s1507 + $0xc] sm:$0xff]
        %v2122 = vld [vmem:[%s1507 + $0x1c] sm:$0xff]
        %v2123 = vld [vmem:[%s1507 + $0x24] sm:$0xff]
        %v2124 = vld [vmem:[%s1507 + $0x34] sm:$0xff]
        %v2125 = vld [vmem:[%s1507 + $0x3c] sm:$0xff]
        %v2126 = vld [vmem:[%s1507 + $0x4c] sm:$0xff]
        %v2127 = vld [vmem:[%s1507 + $0x54] sm:$0xff]
        %v2128 = vld [vmem:[%s1507 + $0x64] sm:$0xff]
        %v2129 = vld [vmem:[%s1507 + $0x6c] sm:$0xff]
        %v2130 = vld [vmem:[%s1507 + $0x7c] sm:$0xff]
        %v2131 = vld [vmem:[%s1507 + $0x84] sm:$0xff]
        %v2132 = vld [vmem:[%s1507 + $0x94] sm:$0xff]
        %v2133 = vld [vmem:[%s1507 + $0x9c] sm:$0xff]
        %v2134 = vld [vmem:[%s1507 + $0xac] sm:$0xff]
        %v2135 = vld [vmem:[%s1507 + $0xb4] sm:$0xff]
        %v2136 = vld [vmem:[%s1507 + $0xc4] sm:$0xff]
        %v2137 = vld [vmem:[%s1507 + $0xcc] sm:$0xff]
        %v2138 = vld [vmem:[%s1507 + $0xdc] sm:$0xff]
        %v2139 = vld [vmem:[%s1507 + $0xe4] sm:$0xff]
        %v2140 = vld [vmem:[%s1507 + $0xf4] sm:$0xff]
        %v2141 = vld [vmem:[%s1507 + $0xfc] sm:$0xff]
        %v2142 = vld [vmem:[%s1507 + $0x10c] sm:$0xff]
        %v2143 = vld [vmem:[%s1507 + $0x114] sm:$0xff]
        %v2144 = vld [vmem:[%s1507 + $0x124] sm:$0xff]
        %v2145 = vld [vmem:[%s1507 + $0x12c] sm:$0xff]
        %v2146 = vld [vmem:[%s1507 + $0x13c] sm:$0xff]
        %v2147 = vld [vmem:[%s1507 + $0x144] sm:$0xff]
        %v2148 = vld [vmem:[%s1507 + $0x154] sm:$0xff]
        %v2149 = vld [vmem:[%s1507 + $0x15c] sm:$0xff]
        %v2150 = vld [vmem:[%s1507 + $0x16c] sm:$0xff]
        %v2151 = vld [vmem:[%s1507 + $0x174] sm:$0xff]
        %s2152 = scalar_lea.vmem %s1, 640
        %v2153 = vld [vmem:[%s2152] sm:$0xff]
        %v2154 = vld [vmem:[%s2152 + $0x8] sm:$0xff]
        %v2155 = vld [vmem:[%s2152 + $0x10] sm:$0xff]
        %v2156 = vld [vmem:[%s2152 + $0x18] sm:$0xff]
        %v2157 = vld [vmem:[%s2152 + $0x20] sm:$0xff]
        %v2158 = vld [vmem:[%s2152 + $0x28] sm:$0xff]
        %v2159 = vld [vmem:[%s2152 + $0x30] sm:$0xff]
        %v2160 = vld [vmem:[%s2152 + $0x38] sm:$0xff]
        %v2161 = vld [vmem:[%s2152 + $0x40] sm:$0xff]
        %v2162 = vld [vmem:[%s2152 + $0x48] sm:$0xff]
        %v2163 = vld [vmem:[%s2152 + $0x50] sm:$0xff]
        %v2164 = vld [vmem:[%s2152 + $0x58] sm:$0xff]
        %v2165 = vld [vmem:[%s2152 + $0x60] sm:$0xff]
        %v2166 = vld [vmem:[%s2152 + $0x68] sm:$0xff]
        %v2167 = vld [vmem:[%s2152 + $0x70] sm:$0xff]
        %v2168 = vld [vmem:[%s2152 + $0x78] sm:$0xff]
        %2169 = vmatprep.subr.mxu0 0.0
        %2170 = vmatpush1.msra.mxu0 %v2153
        %2171 = vmatprep.subr.mxu0 0.0
        %2172 = vmatpush1.msra.mxu0 %v2154
        %2173 = vmatprep.subr.mxu0 0.0
        %2174 = vmatpush1.msra.mxu0 %v2155
        %2175 = vmatprep.subr.mxu0 0.0
        %2176 = vmatpush1.msra.mxu0 %v2156
        %2177 = vmatprep.subr.mxu0 0.0
        %2178 = vmatpush1.msra.mxu0 %v2157
        %2179 = vmatprep.subr.mxu0 0.0
        %2180 = vmatpush1.msra.mxu0 %v2158
        %2181 = vmatprep.subr.mxu0 0.0
        %2182 = vmatpush1.msra.mxu0 %v2159
        %2183 = vmatprep.subr.mxu0 0.0
        %2184 = vmatpush1.msra.mxu0 %v2160
        %2185 = vmatprep.subr.mxu0 0.0
        %2186 = vmatpush1.msra.mxu0 %v2161
        %2187 = vmatprep.subr.mxu0 0.0
        %2188 = vmatpush1.msra.mxu0 %v2162
        %2189 = vmatprep.subr.mxu0 0.0
        %2190 = vmatpush1.msra.mxu0 %v2163
        %2191 = vmatprep.subr.mxu0 0.0
        %2192 = vmatpush1.msra.mxu0 %v2164
        %2193 = vmatprep.subr.mxu0 0.0
        %2194 = vmatpush1.msra.mxu0 %v2165
        %2195 = vmatprep.subr.mxu0 0.0
        %2196 = vmatpush1.msra.mxu0 %v2166
        %2197 = vmatprep.subr.mxu0 0.0
        %2198 = vmatpush1.msra.mxu0 %v2167
        %2199 = vmatprep.subr.mxu0 0.0
        %2200 = vmatpush1.msra.mxu0 %v2168
        %2201 = vmatprep.subr.mxu0 0.0
        %2202 = vmatpush1.msra.mxu0 0.0
        %2203 = vmatprep.subr.mxu0 0.0
        %2204 = vmatpush1.msra.mxu0 0.0
        %2205 = vmatprep.subr.mxu0 0.0
        %2206 = vmatpush1.msra.mxu0 0.0
        %2207 = vmatprep.subr.mxu0 0.0
        %2208 = vmatpush1.msra.mxu0 0.0
        %2209 = vmatprep.subr.mxu0 0.0
        %2210 = vmatpush1.msra.mxu0 0.0
        %2211 = vmatprep.subr.mxu0 0.0
        %2212 = vmatpush1.msra.mxu0 0.0
        %2213 = vmatprep.subr.mxu0 0.0
        %2214 = vmatpush1.msra.mxu0 0.0
        %2215 = vmatprep.subr.mxu0 0.0
        %2216 = vmatpush1.msra.mxu0 0.0
        %2217 = vmatprep.subr.mxu0 0.0
        %2218 = vmatpush1.msra.mxu0 0.0
        %2219 = vmatprep.subr.mxu0 0.0
        %2220 = vmatpush1.msra.mxu0 0.0
        %2221 = vmatprep.subr.mxu0 0.0
        %2222 = vmatpush1.msra.mxu0 0.0
        %2223 = vmatprep.subr.mxu0 0.0
        %2224 = vmatpush1.msra.mxu0 0.0
        %2225 = vmatprep.subr.mxu0 0.0
        %2226 = vmatpush1.msra.mxu0 0.0
        %2227 = vmatprep.subr.mxu0 0.0
        %2228 = vmatpush1.msra.mxu0 0.0
        %2229 = vmatprep.subr.mxu0 0.0
        %2230 = vmatpush1.msra.mxu0 0.0
        %2231 = vmatprep.subr.mxu0 0.0
        %2232 = vmatpush1.msra.mxu0 0.0
        %2233 = vmatprep.mubr.f32.mxu0 0.0
        %2234 = vmatmul.mubr.f32.gmra.mrb[0].mxu0 %v2120
        %v2235 = vpop.f32.mrb[0].mxu0
        %v2236 = vadd.f32 0.0, %v2235
        %v2237 = vpop.f32.mrb[0].mxu0
        %2238 = vmatprep.mubr.f32.mxu0 0.0
        %2239 = vmatmul.mubr.f32.gmra.mrb[0].mxu0 %v2121
        %v2240 = vpop.f32.mrb[0].mxu0
        %v2241 = vadd.f32 0.0, %v2240
        %v2242 = vpop.f32.mrb[0].mxu0
        %2243 = vmatprep.mubr.f32.mxu0 0.0
        %2244 = vmatmul.mubr.f32.gmra.mrb[0].mxu0 %v2122
        %v2245 = vpop.f32.mrb[0].mxu0
        %v2246 = vadd.f32 0.0, %v2245
        %v2247 = vpop.f32.mrb[0].mxu0
        %2248 = vmatprep.mubr.f32.mxu0 0.0
        %2249 = vmatmul.mubr.f32.gmra.mrb[0].mxu0 %v2123
        %v2250 = vpop.f32.mrb[0].mxu0
        %v2251 = vadd.f32 0.0, %v2250
        %v2252 = vpop.f32.mrb[0].mxu0
        %2253 = vmatprep.mubr.f32.mxu0 0.0
        %2254 = vmatmul.mubr.f32.gmra.mrb[0].mxu0 %v2124
        %v2255 = vpop.f32.mrb[0].mxu0
        %v2256 = vadd.f32 0.0, %v2255
        %v2257 = vpop.f32.mrb[0].mxu0
        %2258 = vmatprep.mubr.f32.mxu0 0.0
        %2259 = vmatmul.mubr.f32.gmra.mrb[0].mxu0 %v2125
        %v2260 = vpop.f32.mrb[0].mxu0
        %v2261 = vadd.f32 0.0, %v2260
        %v2262 = vpop.f32.mrb[0].mxu0
        %2263 = vmatprep.mubr.f32.mxu0 0.0
        %2264 = vmatmul.mubr.f32.gmra.mrb[0].mxu0 %v2126
        %v2265 = vpop.f32.mrb[0].mxu0
        %v2266 = vadd.f32 0.0, %v2265
        %v2267 = vpop.f32.mrb[0].mxu0
        %2268 = vmatprep.mubr.f32.mxu0 0.0
        %2269 = vmatmul.mubr.f32.gmra.mrb[0].mxu0 %v2127
        %v2270 = vpop.f32.mrb[0].mxu0
        %v2271 = vadd.f32 0.0, %v2270
        %v2272 = vpop.f32.mrb[0].mxu0
        %2273 = vmatprep.mubr.f32.mxu0 0.0
        %2274 = vmatmul.mubr.f32.gmra.mrb[0].mxu0 %v2128
        %v2275 = vpop.f32.mrb[0].mxu0
        %v2276 = vadd.f32 0.0, %v2275
        %v2277 = vpop.f32.mrb[0].mxu0
        %2278 = vmatprep.mubr.f32.mxu0 0.0
        %2279 = vmatmul.mubr.f32.gmra.mrb[0].mxu0 %v2129
        %v2280 = vpop.f32.mrb[0].mxu0
        %v2281 = vadd.f32 0.0, %v2280
        %v2282 = vpop.f32.mrb[0].mxu0
        %2283 = vmatprep.mubr.f32.mxu0 0.0
        %2284 = vmatmul.mubr.f32.gmra.mrb[0].mxu0 %v2130
        %v2285 = vpop.f32.mrb[0].mxu0
        %v2286 = vadd.f32 0.0, %v2285
        %v2287 = vpop.f32.mrb[0].mxu0
        %2288 = vmatprep.mubr.f32.mxu0 0.0
        %2289 = vmatmul.mubr.f32.gmra.mrb[0].mxu0 %v2131
        %v2290 = vpop.f32.mrb[0].mxu0
        %v2291 = vadd.f32 0.0, %v2290
        %v2292 = vpop.f32.mrb[0].mxu0
        %2293 = vmatprep.mubr.f32.mxu0 0.0
        %2294 = vmatmul.mubr.f32.gmra.mrb[0].mxu0 %v2132
        %v2295 = vpop.f32.mrb[0].mxu0
        %v2296 = vadd.f32 0.0, %v2295
        %v2297 = vpop.f32.mrb[0].mxu0
        %2298 = vmatprep.mubr.f32.mxu0 0.0
        %2299 = vmatmul.mubr.f32.gmra.mrb[0].mxu0 %v2133
        %v2300 = vpop.f32.mrb[0].mxu0
        %v2301 = vadd.f32 0.0, %v2300
        %v2302 = vpop.f32.mrb[0].mxu0
        %2303 = vmatprep.mubr.f32.mxu0 0.0
        %2304 = vmatmul.mubr.f32.gmra.mrb[0].mxu0 %v2134
        %v2305 = vpop.f32.mrb[0].mxu0
        %v2306 = vadd.f32 0.0, %v2305
        %v2307 = vpop.f32.mrb[0].mxu0
        %2308 = vmatprep.mubr.f32.mxu0 0.0
        %2309 = vmatmul.mubr.f32.gmra.mrb[0].mxu0 %v2135
        %v2310 = vpop.f32.mrb[0].mxu0
        %v2311 = vadd.f32 0.0, %v2310
        %v2312 = vpop.f32.mrb[0].mxu0
        %2313 = vmatprep.mubr.f32.mxu0 0.0
        %2314 = vmatmul.mubr.f32.gmra.mrb[0].mxu0 %v2136
        %v2315 = vpop.f32.mrb[0].mxu0
        %v2316 = vadd.f32 0.0, %v2315
        %v2317 = vpop.f32.mrb[0].mxu0
        %2318 = vmatprep.mubr.f32.mxu0 0.0
        %2319 = vmatmul.mubr.f32.gmra.mrb[0].mxu0 %v2137
        %v2320 = vpop.f32.mrb[0].mxu0
        %v2321 = vadd.f32 0.0, %v2320
        %v2322 = vpop.f32.mrb[0].mxu0
        %2323 = vmatprep.mubr.f32.mxu0 0.0
        %2324 = vmatmul.mubr.f32.gmra.mrb[0].mxu0 %v2138
        %v2325 = vpop.f32.mrb[0].mxu0
        %v2326 = vadd.f32 0.0, %v2325
        %v2327 = vpop.f32.mrb[0].mxu0
        %2328 = vmatprep.mubr.f32.mxu0 0.0
        %2329 = vmatmul.mubr.f32.gmra.mrb[0].mxu0 %v2139
        %v2330 = vpop.f32.mrb[0].mxu0
        %v2331 = vadd.f32 0.0, %v2330
        %v2332 = vpop.f32.mrb[0].mxu0
        %2333 = vmatprep.mubr.f32.mxu0 0.0
        %2334 = vmatmul.mubr.f32.gmra.mrb[0].mxu0 %v2140
        %v2335 = vpop.f32.mrb[0].mxu0
        %v2336 = vadd.f32 0.0, %v2335
        %v2337 = vpop.f32.mrb[0].mxu0
        %2338 = vmatprep.mubr.f32.mxu0 0.0
        %2339 = vmatmul.mubr.f32.gmra.mrb[0].mxu0 %v2141
        %v2340 = vpop.f32.mrb[0].mxu0
        %v2341 = vadd.f32 0.0, %v2340
        %v2342 = vpop.f32.mrb[0].mxu0
        %2343 = vmatprep.mubr.f32.mxu0 0.0
        %2344 = vmatmul.mubr.f32.gmra.mrb[0].mxu0 %v2142
        %v2345 = vpop.f32.mrb[0].mxu0
        %v2346 = vadd.f32 0.0, %v2345
        %v2347 = vpop.f32.mrb[0].mxu0
        %2348 = vmatprep.mubr.f32.mxu0 0.0
        %2349 = vmatmul.mubr.f32.gmra.mrb[0].mxu0 %v2143
        %v2350 = vpop.f32.mrb[0].mxu0
        %v2351 = vadd.f32 0.0, %v2350
        %v2352 = vpop.f32.mrb[0].mxu0
        %2353 = vmatprep.mubr.f32.mxu0 0.0
        %2354 = vmatmul.mubr.f32.gmra.mrb[0].mxu0 %v2144
        %v2355 = vpop.f32.mrb[0].mxu0
        %v2356 = vadd.f32 0.0, %v2355
        %v2357 = vpop.f32.mrb[0].mxu0
        %2358 = vmatprep.mubr.f32.mxu0 0.0
        %2359 = vmatmul.mubr.f32.gmra.mrb[0].mxu0 %v2145
        %v2360 = vpop.f32.mrb[0].mxu0
        %v2361 = vadd.f32 0.0, %v2360
        %v2362 = vpop.f32.mrb[0].mxu0
        %2363 = vmatprep.mubr.f32.mxu0 0.0
        %2364 = vmatmul.mubr.f32.gmra.mrb[0].mxu0 %v2146
        %v2365 = vpop.f32.mrb[0].mxu0
        %v2366 = vadd.f32 0.0, %v2365
        %v2367 = vpop.f32.mrb[0].mxu0
        %2368 = vmatprep.mubr.f32.mxu0 0.0
        %2369 = vmatmul.mubr.f32.gmra.mrb[0].mxu0 %v2147
        %v2370 = vpop.f32.mrb[0].mxu0
        %v2371 = vadd.f32 0.0, %v2370
        %v2372 = vpop.f32.mrb[0].mxu0
        %2373 = vmatprep.mubr.f32.mxu0 0.0
        %2374 = vmatmul.mubr.f32.gmra.mrb[0].mxu0 %v2148
        %v2375 = vpop.f32.mrb[0].mxu0
        %v2376 = vadd.f32 0.0, %v2375
        %v2377 = vpop.f32.mrb[0].mxu0
        %2378 = vmatprep.mubr.f32.mxu0 0.0
        %2379 = vmatmul.mubr.f32.gmra.mrb[0].mxu0 %v2149
        %v2380 = vpop.f32.mrb[0].mxu0
        %v2381 = vadd.f32 0.0, %v2380
        %v2382 = vpop.f32.mrb[0].mxu0
        %2383 = vmatprep.mubr.f32.mxu0 0.0
        %2384 = vmatmul.mubr.f32.gmra.mrb[0].mxu0 %v2150
        %v2385 = vpop.f32.mrb[0].mxu0
        %v2386 = vadd.f32 0.0, %v2385
        %v2387 = vpop.f32.mrb[0].mxu0
        %2388 = vmatprep.mubr.f32.mxu0 0.0
        %2389 = vmatmul.mubr.f32.gmra.mrb[0].mxu0 %v2151
        %v2390 = vpop.f32.mrb[0].mxu0
        %v2391 = vadd.f32 0.0, %v2390
        %v2392 = vpop.f32.mrb[0].mxu0
        %2393 = vdwg.mxu0
        %v2394 = vadd.f32 %v2088, %v2236
        %v2395 = vadd.f32 %v2089, %v2241
        %v2396 = vadd.f32 %v2090, %v2246
        %v2397 = vadd.f32 %v2091, %v2251
        %v2398 = vadd.f32 %v2092, %v2256
        %v2399 = vadd.f32 %v2093, %v2261
        %v2400 = vadd.f32 %v2094, %v2266
        %v2401 = vadd.f32 %v2095, %v2271
        %v2402 = vadd.f32 %v2096, %v2276
        %v2403 = vadd.f32 %v2097, %v2281
        %v2404 = vadd.f32 %v2098, %v2286
        %v2405 = vadd.f32 %v2099, %v2291
        %v2406 = vadd.f32 %v2100, %v2296
        %v2407 = vadd.f32 %v2101, %v2301
        %v2408 = vadd.f32 %v2102, %v2306
        %v2409 = vadd.f32 %v2103, %v2311
        %v2410 = vadd.f32 %v2104, %v2316
        %v2411 = vadd.f32 %v2105, %v2321
        %v2412 = vadd.f32 %v2106, %v2326
        %v2413 = vadd.f32 %v2107, %v2331
        %v2414 = vadd.f32 %v2108, %v2336
        %v2415 = vadd.f32 %v2109, %v2341
        %v2416 = vadd.f32 %v2110, %v2346
        %v2417 = vadd.f32 %v2111, %v2351
        %v2418 = vadd.f32 %v2112, %v2356
        %v2419 = vadd.f32 %v2113, %v2361
        %v2420 = vadd.f32 %v2114, %v2366
        %v2421 = vadd.f32 %v2115, %v2371
        %v2422 = vadd.f32 %v2116, %v2376
        %v2423 = vadd.f32 %v2117, %v2381
        %v2424 = vadd.f32 %v2118, %v2386
        %v2425 = vadd.f32 %v2119, %v2391
        %s2426 = sadd.s32 96, %s587
        %s2427 = scalar_lea.vmem [#allocation2], %s2426
        %v2428 = vld [vmem:[%s2427] sm:$0xff]
        %v2429 = vld [vmem:[%s2427 + $0x8] sm:$0xff]
        %v2430 = vld [vmem:[%s2427 + $0x18] sm:$0xff]
        %v2431 = vld [vmem:[%s2427 + $0x20] sm:$0xff]
        %v2432 = vld [vmem:[%s2427 + $0x30] sm:$0xff]
        %v2433 = vld [vmem:[%s2427 + $0x38] sm:$0xff]
        %v2434 = vld [vmem:[%s2427 + $0x48] sm:$0xff]
        %v2435 = vld [vmem:[%s2427 + $0x50] sm:$0xff]
        %v2436 = vld [vmem:[%s2427 + $0x60] sm:$0xff]
        %v2437 = vld [vmem:[%s2427 + $0x68] sm:$0xff]
        %v2438 = vld [vmem:[%s2427 + $0x78] sm:$0xff]
        %v2439 = vld [vmem:[%s2427 + $0x80] sm:$0xff]
        %v2440 = vld [vmem:[%s2427 + $0x90] sm:$0xff]
        %v2441 = vld [vmem:[%s2427 + $0x98] sm:$0xff]
        %v2442 = vld [vmem:[%s2427 + $0xa8] sm:$0xff]
        %v2443 = vld [vmem:[%s2427 + $0xb0] sm:$0xff]
        %v2444 = vld [vmem:[%s2427 + $0xc0] sm:$0xff]
        %v2445 = vld [vmem:[%s2427 + $0xc8] sm:$0xff]
        %v2446 = vld [vmem:[%s2427 + $0xd8] sm:$0xff]
        %v2447 = vld [vmem:[%s2427 + $0xe0] sm:$0xff]
        %v2448 = vld [vmem:[%s2427 + $0xf0] sm:$0xff]
        %v2449 = vld [vmem:[%s2427 + $0xf8] sm:$0xff]
        %v2450 = vld [vmem:[%s2427 + $0x108] sm:$0xff]
        %v2451 = vld [vmem:[%s2427 + $0x110] sm:$0xff]
        %v2452 = vld [vmem:[%s2427 + $0x120] sm:$0xff]
        %v2453 = vld [vmem:[%s2427 + $0x128] sm:$0xff]
        %v2454 = vld [vmem:[%s2427 + $0x138] sm:$0xff]
        %v2455 = vld [vmem:[%s2427 + $0x140] sm:$0xff]
        %v2456 = vld [vmem:[%s2427 + $0x150] sm:$0xff]
        %v2457 = vld [vmem:[%s2427 + $0x158] sm:$0xff]
        %v2458 = vld [vmem:[%s2427 + $0x168] sm:$0xff]
        %v2459 = vld [vmem:[%s2427 + $0x170] sm:$0xff]
        %s2460 = scalar_lea.vmem %s1, 768
        %v2461 = vld [vmem:[%s2460] sm:$0xff]
        %v2462 = vld [vmem:[%s2460 + $0x8] sm:$0xff]
        %v2463 = vld [vmem:[%s2460 + $0x10] sm:$0xff]
        %v2464 = vld [vmem:[%s2460 + $0x18] sm:$0xff]
        %v2465 = vld [vmem:[%s2460 + $0x20] sm:$0xff]
        %v2466 = vld [vmem:[%s2460 + $0x28] sm:$0xff]
        %v2467 = vld [vmem:[%s2460 + $0x30] sm:$0xff]
        %v2468 = vld [vmem:[%s2460 + $0x38] sm:$0xff]
        %v2469 = vld [vmem:[%s2460 + $0x40] sm:$0xff]
        %v2470 = vld [vmem:[%s2460 + $0x48] sm:$0xff]
        %v2471 = vld [vmem:[%s2460 + $0x50] sm:$0xff]
        %v2472 = vld [vmem:[%s2460 + $0x58] sm:$0xff]
        %v2473 = vld [vmem:[%s2460 + $0x60] sm:$0xff]
        %v2474 = vld [vmem:[%s2460 + $0x68] sm:$0xff]
        %v2475 = vld [vmem:[%s2460 + $0x70] sm:$0xff]
        %v2476 = vld [vmem:[%s2460 + $0x78] sm:$0xff]
        %2477 = vmatprep.subr.mxu0 0.0
        %2478 = vmatpush1.msra.mxu0 %v2461
        %2479 = vmatprep.subr.mxu0 0.0
        %2480 = vmatpush1.msra.mxu0 %v2462
        %2481 = vmatprep.subr.mxu0 0.0
        %2482 = vmatpush1.msra.mxu0 %v2463
        %2483 = vmatprep.subr.mxu0 0.0
        %2484 = vmatpush1.msra.mxu0 %v2464
        %2485 = vmatprep.subr.mxu0 0.0
        %2486 = vmatpush1.msra.mxu0 %v2465
        %2487 = vmatprep.subr.mxu0 0.0
        %2488 = vmatpush1.msra.mxu0 %v2466
        %2489 = vmatprep.subr.mxu0 0.0
        %2490 = vmatpush1.msra.mxu0 %v2467
        %2491 = vmatprep.subr.mxu0 0.0
        %2492 = vmatpush1.msra.mxu0 %v2468
        %2493 = vmatprep.subr.mxu0 0.0
        %2494 = vmatpush1.msra.mxu0 %v2469
        %2495 = vmatprep.subr.mxu0 0.0
        %2496 = vmatpush1.msra.mxu0 %v2470
        %2497 = vmatprep.subr.mxu0 0.0
        %2498 = vmatpush1.msra.mxu0 %v2471
        %2499 = vmatprep.subr.mxu0 0.0
        %2500 = vmatpush1.msra.mxu0 %v2472
        %2501 = vmatprep.subr.mxu0 0.0
        %2502 = vmatpush1.msra.mxu0 %v2473
        %2503 = vmatprep.subr.mxu0 0.0
        %2504 = vmatpush1.msra.mxu0 %v2474
        %2505 = vmatprep.subr.mxu0 0.0
        %2506 = vmatpush1.msra.mxu0 %v2475
        %2507 = vmatprep.subr.mxu0 0.0
        %2508 = vmatpush1.msra.mxu0 %v2476
        %2509 = vmatprep.subr.mxu0 0.0
        %2510 = vmatpush1.msra.mxu0 0.0
        %2511 = vmatprep.subr.mxu0 0.0
        %2512 = vmatpush1.msra.mxu0 0.0
        %2513 = vmatprep.subr.mxu0 0.0
        %2514 = vmatpush1.msra.mxu0 0.0
        %2515 = vmatprep.subr.mxu0 0.0
        %2516 = vmatpush1.msra.mxu0 0.0
        %2517 = vmatprep.subr.mxu0 0.0
        %2518 = vmatpush1.msra.mxu0 0.0
        %2519 = vmatprep.subr.mxu0 0.0
        %2520 = vmatpush1.msra.mxu0 0.0
        %2521 = vmatprep.subr.mxu0 0.0
        %2522 = vmatpush1.msra.mxu0 0.0
        %2523 = vmatprep.subr.mxu0 0.0
        %2524 = vmatpush1.msra.mxu0 0.0
        %2525 = vmatprep.subr.mxu0 0.0
        %2526 = vmatpush1.msra.mxu0 0.0
        %2527 = vmatprep.subr.mxu0 0.0
        %2528 = vmatpush1.msra.mxu0 0.0
        %2529 = vmatprep.subr.mxu0 0.0
        %2530 = vmatpush1.msra.mxu0 0.0
        %2531 = vmatprep.subr.mxu0 0.0
        %2532 = vmatpush1.msra.mxu0 0.0
        %2533 = vmatprep.subr.mxu0 0.0
        %2534 = vmatpush1.msra.mxu0 0.0
        %2535 = vmatprep.subr.mxu0 0.0
        %2536 = vmatpush1.msra.mxu0 0.0
        %2537 = vmatprep.subr.mxu0 0.0
        %2538 = vmatpush1.msra.mxu0 0.0
        %2539 = vmatprep.subr.mxu0 0.0
        %2540 = vmatpush1.msra.mxu0 0.0
        %2541 = vmatprep.mubr.f32.mxu0 0.0
        %2542 = vmatmul.mubr.f32.gmra.mrb[0].mxu0 %v2428
        %v2543 = vpop.f32.mrb[0].mxu0
        %v2544 = vadd.f32 0.0, %v2543
        %v2545 = vpop.f32.mrb[0].mxu0
        %2546 = vmatprep.mubr.f32.mxu0 0.0
        %2547 = vmatmul.mubr.f32.gmra.mrb[0].mxu0 %v2429
        %v2548 = vpop.f32.mrb[0].mxu0
        %v2549 = vadd.f32 0.0, %v2548
        %v2550 = vpop.f32.mrb[0].mxu0
        %2551 = vmatprep.mubr.f32.mxu0 0.0
        %2552 = vmatmul.mubr.f32.gmra.mrb[0].mxu0 %v2430
        %v2553 = vpop.f32.mrb[0].mxu0
        %v2554 = vadd.f32 0.0, %v2553
        %v2555 = vpop.f32.mrb[0].mxu0
        %2556 = vmatprep.mubr.f32.mxu0 0.0
        %2557 = vmatmul.mubr.f32.gmra.mrb[0].mxu0 %v2431
        %v2558 = vpop.f32.mrb[0].mxu0
        %v2559 = vadd.f32 0.0, %v2558
        %v2560 = vpop.f32.mrb[0].mxu0
        %2561 = vmatprep.mubr.f32.mxu0 0.0
        %2562 = vmatmul.mubr.f32.gmra.mrb[0].mxu0 %v2432
        %v2563 = vpop.f32.mrb[0].mxu0
        %v2564 = vadd.f32 0.0, %v2563
        %v2565 = vpop.f32.mrb[0].mxu0
        %2566 = vmatprep.mubr.f32.mxu0 0.0
        %2567 = vmatmul.mubr.f32.gmra.mrb[0].mxu0 %v2433
        %v2568 = vpop.f32.mrb[0].mxu0
        %v2569 = vadd.f32 0.0, %v2568
        %v2570 = vpop.f32.mrb[0].mxu0
        %2571 = vmatprep.mubr.f32.mxu0 0.0
        %2572 = vmatmul.mubr.f32.gmra.mrb[0].mxu0 %v2434
        %v2573 = vpop.f32.mrb[0].mxu0
        %v2574 = vadd.f32 0.0, %v2573
        %v2575 = vpop.f32.mrb[0].mxu0
        %2576 = vmatprep.mubr.f32.mxu0 0.0
        %2577 = vmatmul.mubr.f32.gmra.mrb[0].mxu0 %v2435
        %v2578 = vpop.f32.mrb[0].mxu0
        %v2579 = vadd.f32 0.0, %v2578
        %v2580 = vpop.f32.mrb[0].mxu0
        %2581 = vmatprep.mubr.f32.mxu0 0.0
        %2582 = vmatmul.mubr.f32.gmra.mrb[0].mxu0 %v2436
        %v2583 = vpop.f32.mrb[0].mxu0
        %v2584 = vadd.f32 0.0, %v2583
        %v2585 = vpop.f32.mrb[0].mxu0
        %2586 = vmatprep.mubr.f32.mxu0 0.0
        %2587 = vmatmul.mubr.f32.gmra.mrb[0].mxu0 %v2437
        %v2588 = vpop.f32.mrb[0].mxu0
        %v2589 = vadd.f32 0.0, %v2588
        %v2590 = vpop.f32.mrb[0].mxu0
        %2591 = vmatprep.mubr.f32.mxu0 0.0
        %2592 = vmatmul.mubr.f32.gmra.mrb[0].mxu0 %v2438
        %v2593 = vpop.f32.mrb[0].mxu0
        %v2594 = vadd.f32 0.0, %v2593
        %v2595 = vpop.f32.mrb[0].mxu0
        %2596 = vmatprep.mubr.f32.mxu0 0.0
        %2597 = vmatmul.mubr.f32.gmra.mrb[0].mxu0 %v2439
        %v2598 = vpop.f32.mrb[0].mxu0
        %v2599 = vadd.f32 0.0, %v2598
        %v2600 = vpop.f32.mrb[0].mxu0
        %2601 = vmatprep.mubr.f32.mxu0 0.0
        %2602 = vmatmul.mubr.f32.gmra.mrb[0].mxu0 %v2440
        %v2603 = vpop.f32.mrb[0].mxu0
        %v2604 = vadd.f32 0.0, %v2603
        %v2605 = vpop.f32.mrb[0].mxu0
        %2606 = vmatprep.mubr.f32.mxu0 0.0
        %2607 = vmatmul.mubr.f32.gmra.mrb[0].mxu0 %v2441
        %v2608 = vpop.f32.mrb[0].mxu0
        %v2609 = vadd.f32 0.0, %v2608
        %v2610 = vpop.f32.mrb[0].mxu0
        %2611 = vmatprep.mubr.f32.mxu0 0.0
        %2612 = vmatmul.mubr.f32.gmra.mrb[0].mxu0 %v2442
        %v2613 = vpop.f32.mrb[0].mxu0
        %v2614 = vadd.f32 0.0, %v2613
        %v2615 = vpop.f32.mrb[0].mxu0
        %2616 = vmatprep.mubr.f32.mxu0 0.0
        %2617 = vmatmul.mubr.f32.gmra.mrb[0].mxu0 %v2443
        %v2618 = vpop.f32.mrb[0].mxu0
        %v2619 = vadd.f32 0.0, %v2618
        %v2620 = vpop.f32.mrb[0].mxu0
        %2621 = vmatprep.mubr.f32.mxu0 0.0
        %2622 = vmatmul.mubr.f32.gmra.mrb[0].mxu0 %v2444
        %v2623 = vpop.f32.mrb[0].mxu0
        %v2624 = vadd.f32 0.0, %v2623
        %v2625 = vpop.f32.mrb[0].mxu0
        %2626 = vmatprep.mubr.f32.mxu0 0.0
        %2627 = vmatmul.mubr.f32.gmra.mrb[0].mxu0 %v2445
        %v2628 = vpop.f32.mrb[0].mxu0
        %v2629 = vadd.f32 0.0, %v2628
        %v2630 = vpop.f32.mrb[0].mxu0
        %2631 = vmatprep.mubr.f32.mxu0 0.0
        %2632 = vmatmul.mubr.f32.gmra.mrb[0].mxu0 %v2446
        %v2633 = vpop.f32.mrb[0].mxu0
        %v2634 = vadd.f32 0.0, %v2633
        %v2635 = vpop.f32.mrb[0].mxu0
        %2636 = vmatprep.mubr.f32.mxu0 0.0
        %2637 = vmatmul.mubr.f32.gmra.mrb[0].mxu0 %v2447
        %v2638 = vpop.f32.mrb[0].mxu0
        %v2639 = vadd.f32 0.0, %v2638
        %v2640 = vpop.f32.mrb[0].mxu0
        %2641 = vmatprep.mubr.f32.mxu0 0.0
        %2642 = vmatmul.mubr.f32.gmra.mrb[0].mxu0 %v2448
        %v2643 = vpop.f32.mrb[0].mxu0
        %v2644 = vadd.f32 0.0, %v2643
        %v2645 = vpop.f32.mrb[0].mxu0
        %2646 = vmatprep.mubr.f32.mxu0 0.0
        %2647 = vmatmul.mubr.f32.gmra.mrb[0].mxu0 %v2449
        %v2648 = vpop.f32.mrb[0].mxu0
        %v2649 = vadd.f32 0.0, %v2648
        %v2650 = vpop.f32.mrb[0].mxu0
        %2651 = vmatprep.mubr.f32.mxu0 0.0
        %2652 = vmatmul.mubr.f32.gmra.mrb[0].mxu0 %v2450
        %v2653 = vpop.f32.mrb[0].mxu0
        %v2654 = vadd.f32 0.0, %v2653
        %v2655 = vpop.f32.mrb[0].mxu0
        %2656 = vmatprep.mubr.f32.mxu0 0.0
        %2657 = vmatmul.mubr.f32.gmra.mrb[0].mxu0 %v2451
        %v2658 = vpop.f32.mrb[0].mxu0
        %v2659 = vadd.f32 0.0, %v2658
        %v2660 = vpop.f32.mrb[0].mxu0
        %2661 = vmatprep.mubr.f32.mxu0 0.0
        %2662 = vmatmul.mubr.f32.gmra.mrb[0].mxu0 %v2452
        %v2663 = vpop.f32.mrb[0].mxu0
        %v2664 = vadd.f32 0.0, %v2663
        %v2665 = vpop.f32.mrb[0].mxu0
        %2666 = vmatprep.mubr.f32.mxu0 0.0
        %2667 = vmatmul.mubr.f32.gmra.mrb[0].mxu0 %v2453
        %v2668 = vpop.f32.mrb[0].mxu0
        %v2669 = vadd.f32 0.0, %v2668
        %v2670 = vpop.f32.mrb[0].mxu0
        %2671 = vmatprep.mubr.f32.mxu0 0.0
        %2672 = vmatmul.mubr.f32.gmra.mrb[0].mxu0 %v2454
        %v2673 = vpop.f32.mrb[0].mxu0
        %v2674 = vadd.f32 0.0, %v2673
        %v2675 = vpop.f32.mrb[0].mxu0
        %2676 = vmatprep.mubr.f32.mxu0 0.0
        %2677 = vmatmul.mubr.f32.gmra.mrb[0].mxu0 %v2455
        %v2678 = vpop.f32.mrb[0].mxu0
        %v2679 = vadd.f32 0.0, %v2678
        %v2680 = vpop.f32.mrb[0].mxu0
        %2681 = vmatprep.mubr.f32.mxu0 0.0
        %2682 = vmatmul.mubr.f32.gmra.mrb[0].mxu0 %v2456
        %v2683 = vpop.f32.mrb[0].mxu0
        %v2684 = vadd.f32 0.0, %v2683
        %v2685 = vpop.f32.mrb[0].mxu0
        %2686 = vmatprep.mubr.f32.mxu0 0.0
        %2687 = vmatmul.mubr.f32.gmra.mrb[0].mxu0 %v2457
        %v2688 = vpop.f32.mrb[0].mxu0
        %v2689 = vadd.f32 0.0, %v2688
        %v2690 = vpop.f32.mrb[0].mxu0
        %2691 = vmatprep.mubr.f32.mxu0 0.0
        %2692 = vmatmul.mubr.f32.gmra.mrb[0].mxu0 %v2458
        %v2693 = vpop.f32.mrb[0].mxu0
        %v2694 = vadd.f32 0.0, %v2693
        %v2695 = vpop.f32.mrb[0].mxu0
        %2696 = vmatprep.mubr.f32.mxu0 0.0
        %2697 = vmatmul.mubr.f32.gmra.mrb[0].mxu0 %v2459
        %v2698 = vpop.f32.mrb[0].mxu0
        %v2699 = vadd.f32 0.0, %v2698
        %v2700 = vpop.f32.mrb[0].mxu0
        %2701 = vdwg.mxu0
        %v2702 = vadd.f32 %v2394, %v2544
        %v2703 = vadd.f32 %v2395, %v2549
        %v2704 = vadd.f32 %v2396, %v2554
        %v2705 = vadd.f32 %v2397, %v2559
        %v2706 = vadd.f32 %v2398, %v2564
        %v2707 = vadd.f32 %v2399, %v2569
        %v2708 = vadd.f32 %v2400, %v2574
        %v2709 = vadd.f32 %v2401, %v2579
        %v2710 = vadd.f32 %v2402, %v2584
        %v2711 = vadd.f32 %v2403, %v2589
        %v2712 = vadd.f32 %v2404, %v2594
        %v2713 = vadd.f32 %v2405, %v2599
        %v2714 = vadd.f32 %v2406, %v2604
        %v2715 = vadd.f32 %v2407, %v2609
        %v2716 = vadd.f32 %v2408, %v2614
        %v2717 = vadd.f32 %v2409, %v2619
        %v2718 = vadd.f32 %v2410, %v2624
        %v2719 = vadd.f32 %v2411, %v2629
        %v2720 = vadd.f32 %v2412, %v2634
        %v2721 = vadd.f32 %v2413, %v2639
        %v2722 = vadd.f32 %v2414, %v2644
        %v2723 = vadd.f32 %v2415, %v2649
        %v2724 = vadd.f32 %v2416, %v2654
        %v2725 = vadd.f32 %v2417, %v2659
        %v2726 = vadd.f32 %v2418, %v2664
        %v2727 = vadd.f32 %v2419, %v2669
        %v2728 = vadd.f32 %v2420, %v2674
        %v2729 = vadd.f32 %v2421, %v2679
        %v2730 = vadd.f32 %v2422, %v2684
        %v2731 = vadd.f32 %v2423, %v2689
        %v2732 = vadd.f32 %v2424, %v2694
        %v2733 = vadd.f32 %v2425, %v2699
        %v2734 = vld [vmem:[%s2427 + $0x2] sm:$0xff]
        %v2735 = vld [vmem:[%s2427 + $0xa] sm:$0xff]
        %v2736 = vld [vmem:[%s2427 + $0x1a] sm:$0xff]
        %v2737 = vld [vmem:[%s2427 + $0x22] sm:$0xff]
        %v2738 = vld [vmem:[%s2427 + $0x32] sm:$0xff]
        %v2739 = vld [vmem:[%s2427 + $0x3a] sm:$0xff]
        %v2740 = vld [vmem:[%s2427 + $0x4a] sm:$0xff]
        %v2741 = vld [vmem:[%s2427 + $0x52] sm:$0xff]
        %v2742 = vld [vmem:[%s2427 + $0x62] sm:$0xff]
        %v2743 = vld [vmem:[%s2427 + $0x6a] sm:$0xff]
        %v2744 = vld [vmem:[%s2427 + $0x7a] sm:$0xff]
        %v2745 = vld [vmem:[%s2427 + $0x82] sm:$0xff]
        %v2746 = vld [vmem:[%s2427 + $0x92] sm:$0xff]
        %v2747 = vld [vmem:[%s2427 + $0x9a] sm:$0xff]
        %v2748 = vld [vmem:[%s2427 + $0xaa] sm:$0xff]
        %v2749 = vld [vmem:[%s2427 + $0xb2] sm:$0xff]
        %v2750 = vld [vmem:[%s2427 + $0xc2] sm:$0xff]
        %v2751 = vld [vmem:[%s2427 + $0xca] sm:$0xff]
        %v2752 = vld [vmem:[%s2427 + $0xda] sm:$0xff]
        %v2753 = vld [vmem:[%s2427 + $0xe2] sm:$0xff]
        %v2754 = vld [vmem:[%s2427 + $0xf2] sm:$0xff]
        %v2755 = vld [vmem:[%s2427 + $0xfa] sm:$0xff]
        %v2756 = vld [vmem:[%s2427 + $0x10a] sm:$0xff]
        %v2757 = vld [vmem:[%s2427 + $0x112] sm:$0xff]
        %v2758 = vld [vmem:[%s2427 + $0x122] sm:$0xff]
        %v2759 = vld [vmem:[%s2427 + $0x12a] sm:$0xff]
        %v2760 = vld [vmem:[%s2427 + $0x13a] sm:$0xff]
        %v2761 = vld [vmem:[%s2427 + $0x142] sm:$0xff]
        %v2762 = vld [vmem:[%s2427 + $0x152] sm:$0xff]
        %v2763 = vld [vmem:[%s2427 + $0x15a] sm:$0xff]
        %v2764 = vld [vmem:[%s2427 + $0x16a] sm:$0xff]
        %v2765 = vld [vmem:[%s2427 + $0x172] sm:$0xff]
        %s2766 = scalar_lea.vmem %s1, 896
        %v2767 = vld [vmem:[%s2766] sm:$0xff]
        %v2768 = vld [vmem:[%s2766 + $0x8] sm:$0xff]
        %v2769 = vld [vmem:[%s2766 + $0x10] sm:$0xff]
        %v2770 = vld [vmem:[%s2766 + $0x18] sm:$0xff]
        %v2771 = vld [vmem:[%s2766 + $0x20] sm:$0xff]
        %v2772 = vld [vmem:[%s2766 + $0x28] sm:$0xff]
        %v2773 = vld [vmem:[%s2766 + $0x30] sm:$0xff]
        %v2774 = vld [vmem:[%s2766 + $0x38] sm:$0xff]
        %v2775 = vld [vmem:[%s2766 + $0x40] sm:$0xff]
        %v2776 = vld [vmem:[%s2766 + $0x48] sm:$0xff]
        %v2777 = vld [vmem:[%s2766 + $0x50] sm:$0xff]
        %v2778 = vld [vmem:[%s2766 + $0x58] sm:$0xff]
        %v2779 = vld [vmem:[%s2766 + $0x60] sm:$0xff]
        %v2780 = vld [vmem:[%s2766 + $0x68] sm:$0xff]
        %v2781 = vld [vmem:[%s2766 + $0x70] sm:$0xff]
        %v2782 = vld [vmem:[%s2766 + $0x78] sm:$0xff]
        %2783 = vmatprep.subr.mxu0 0.0
        %2784 = vmatpush1.msra.mxu0 %v2767
        %2785 = vmatprep.subr.mxu0 0.0
        %2786 = vmatpush1.msra.mxu0 %v2768
        %2787 = vmatprep.subr.mxu0 0.0
        %2788 = vmatpush1.msra.mxu0 %v2769
        %2789 = vmatprep.subr.mxu0 0.0
        %2790 = vmatpush1.msra.mxu0 %v2770
        %2791 = vmatprep.subr.mxu0 0.0
        %2792 = vmatpush1.msra.mxu0 %v2771
        %2793 = vmatprep.subr.mxu0 0.0
        %2794 = vmatpush1.msra.mxu0 %v2772
        %2795 = vmatprep.subr.mxu0 0.0
        %2796 = vmatpush1.msra.mxu0 %v2773
        %2797 = vmatprep.subr.mxu0 0.0
        %2798 = vmatpush1.msra.mxu0 %v2774
        %2799 = vmatprep.subr.mxu0 0.0
        %2800 = vmatpush1.msra.mxu0 %v2775
        %2801 = vmatprep.subr.mxu0 0.0
        %2802 = vmatpush1.msra.mxu0 %v2776
        %2803 = vmatprep.subr.mxu0 0.0
        %2804 = vmatpush1.msra.mxu0 %v2777
        %2805 = vmatprep.subr.mxu0 0.0
        %2806 = vmatpush1.msra.mxu0 %v2778
        %2807 = vmatprep.subr.mxu0 0.0
        %2808 = vmatpush1.msra.mxu0 %v2779
        %2809 = vmatprep.subr.mxu0 0.0
        %2810 = vmatpush1.msra.mxu0 %v2780
        %2811 = vmatprep.subr.mxu0 0.0
        %2812 = vmatpush1.msra.mxu0 %v2781
        %2813 = vmatprep.subr.mxu0 0.0
        %2814 = vmatpush1.msra.mxu0 %v2782
        %2815 = vmatprep.subr.mxu0 0.0
        %2816 = vmatpush1.msra.mxu0 0.0
        %2817 = vmatprep.subr.mxu0 0.0
        %2818 = vmatpush1.msra.mxu0 0.0
        %2819 = vmatprep.subr.mxu0 0.0
        %2820 = vmatpush1.msra.mxu0 0.0
        %2821 = vmatprep.subr.mxu0 0.0
        %2822 = vmatpush1.msra.mxu0 0.0
        %2823 = vmatprep.subr.mxu0 0.0
        %2824 = vmatpush1.msra.mxu0 0.0
        %2825 = vmatprep.subr.mxu0 0.0
        %2826 = vmatpush1.msra.mxu0 0.0
        %2827 = vmatprep.subr.mxu0 0.0
        %2828 = vmatpush1.msra.mxu0 0.0
        %2829 = vmatprep.subr.mxu0 0.0
        %2830 = vmatpush1.msra.mxu0 0.0
        %2831 = vmatprep.subr.mxu0 0.0
        %2832 = vmatpush1.msra.mxu0 0.0
        %2833 = vmatprep.subr.mxu0 0.0
        %2834 = vmatpush1.msra.mxu0 0.0
        %2835 = vmatprep.subr.mxu0 0.0
        %2836 = vmatpush1.msra.mxu0 0.0
        %2837 = vmatprep.subr.mxu0 0.0
        %2838 = vmatpush1.msra.mxu0 0.0
        %2839 = vmatprep.subr.mxu0 0.0
        %2840 = vmatpush1.msra.mxu0 0.0
        %2841 = vmatprep.subr.mxu0 0.0
        %2842 = vmatpush1.msra.mxu0 0.0
        %2843 = vmatprep.subr.mxu0 0.0
        %2844 = vmatpush1.msra.mxu0 0.0
        %2845 = vmatprep.subr.mxu0 0.0
        %2846 = vmatpush1.msra.mxu0 0.0
        %2847 = vmatprep.mubr.f32.mxu0 0.0
        %2848 = vmatmul.mubr.f32.gmra.mrb[0].mxu0 %v2734
        %v2849 = vpop.f32.mrb[0].mxu0
        %v2850 = vadd.f32 0.0, %v2849
        %v2851 = vpop.f32.mrb[0].mxu0
        %2852 = vmatprep.mubr.f32.mxu0 0.0
        %2853 = vmatmul.mubr.f32.gmra.mrb[0].mxu0 %v2735
        %v2854 = vpop.f32.mrb[0].mxu0
        %v2855 = vadd.f32 0.0, %v2854
        %v2856 = vpop.f32.mrb[0].mxu0
        %2857 = vmatprep.mubr.f32.mxu0 0.0
        %2858 = vmatmul.mubr.f32.gmra.mrb[0].mxu0 %v2736
        %v2859 = vpop.f32.mrb[0].mxu0
        %v2860 = vadd.f32 0.0, %v2859
        %v2861 = vpop.f32.mrb[0].mxu0
        %2862 = vmatprep.mubr.f32.mxu0 0.0
        %2863 = vmatmul.mubr.f32.gmra.mrb[0].mxu0 %v2737
        %v2864 = vpop.f32.mrb[0].mxu0
        %v2865 = vadd.f32 0.0, %v2864
        %v2866 = vpop.f32.mrb[0].mxu0
        %2867 = vmatprep.mubr.f32.mxu0 0.0
        %2868 = vmatmul.mubr.f32.gmra.mrb[0].mxu0 %v2738
        %v2869 = vpop.f32.mrb[0].mxu0
        %v2870 = vadd.f32 0.0, %v2869
        %v2871 = vpop.f32.mrb[0].mxu0
        %2872 = vmatprep.mubr.f32.mxu0 0.0
        %2873 = vmatmul.mubr.f32.gmra.mrb[0].mxu0 %v2739
        %v2874 = vpop.f32.mrb[0].mxu0
        %v2875 = vadd.f32 0.0, %v2874
        %v2876 = vpop.f32.mrb[0].mxu0
        %2877 = vmatprep.mubr.f32.mxu0 0.0
        %2878 = vmatmul.mubr.f32.gmra.mrb[0].mxu0 %v2740
        %v2879 = vpop.f32.mrb[0].mxu0
        %v2880 = vadd.f32 0.0, %v2879
        %v2881 = vpop.f32.mrb[0].mxu0
        %2882 = vmatprep.mubr.f32.mxu0 0.0
        %2883 = vmatmul.mubr.f32.gmra.mrb[0].mxu0 %v2741
        %v2884 = vpop.f32.mrb[0].mxu0
        %v2885 = vadd.f32 0.0, %v2884
        %v2886 = vpop.f32.mrb[0].mxu0
        %2887 = vmatprep.mubr.f32.mxu0 0.0
        %2888 = vmatmul.mubr.f32.gmra.mrb[0].mxu0 %v2742
        %v2889 = vpop.f32.mrb[0].mxu0
        %v2890 = vadd.f32 0.0, %v2889
        %v2891 = vpop.f32.mrb[0].mxu0
        %2892 = vmatprep.mubr.f32.mxu0 0.0
        %2893 = vmatmul.mubr.f32.gmra.mrb[0].mxu0 %v2743
        %v2894 = vpop.f32.mrb[0].mxu0
        %v2895 = vadd.f32 0.0, %v2894
        %v2896 = vpop.f32.mrb[0].mxu0
        %2897 = vmatprep.mubr.f32.mxu0 0.0
        %2898 = vmatmul.mubr.f32.gmra.mrb[0].mxu0 %v2744
        %v2899 = vpop.f32.mrb[0].mxu0
        %v2900 = vadd.f32 0.0, %v2899
        %v2901 = vpop.f32.mrb[0].mxu0
        %2902 = vmatprep.mubr.f32.mxu0 0.0
        %2903 = vmatmul.mubr.f32.gmra.mrb[0].mxu0 %v2745
        %v2904 = vpop.f32.mrb[0].mxu0
        %v2905 = vadd.f32 0.0, %v2904
        %v2906 = vpop.f32.mrb[0].mxu0
        %2907 = vmatprep.mubr.f32.mxu0 0.0
        %2908 = vmatmul.mubr.f32.gmra.mrb[0].mxu0 %v2746
        %v2909 = vpop.f32.mrb[0].mxu0
        %v2910 = vadd.f32 0.0, %v2909
        %v2911 = vpop.f32.mrb[0].mxu0
        %2912 = vmatprep.mubr.f32.mxu0 0.0
        %2913 = vmatmul.mubr.f32.gmra.mrb[0].mxu0 %v2747
        %v2914 = vpop.f32.mrb[0].mxu0
        %v2915 = vadd.f32 0.0, %v2914
        %v2916 = vpop.f32.mrb[0].mxu0
        %2917 = vmatprep.mubr.f32.mxu0 0.0
        %2918 = vmatmul.mubr.f32.gmra.mrb[0].mxu0 %v2748
        %v2919 = vpop.f32.mrb[0].mxu0
        %v2920 = vadd.f32 0.0, %v2919
        %v2921 = vpop.f32.mrb[0].mxu0
        %2922 = vmatprep.mubr.f32.mxu0 0.0
        %2923 = vmatmul.mubr.f32.gmra.mrb[0].mxu0 %v2749
        %v2924 = vpop.f32.mrb[0].mxu0
        %v2925 = vadd.f32 0.0, %v2924
        %v2926 = vpop.f32.mrb[0].mxu0
        %2927 = vmatprep.mubr.f32.mxu0 0.0
        %2928 = vmatmul.mubr.f32.gmra.mrb[0].mxu0 %v2750
        %v2929 = vpop.f32.mrb[0].mxu0
        %v2930 = vadd.f32 0.0, %v2929
        %v2931 = vpop.f32.mrb[0].mxu0
        %2932 = vmatprep.mubr.f32.mxu0 0.0
        %2933 = vmatmul.mubr.f32.gmra.mrb[0].mxu0 %v2751
        %v2934 = vpop.f32.mrb[0].mxu0
        %v2935 = vadd.f32 0.0, %v2934
        %v2936 = vpop.f32.mrb[0].mxu0
        %2937 = vmatprep.mubr.f32.mxu0 0.0
        %2938 = vmatmul.mubr.f32.gmra.mrb[0].mxu0 %v2752
        %v2939 = vpop.f32.mrb[0].mxu0
        %v2940 = vadd.f32 0.0, %v2939
        %v2941 = vpop.f32.mrb[0].mxu0
        %2942 = vmatprep.mubr.f32.mxu0 0.0
        %2943 = vmatmul.mubr.f32.gmra.mrb[0].mxu0 %v2753
        %v2944 = vpop.f32.mrb[0].mxu0
        %v2945 = vadd.f32 0.0, %v2944
        %v2946 = vpop.f32.mrb[0].mxu0
        %2947 = vmatprep.mubr.f32.mxu0 0.0
        %2948 = vmatmul.mubr.f32.gmra.mrb[0].mxu0 %v2754
        %v2949 = vpop.f32.mrb[0].mxu0
        %v2950 = vadd.f32 0.0, %v2949
        %v2951 = vpop.f32.mrb[0].mxu0
        %2952 = vmatprep.mubr.f32.mxu0 0.0
        %2953 = vmatmul.mubr.f32.gmra.mrb[0].mxu0 %v2755
        %v2954 = vpop.f32.mrb[0].mxu0
        %v2955 = vadd.f32 0.0, %v2954
        %v2956 = vpop.f32.mrb[0].mxu0
        %2957 = vmatprep.mubr.f32.mxu0 0.0
        %2958 = vmatmul.mubr.f32.gmra.mrb[0].mxu0 %v2756
        %v2959 = vpop.f32.mrb[0].mxu0
        %v2960 = vadd.f32 0.0, %v2959
        %v2961 = vpop.f32.mrb[0].mxu0
        %2962 = vmatprep.mubr.f32.mxu0 0.0
        %2963 = vmatmul.mubr.f32.gmra.mrb[0].mxu0 %v2757
        %v2964 = vpop.f32.mrb[0].mxu0
        %v2965 = vadd.f32 0.0, %v2964
        %v2966 = vpop.f32.mrb[0].mxu0
        %2967 = vmatprep.mubr.f32.mxu0 0.0
        %2968 = vmatmul.mubr.f32.gmra.mrb[0].mxu0 %v2758
        %v2969 = vpop.f32.mrb[0].mxu0
        %v2970 = vadd.f32 0.0, %v2969
        %v2971 = vpop.f32.mrb[0].mxu0
        %2972 = vmatprep.mubr.f32.mxu0 0.0
        %2973 = vmatmul.mubr.f32.gmra.mrb[0].mxu0 %v2759
        %v2974 = vpop.f32.mrb[0].mxu0
        %v2975 = vadd.f32 0.0, %v2974
        %v2976 = vpop.f32.mrb[0].mxu0
        %2977 = vmatprep.mubr.f32.mxu0 0.0
        %2978 = vmatmul.mubr.f32.gmra.mrb[0].mxu0 %v2760
        %v2979 = vpop.f32.mrb[0].mxu0
        %v2980 = vadd.f32 0.0, %v2979
        %v2981 = vpop.f32.mrb[0].mxu0
        %2982 = vmatprep.mubr.f32.mxu0 0.0
        %2983 = vmatmul.mubr.f32.gmra.mrb[0].mxu0 %v2761
        %v2984 = vpop.f32.mrb[0].mxu0
        %v2985 = vadd.f32 0.0, %v2984
        %v2986 = vpop.f32.mrb[0].mxu0
        %2987 = vmatprep.mubr.f32.mxu0 0.0
        %2988 = vmatmul.mubr.f32.gmra.mrb[0].mxu0 %v2762
        %v2989 = vpop.f32.mrb[0].mxu0
        %v2990 = vadd.f32 0.0, %v2989
        %v2991 = vpop.f32.mrb[0].mxu0
        %2992 = vmatprep.mubr.f32.mxu0 0.0
        %2993 = vmatmul.mubr.f32.gmra.mrb[0].mxu0 %v2763
        %v2994 = vpop.f32.mrb[0].mxu0
        %v2995 = vadd.f32 0.0, %v2994
        %v2996 = vpop.f32.mrb[0].mxu0
        %2997 = vmatprep.mubr.f32.mxu0 0.0
        %2998 = vmatmul.mubr.f32.gmra.mrb[0].mxu0 %v2764
        %v2999 = vpop.f32.mrb[0].mxu0
        %v3000 = vadd.f32 0.0, %v2999
        %v3001 = vpop.f32.mrb[0].mxu0
        %3002 = vmatprep.mubr.f32.mxu0 0.0
        %3003 = vmatmul.mubr.f32.gmra.mrb[0].mxu0 %v2765
        %v3004 = vpop.f32.mrb[0].mxu0
        %v3005 = vadd.f32 0.0, %v3004
        %v3006 = vpop.f32.mrb[0].mxu0
        %3007 = vdwg.mxu0
        %v3008 = vadd.f32 %v2702, %v2850
        %v3009 = vadd.f32 %v2703, %v2855
        %v3010 = vadd.f32 %v2704, %v2860
        %v3011 = vadd.f32 %v2705, %v2865
        %v3012 = vadd.f32 %v2706, %v2870
        %v3013 = vadd.f32 %v2707, %v2875
        %v3014 = vadd.f32 %v2708, %v2880
        %v3015 = vadd.f32 %v2709, %v2885
        %v3016 = vadd.f32 %v2710, %v2890
        %v3017 = vadd.f32 %v2711, %v2895
        %v3018 = vadd.f32 %v2712, %v2900
        %v3019 = vadd.f32 %v2713, %v2905
        %v3020 = vadd.f32 %v2714, %v2910
        %v3021 = vadd.f32 %v2715, %v2915
        %v3022 = vadd.f32 %v2716, %v2920
        %v3023 = vadd.f32 %v2717, %v2925
        %v3024 = vadd.f32 %v2718, %v2930
        %v3025 = vadd.f32 %v2719, %v2935
        %v3026 = vadd.f32 %v2720, %v2940
        %v3027 = vadd.f32 %v2721, %v2945
        %v3028 = vadd.f32 %v2722, %v2950
        %v3029 = vadd.f32 %v2723, %v2955
        %v3030 = vadd.f32 %v2724, %v2960
        %v3031 = vadd.f32 %v2725, %v2965
        %v3032 = vadd.f32 %v2726, %v2970
        %v3033 = vadd.f32 %v2727, %v2975
        %v3034 = vadd.f32 %v2728, %v2980
        %v3035 = vadd.f32 %v2729, %v2985
        %v3036 = vadd.f32 %v2730, %v2990
        %v3037 = vadd.f32 %v2731, %v2995
        %v3038 = vadd.f32 %v2732, %v3000
        %v3039 = vadd.f32 %v2733, %v3005
        %v3040 = vld [vmem:[%s2427 + $0x4] sm:$0xff]
        %v3041 = vld [vmem:[%s2427 + $0xc] sm:$0xff]
        %v3042 = vld [vmem:[%s2427 + $0x1c] sm:$0xff]
        %v3043 = vld [vmem:[%s2427 + $0x24] sm:$0xff]
        %v3044 = vld [vmem:[%s2427 + $0x34] sm:$0xff]
        %v3045 = vld [vmem:[%s2427 + $0x3c] sm:$0xff]
        %v3046 = vld [vmem:[%s2427 + $0x4c] sm:$0xff]
        %v3047 = vld [vmem:[%s2427 + $0x54] sm:$0xff]
        %v3048 = vld [vmem:[%s2427 + $0x64] sm:$0xff]
        %v3049 = vld [vmem:[%s2427 + $0x6c] sm:$0xff]
        %v3050 = vld [vmem:[%s2427 + $0x7c] sm:$0xff]
        %v3051 = vld [vmem:[%s2427 + $0x84] sm:$0xff]
        %v3052 = vld [vmem:[%s2427 + $0x94] sm:$0xff]
        %v3053 = vld [vmem:[%s2427 + $0x9c] sm:$0xff]
        %v3054 = vld [vmem:[%s2427 + $0xac] sm:$0xff]
        %v3055 = vld [vmem:[%s2427 + $0xb4] sm:$0xff]
        %v3056 = vld [vmem:[%s2427 + $0xc4] sm:$0xff]
        %v3057 = vld [vmem:[%s2427 + $0xcc] sm:$0xff]
        %v3058 = vld [vmem:[%s2427 + $0xdc] sm:$0xff]
        %v3059 = vld [vmem:[%s2427 + $0xe4] sm:$0xff]
        %v3060 = vld [vmem:[%s2427 + $0xf4] sm:$0xff]
        %v3061 = vld [vmem:[%s2427 + $0xfc] sm:$0xff]
        %v3062 = vld [vmem:[%s2427 + $0x10c] sm:$0xff]
        %v3063 = vld [vmem:[%s2427 + $0x114] sm:$0xff]
        %v3064 = vld [vmem:[%s2427 + $0x124] sm:$0xff]
        %v3065 = vld [vmem:[%s2427 + $0x12c] sm:$0xff]
        %v3066 = vld [vmem:[%s2427 + $0x13c] sm:$0xff]
        %v3067 = vld [vmem:[%s2427 + $0x144] sm:$0xff]
        %v3068 = vld [vmem:[%s2427 + $0x154] sm:$0xff]
        %v3069 = vld [vmem:[%s2427 + $0x15c] sm:$0xff]
        %v3070 = vld [vmem:[%s2427 + $0x16c] sm:$0xff]
        %v3071 = vld [vmem:[%s2427 + $0x174] sm:$0xff]
        %s3072 = scalar_lea.vmem %s1, 1024
        %v3073 = vld [vmem:[%s3072] sm:$0xff]
        %v3074 = vld [vmem:[%s3072 + $0x8] sm:$0xff]
        %v3075 = vld [vmem:[%s3072 + $0x10] sm:$0xff]
        %v3076 = vld [vmem:[%s3072 + $0x18] sm:$0xff]
        %v3077 = vld [vmem:[%s3072 + $0x20] sm:$0xff]
        %v3078 = vld [vmem:[%s3072 + $0x28] sm:$0xff]
        %v3079 = vld [vmem:[%s3072 + $0x30] sm:$0xff]
        %v3080 = vld [vmem:[%s3072 + $0x38] sm:$0xff]
        %v3081 = vld [vmem:[%s3072 + $0x40] sm:$0xff]
        %v3082 = vld [vmem:[%s3072 + $0x48] sm:$0xff]
        %v3083 = vld [vmem:[%s3072 + $0x50] sm:$0xff]
        %v3084 = vld [vmem:[%s3072 + $0x58] sm:$0xff]
        %v3085 = vld [vmem:[%s3072 + $0x60] sm:$0xff]
        %v3086 = vld [vmem:[%s3072 + $0x68] sm:$0xff]
        %v3087 = vld [vmem:[%s3072 + $0x70] sm:$0xff]
        %v3088 = vld [vmem:[%s3072 + $0x78] sm:$0xff]
        %3089 = vmatprep.subr.mxu0 0.0
        %3090 = vmatpush1.msra.mxu0 %v3073
        %3091 = vmatprep.subr.mxu0 0.0
        %3092 = vmatpush1.msra.mxu0 %v3074
        %3093 = vmatprep.subr.mxu0 0.0
        %3094 = vmatpush1.msra.mxu0 %v3075
        %3095 = vmatprep.subr.mxu0 0.0
        %3096 = vmatpush1.msra.mxu0 %v3076
        %3097 = vmatprep.subr.mxu0 0.0
        %3098 = vmatpush1.msra.mxu0 %v3077
        %3099 = vmatprep.subr.mxu0 0.0
        %3100 = vmatpush1.msra.mxu0 %v3078
        %3101 = vmatprep.subr.mxu0 0.0
        %3102 = vmatpush1.msra.mxu0 %v3079
        %3103 = vmatprep.subr.mxu0 0.0
        %3104 = vmatpush1.msra.mxu0 %v3080
        %3105 = vmatprep.subr.mxu0 0.0
        %3106 = vmatpush1.msra.mxu0 %v3081
        %3107 = vmatprep.subr.mxu0 0.0
        %3108 = vmatpush1.msra.mxu0 %v3082
        %3109 = vmatprep.subr.mxu0 0.0
        %3110 = vmatpush1.msra.mxu0 %v3083
        %3111 = vmatprep.subr.mxu0 0.0
        %3112 = vmatpush1.msra.mxu0 %v3084
        %3113 = vmatprep.subr.mxu0 0.0
        %3114 = vmatpush1.msra.mxu0 %v3085
        %3115 = vmatprep.subr.mxu0 0.0
        %3116 = vmatpush1.msra.mxu0 %v3086
        %3117 = vmatprep.subr.mxu0 0.0
        %3118 = vmatpush1.msra.mxu0 %v3087
        %3119 = vmatprep.subr.mxu0 0.0
        %3120 = vmatpush1.msra.mxu0 %v3088
        %3121 = vmatprep.subr.mxu0 0.0
        %3122 = vmatpush1.msra.mxu0 0.0
        %3123 = vmatprep.subr.mxu0 0.0
        %3124 = vmatpush1.msra.mxu0 0.0
        %3125 = vmatprep.subr.mxu0 0.0
        %3126 = vmatpush1.msra.mxu0 0.0
        %3127 = vmatprep.subr.mxu0 0.0
        %3128 = vmatpush1.msra.mxu0 0.0
        %3129 = vmatprep.subr.mxu0 0.0
        %3130 = vmatpush1.msra.mxu0 0.0
        %3131 = vmatprep.subr.mxu0 0.0
        %3132 = vmatpush1.msra.mxu0 0.0
        %3133 = vmatprep.subr.mxu0 0.0
        %3134 = vmatpush1.msra.mxu0 0.0
        %3135 = vmatprep.subr.mxu0 0.0
        %3136 = vmatpush1.msra.mxu0 0.0
        %3137 = vmatprep.subr.mxu0 0.0
        %3138 = vmatpush1.msra.mxu0 0.0
        %3139 = vmatprep.subr.mxu0 0.0
        %3140 = vmatpush1.msra.mxu0 0.0
        %3141 = vmatprep.subr.mxu0 0.0
        %3142 = vmatpush1.msra.mxu0 0.0
        %3143 = vmatprep.subr.mxu0 0.0
        %3144 = vmatpush1.msra.mxu0 0.0
        %3145 = vmatprep.subr.mxu0 0.0
        %3146 = vmatpush1.msra.mxu0 0.0
        %3147 = vmatprep.subr.mxu0 0.0
        %3148 = vmatpush1.msra.mxu0 0.0
        %3149 = vmatprep.subr.mxu0 0.0
        %3150 = vmatpush1.msra.mxu0 0.0
        %3151 = vmatprep.subr.mxu0 0.0
        %3152 = vmatpush1.msra.mxu0 0.0
        %3153 = vmatprep.mubr.f32.mxu0 0.0
        %3154 = vmatmul.mubr.f32.gmra.mrb[0].mxu0 %v3040
        %v3155 = vpop.f32.mrb[0].mxu0
        %v3156 = vadd.f32 0.0, %v3155
        %v3157 = vpop.f32.mrb[0].mxu0
        %3158 = vmatprep.mubr.f32.mxu0 0.0
        %3159 = vmatmul.mubr.f32.gmra.mrb[0].mxu0 %v3041
        %v3160 = vpop.f32.mrb[0].mxu0
        %v3161 = vadd.f32 0.0, %v3160
        %v3162 = vpop.f32.mrb[0].mxu0
        %3163 = vmatprep.mubr.f32.mxu0 0.0
        %3164 = vmatmul.mubr.f32.gmra.mrb[0].mxu0 %v3042
        %v3165 = vpop.f32.mrb[0].mxu0
        %v3166 = vadd.f32 0.0, %v3165
        %v3167 = vpop.f32.mrb[0].mxu0
        %3168 = vmatprep.mubr.f32.mxu0 0.0
        %3169 = vmatmul.mubr.f32.gmra.mrb[0].mxu0 %v3043
        %v3170 = vpop.f32.mrb[0].mxu0
        %v3171 = vadd.f32 0.0, %v3170
        %v3172 = vpop.f32.mrb[0].mxu0
        %3173 = vmatprep.mubr.f32.mxu0 0.0
        %3174 = vmatmul.mubr.f32.gmra.mrb[0].mxu0 %v3044
        %v3175 = vpop.f32.mrb[0].mxu0
        %v3176 = vadd.f32 0.0, %v3175
        %v3177 = vpop.f32.mrb[0].mxu0
        %3178 = vmatprep.mubr.f32.mxu0 0.0
        %3179 = vmatmul.mubr.f32.gmra.mrb[0].mxu0 %v3045
        %v3180 = vpop.f32.mrb[0].mxu0
        %v3181 = vadd.f32 0.0, %v3180
        %v3182 = vpop.f32.mrb[0].mxu0
        %3183 = vmatprep.mubr.f32.mxu0 0.0
        %3184 = vmatmul.mubr.f32.gmra.mrb[0].mxu0 %v3046
        %v3185 = vpop.f32.mrb[0].mxu0
        %v3186 = vadd.f32 0.0, %v3185
        %v3187 = vpop.f32.mrb[0].mxu0
        %3188 = vmatprep.mubr.f32.mxu0 0.0
        %3189 = vmatmul.mubr.f32.gmra.mrb[0].mxu0 %v3047
        %v3190 = vpop.f32.mrb[0].mxu0
        %v3191 = vadd.f32 0.0, %v3190
        %v3192 = vpop.f32.mrb[0].mxu0
        %3193 = vmatprep.mubr.f32.mxu0 0.0
        %3194 = vmatmul.mubr.f32.gmra.mrb[0].mxu0 %v3048
        %v3195 = vpop.f32.mrb[0].mxu0
        %v3196 = vadd.f32 0.0, %v3195
        %v3197 = vpop.f32.mrb[0].mxu0
        %3198 = vmatprep.mubr.f32.mxu0 0.0
        %3199 = vmatmul.mubr.f32.gmra.mrb[0].mxu0 %v3049
        %v3200 = vpop.f32.mrb[0].mxu0
        %v3201 = vadd.f32 0.0, %v3200
        %v3202 = vpop.f32.mrb[0].mxu0
        %3203 = vmatprep.mubr.f32.mxu0 0.0
        %3204 = vmatmul.mubr.f32.gmra.mrb[0].mxu0 %v3050
        %v3205 = vpop.f32.mrb[0].mxu0
        %v3206 = vadd.f32 0.0, %v3205
        %v3207 = vpop.f32.mrb[0].mxu0
        %3208 = vmatprep.mubr.f32.mxu0 0.0
        %3209 = vmatmul.mubr.f32.gmra.mrb[0].mxu0 %v3051
        %v3210 = vpop.f32.mrb[0].mxu0
        %v3211 = vadd.f32 0.0, %v3210
        %v3212 = vpop.f32.mrb[0].mxu0
        %3213 = vmatprep.mubr.f32.mxu0 0.0
        %3214 = vmatmul.mubr.f32.gmra.mrb[0].mxu0 %v3052
        %v3215 = vpop.f32.mrb[0].mxu0
        %v3216 = vadd.f32 0.0, %v3215
        %v3217 = vpop.f32.mrb[0].mxu0
        %3218 = vmatprep.mubr.f32.mxu0 0.0
        %3219 = vmatmul.mubr.f32.gmra.mrb[0].mxu0 %v3053
        %v3220 = vpop.f32.mrb[0].mxu0
        %v3221 = vadd.f32 0.0, %v3220
        %v3222 = vpop.f32.mrb[0].mxu0
        %3223 = vmatprep.mubr.f32.mxu0 0.0
        %3224 = vmatmul.mubr.f32.gmra.mrb[0].mxu0 %v3054
        %v3225 = vpop.f32.mrb[0].mxu0
        %v3226 = vadd.f32 0.0, %v3225
        %v3227 = vpop.f32.mrb[0].mxu0
        %3228 = vmatprep.mubr.f32.mxu0 0.0
        %3229 = vmatmul.mubr.f32.gmra.mrb[0].mxu0 %v3055
        %v3230 = vpop.f32.mrb[0].mxu0
        %v3231 = vadd.f32 0.0, %v3230
        %v3232 = vpop.f32.mrb[0].mxu0
        %3233 = vmatprep.mubr.f32.mxu0 0.0
        %3234 = vmatmul.mubr.f32.gmra.mrb[0].mxu0 %v3056
        %v3235 = vpop.f32.mrb[0].mxu0
        %v3236 = vadd.f32 0.0, %v3235
        %v3237 = vpop.f32.mrb[0].mxu0
        %3238 = vmatprep.mubr.f32.mxu0 0.0
        %3239 = vmatmul.mubr.f32.gmra.mrb[0].mxu0 %v3057
        %v3240 = vpop.f32.mrb[0].mxu0
        %v3241 = vadd.f32 0.0, %v3240
        %v3242 = vpop.f32.mrb[0].mxu0
        %3243 = vmatprep.mubr.f32.mxu0 0.0
        %3244 = vmatmul.mubr.f32.gmra.mrb[0].mxu0 %v3058
        %v3245 = vpop.f32.mrb[0].mxu0
        %v3246 = vadd.f32 0.0, %v3245
        %v3247 = vpop.f32.mrb[0].mxu0
        %3248 = vmatprep.mubr.f32.mxu0 0.0
        %3249 = vmatmul.mubr.f32.gmra.mrb[0].mxu0 %v3059
        %v3250 = vpop.f32.mrb[0].mxu0
        %v3251 = vadd.f32 0.0, %v3250
        %v3252 = vpop.f32.mrb[0].mxu0
        %3253 = vmatprep.mubr.f32.mxu0 0.0
        %3254 = vmatmul.mubr.f32.gmra.mrb[0].mxu0 %v3060
        %v3255 = vpop.f32.mrb[0].mxu0
        %v3256 = vadd.f32 0.0, %v3255
        %v3257 = vpop.f32.mrb[0].mxu0
        %3258 = vmatprep.mubr.f32.mxu0 0.0
        %3259 = vmatmul.mubr.f32.gmra.mrb[0].mxu0 %v3061
        %v3260 = vpop.f32.mrb[0].mxu0
        %v3261 = vadd.f32 0.0, %v3260
        %v3262 = vpop.f32.mrb[0].mxu0
        %3263 = vmatprep.mubr.f32.mxu0 0.0
        %3264 = vmatmul.mubr.f32.gmra.mrb[0].mxu0 %v3062
        %v3265 = vpop.f32.mrb[0].mxu0
        %v3266 = vadd.f32 0.0, %v3265
        %v3267 = vpop.f32.mrb[0].mxu0
        %3268 = vmatprep.mubr.f32.mxu0 0.0
        %3269 = vmatmul.mubr.f32.gmra.mrb[0].mxu0 %v3063
        %v3270 = vpop.f32.mrb[0].mxu0
        %v3271 = vadd.f32 0.0, %v3270
        %v3272 = vpop.f32.mrb[0].mxu0
        %3273 = vmatprep.mubr.f32.mxu0 0.0
        %3274 = vmatmul.mubr.f32.gmra.mrb[0].mxu0 %v3064
        %v3275 = vpop.f32.mrb[0].mxu0
        %v3276 = vadd.f32 0.0, %v3275
        %v3277 = vpop.f32.mrb[0].mxu0
        %3278 = vmatprep.mubr.f32.mxu0 0.0
        %3279 = vmatmul.mubr.f32.gmra.mrb[0].mxu0 %v3065
        %v3280 = vpop.f32.mrb[0].mxu0
        %v3281 = vadd.f32 0.0, %v3280
        %v3282 = vpop.f32.mrb[0].mxu0
        %3283 = vmatprep.mubr.f32.mxu0 0.0
        %3284 = vmatmul.mubr.f32.gmra.mrb[0].mxu0 %v3066
        %v3285 = vpop.f32.mrb[0].mxu0
        %v3286 = vadd.f32 0.0, %v3285
        %v3287 = vpop.f32.mrb[0].mxu0
        %3288 = vmatprep.mubr.f32.mxu0 0.0
        %3289 = vmatmul.mubr.f32.gmra.mrb[0].mxu0 %v3067
        %v3290 = vpop.f32.mrb[0].mxu0
        %v3291 = vadd.f32 0.0, %v3290
        %v3292 = vpop.f32.mrb[0].mxu0
        %3293 = vmatprep.mubr.f32.mxu0 0.0
        %3294 = vmatmul.mubr.f32.gmra.mrb[0].mxu0 %v3068
        %v3295 = vpop.f32.mrb[0].mxu0
        %v3296 = vadd.f32 0.0, %v3295
        %v3297 = vpop.f32.mrb[0].mxu0
        %3298 = vmatprep.mubr.f32.mxu0 0.0
        %3299 = vmatmul.mubr.f32.gmra.mrb[0].mxu0 %v3069
        %v3300 = vpop.f32.mrb[0].mxu0
        %v3301 = vadd.f32 0.0, %v3300
        %v3302 = vpop.f32.mrb[0].mxu0
        %3303 = vmatprep.mubr.f32.mxu0 0.0
        %3304 = vmatmul.mubr.f32.gmra.mrb[0].mxu0 %v3070
        %v3305 = vpop.f32.mrb[0].mxu0
        %v3306 = vadd.f32 0.0, %v3305
        %v3307 = vpop.f32.mrb[0].mxu0
        %3308 = vmatprep.mubr.f32.mxu0 0.0
        %3309 = vmatmul.mubr.f32.gmra.mrb[0].mxu0 %v3071
        %v3310 = vpop.f32.mrb[0].mxu0
        %v3311 = vadd.f32 0.0, %v3310
        %v3312 = vpop.f32.mrb[0].mxu0
        %3313 = vdwg.mxu0
        %v3314 = vadd.f32 %v3008, %v3156
        %v3315 = vadd.f32 %v3009, %v3161
        %v3316 = vadd.f32 %v3010, %v3166
        %v3317 = vadd.f32 %v3011, %v3171
        %v3318 = vadd.f32 %v3012, %v3176
        %v3319 = vadd.f32 %v3013, %v3181
        %v3320 = vadd.f32 %v3014, %v3186
        %v3321 = vadd.f32 %v3015, %v3191
        %v3322 = vadd.f32 %v3016, %v3196
        %v3323 = vadd.f32 %v3017, %v3201
        %v3324 = vadd.f32 %v3018, %v3206
        %v3325 = vadd.f32 %v3019, %v3211
        %v3326 = vadd.f32 %v3020, %v3216
        %v3327 = vadd.f32 %v3021, %v3221
        %v3328 = vadd.f32 %v3022, %v3226
        %v3329 = vadd.f32 %v3023, %v3231
        %v3330 = vadd.f32 %v3024, %v3236
        %v3331 = vadd.f32 %v3025, %v3241
        %v3332 = vadd.f32 %v3026, %v3246
        %v3333 = vadd.f32 %v3027, %v3251
        %v3334 = vadd.f32 %v3028, %v3256
        %v3335 = vadd.f32 %v3029, %v3261
        %v3336 = vadd.f32 %v3030, %v3266
        %v3337 = vadd.f32 %v3031, %v3271
        %v3338 = vadd.f32 %v3032, %v3276
        %v3339 = vadd.f32 %v3033, %v3281
        %v3340 = vadd.f32 %v3034, %v3286
        %v3341 = vadd.f32 %v3035, %v3291
        %v3342 = vadd.f32 %v3036, %v3296
        %v3343 = vadd.f32 %v3037, %v3301
        %v3344 = vadd.f32 %v3038, %v3306
        %v3345 = vadd.f32 %v3039, %v3311
        %3346 = vst [vmem:[%s136] sm:$0xff] %v3314
        %3347 = vst [vmem:[%s136 + $0x8] sm:$0xff] %v3315
        %3348 = vst [vmem:[%s136 + $0x10] sm:$0xff] %v3316
        %3349 = vst [vmem:[%s136 + $0x18] sm:$0xff] %v3317
        %3350 = vst [vmem:[%s136 + $0x20] sm:$0xff] %v3318
        %3351 = vst [vmem:[%s136 + $0x28] sm:$0xff] %v3319
        %3352 = vst [vmem:[%s136 + $0x30] sm:$0xff] %v3320
        %3353 = vst [vmem:[%s136 + $0x38] sm:$0xff] %v3321
        %3354 = vst [vmem:[%s136 + $0x40] sm:$0xff] %v3322
        %3355 = vst [vmem:[%s136 + $0x48] sm:$0xff] %v3323
        %3356 = vst [vmem:[%s136 + $0x50] sm:$0xff] %v3324
        %3357 = vst [vmem:[%s136 + $0x58] sm:$0xff] %v3325
        %3358 = vst [vmem:[%s136 + $0x60] sm:$0xff] %v3326
        %3359 = vst [vmem:[%s136 + $0x68] sm:$0xff] %v3327
        %3360 = vst [vmem:[%s136 + $0x70] sm:$0xff] %v3328
        %3361 = vst [vmem:[%s136 + $0x78] sm:$0xff] %v3329
        %3362 = vst [vmem:[%s136 + $0x80] sm:$0xff] %v3330
        %3363 = vst [vmem:[%s136 + $0x88] sm:$0xff] %v3331
        %3364 = vst [vmem:[%s136 + $0x90] sm:$0xff] %v3332
        %3365 = vst [vmem:[%s136 + $0x98] sm:$0xff] %v3333
        %3366 = vst [vmem:[%s136 + $0xa0] sm:$0xff] %v3334
        %3367 = vst [vmem:[%s136 + $0xa8] sm:$0xff] %v3335
        %3368 = vst [vmem:[%s136 + $0xb0] sm:$0xff] %v3336
        %3369 = vst [vmem:[%s136 + $0xb8] sm:$0xff] %v3337
        %3370 = vst [vmem:[%s136 + $0xc0] sm:$0xff] %v3338
        %3371 = vst [vmem:[%s136 + $0xc8] sm:$0xff] %v3339
        %3372 = vst [vmem:[%s136 + $0xd0] sm:$0xff] %v3340
        %3373 = vst [vmem:[%s136 + $0xd8] sm:$0xff] %v3341
        %3374 = vst [vmem:[%s136 + $0xe0] sm:$0xff] %v3342
        %3375 = vst [vmem:[%s136 + $0xe8] sm:$0xff] %v3343
        %3376 = vst [vmem:[%s136 + $0xf0] sm:$0xff] %v3344
        %3377 = vst [vmem:[%s136 + $0xf8] sm:$0xff] %v3345
        %s3378 = sand.u32 %s81, 1
        %s3379 = scalar_lea.sflag [#allocation5], %s3378
        %s3380 = sand.u32 %s81, 1
        %s3381 = smul.addr %s3380, 256
        %s3382 = scalar_lea.vmem [#allocation4], %s3381
        // Predicated region
        $region111: #{tpu_custom_call.1} parent=27 // pred_check
          %p3383 = pneg %p91
        $region112: #{tpu_custom_call.1} parent=27 // pred_check_branch
          %3385 = sbr.rel (%p3383) target = $region114
        $region113: #{tpu_custom_call.1} parent=27 // pred_region
          %s3386 = smul.u32 16, %s22
          %s3388 = ssub.s32 4096, 4096
          %3389 = vsyncadd %s3379, %s3388
          %s3390 = smul.addr %s3386, 2
          %s3391 = smul.addr %s21, 32
          %s3392 = sadd.s32 %s3390, %s3391
          %s3393 = smul.addr %s3392, 128
          %s3394 = scalar_lea.hbm %s3, %s3393
          %s3395 = sshll.u32 %s3382, 4
          %s3396 = int_to_ptr.vmem [resolvable:$true] %s3395
          %3401 = dma.vmem_to_hbm [thread:$0]  %s3396, 4096, %s3394, %s3379, 128, 128, 8
        $region114: #{tpu_custom_call.1} parent=27 // pred_fallthru
          _
      $region28: #{tpu_custom_call.1} parent=5 // pred_fallthru
        _
      %p3402 = scmp.le.s32.totalorder 2, %s12
      // Predicated region
      $region115: #{tpu_custom_call.1} parent=5 // pred_check
        %p3403 = pneg %p3402
      $region116: #{tpu_custom_call.1} parent=5 // pred_check_branch
        %3405 = sbr.rel (%p3403) target = $region118
      $region117: #{tpu_custom_call.1} parent=5 // pred_region
        %s3406 = ssub.s32 %s12, 2
        // Predicated region
        $region119: #{tpu_custom_call.1} parent=117 // pred_check
          %p3407 = pneg %p97
        $region120: #{tpu_custom_call.1} parent=117 // pred_check_branch
          %3409 = sbr.rel (%p3407) target = $region122
        $region121: #{tpu_custom_call.1} parent=117 // pred_region
          %s3410 = sand.u32 %s82, 1
          %s3411 = scalar_lea.sflag [#allocation5], %s3410
          %s3412 = sand.u32 %s82, 1
          %s3413 = smul.addr %s3412, 256
          %s3414 = scalar_lea.vmem [#allocation4], %s3413
          %3415 = dma.done %s3411, 4096
        $region122: #{tpu_custom_call.1} parent=117 // pred_fallthru
          _
      $region118: #{tpu_custom_call.1} parent=5 // pred_fallthru
        _
    $region6: #{tpu_custom_call.1} parent=1 // loop_footer
      %s16 = sadd.s32 1, %s12
    $region7: #{tpu_custom_call.1} parent=1 // loop_footer_branch
      %11 = sbr.rel target = $region3
    $region8: #{tpu_custom_call.1} parent=1 // loop_exit
      _
    %3416 = vsyncpa [#allocation5], 1
    %s3417 = scalar_lea.sflag [#allocation5], 1
    %3418 = vsyncpa %s3417, 1
  %3419 = vsyncmov [#allocation3]
  %s3420 = vpop.sfrf %3419
  %p3421 = scmp.eq.s32.totalorder %s3420, 0
  %p3422 = pneg %p3421
  %3424 = shalt.err (%p3422)
  %s3425 = scalar_lea.sflag [#allocation3], 1
  %3426 = vsyncmov %s3425
  %s3427 = vpop.sfrf %3426
  %p3428 = scmp.eq.s32.totalorder %s3427, 0
  %p3429 = pneg %p3428
  %3431 = shalt.err (%p3429)

</llo_original>
